<compile_context>
chip_gen: v6e
topology: v6e:2x2x1
jax: 0.10.0
libtpu: 0.0.40
codegen_flags: <defaults>
</compile_context>

<pallas_src>
import math
from functools import partial

import jax
import jax.numpy as jnp
from jax.experimental import pallas as pl
from jax.experimental.pallas import tpu as pltpu


# ----------------------------------------------------------------------------
# small helpers
# ----------------------------------------------------------------------------

def _round_up(x, m):
    return ((x + m - 1) // m) * m


def _vmem_cap_bytes():
    """Generation-aware VMEM budget (leave ~25% headroom for pipelining)."""
    cap = 128 << 20
    try:
        info = pltpu.get_tpu_info()
        cap = int(getattr(info, "vmem_capacity_bytes", cap))
    except Exception:
        pass
    return int(cap * 3 // 4)          # 96 MiB on 128 MiB parts, 48 MiB on v7x


def _batch_tile(B, target=8):
    """Largest divisor of B <= target; prefer >=2 grid steps when B > 1 so the
    'parallel' axis can feed both v7x TensorCores."""
    limit = min(target, B)
    if B > 1:
        limit = min(limit, max(1, B // 2))
    for t in range(limit, 0, -1):
        if B % t == 0:
            return t
    return 1


def _compiler_params(n_parallel_axes, vmem_estimate):
    limit = int(min(max(vmem_estimate, 32 << 20), _vmem_cap_bytes()))
    kwargs = dict(vmem_limit_bytes=limit)
    if n_parallel_axes:
        kwargs["dimension_semantics"] = ("parallel",) * n_parallel_axes
    return pltpu.CompilerParams(**kwargs)


# ----------------------------------------------------------------------------
# Kernel 1: one fused encoder layer
#   x -> per-head QKV -> softmax attention (deferred normalization)
#     -> single out-proj -> +residual -> LN1 -> FFN(relu) -> +residual -> LN2
# ----------------------------------------------------------------------------

def _encoder_layer_kernel(x_ref, wq_ref, wk_ref, wv_ref, bq_ref, bk_ref, bv_ref,
                          wo_ref, bo_ref, g1_ref, b1n_ref,
                          w1_ref, bf1_ref, w2_ref, bf2_ref, g2_ref, b2n_ref,
                          o_ref, *, nhead, head_dim, eps):
    Bb, S, E = x_ref.shape
    R = Bb * S

    x = x_ref[...]                                    # (Bb, S, E) bf16
    x2 = x.reshape(R, E)                              # bf16 rows for matmuls
    x_f32 = x2.astype(jnp.float32)                    # residual in fp32

    # ---- multi-head attention (weights pre-split per head; no lane slicing) --
    head_outs = []
    for h in range(nhead):                            # static, small H
        q = jnp.dot(x2, wq_ref[h], preferred_element_type=jnp.float32) + bq_ref[h]
        k = jnp.dot(x2, wk_ref[h], preferred_element_type=jnp.float32) + bk_ref[h]
        v = jnp.dot(x2, wv_ref[h], preferred_element_type=jnp.float32) + bv_ref[h]
        q3 = q.reshape(Bb, S, head_dim).astype(jnp.bfloat16)
        k3 = k.reshape(Bb, S, head_dim).astype(jnp.bfloat16)
        v3 = v.reshape(Bb, S, head_dim).astype(jnp.bfloat16)

        s = jnp.einsum('bid,bjd->bij', q3, k3,
                       preferred_element_type=jnp.float32)      # (Bb, S, S)
        m = jnp.max(s, axis=-1, keepdims=True)
        p = jnp.exp(s - m)                                       # unnormalized
        l = jnp.sum(p, axis=-1, keepdims=True)

        o_h = jnp.einsum('bij,bjd->bid', p.astype(jnp.bfloat16), v3,
                         preferred_element_type=jnp.float32)     # (Bb, S, HD)
        # deferred softmax normalization on the (S, HD) tile, not (S, S)
        o_h = o_h * pl.reciprocal(l, approx=True)
        head_outs.append(o_h.reshape(R, head_dim).astype(jnp.bfloat16))

    attn = jnp.concatenate(head_outs, axis=-1)                   # (R, E) bf16
    attn = jnp.dot(attn, wo_ref[...],
                   preferred_element_type=jnp.float32) + bo_ref[...]

    # ---- residual + LayerNorm 1 (fp32 statistics) ---------------------------
    h1 = x_f32 + attn
    mu = jnp.mean(h1, axis=-1, keepdims=True)
    var = jnp.mean((h1 - mu) ** 2, axis=-1, keepdims=True)
    h1 = (h1 - mu) * jax.lax.rsqrt(var + eps) * g1_ref[...] + b1n_ref[...]

    # ---- FFN (relu) + residual + LayerNorm 2 --------------------------------
    ff = jnp.dot(h1.astype(jnp.bfloat16), w1_ref[...],
                 preferred_element_type=jnp.float32) + bf1_ref[...]
    ff = jnp.maximum(ff, 0.0)
    ffo = jnp.dot(ff.astype(jnp.bfloat16), w2_ref[...],
                  preferred_element_type=jnp.float32) + bf2_ref[...]

    y = h1 + ffo
    mu2 = jnp.mean(y, axis=-1, keepdims=True)
    var2 = jnp.mean((y - mu2) ** 2, axis=-1, keepdims=True)
    y = (y - mu2) * jax.lax.rsqrt(var2 + eps) * g2_ref[...] + b2n_ref[...]

    o_ref[...] = y.reshape(Bb, S, E).astype(o_ref.dtype)         # bf16 out


def encoder_layer(x, layer, *, nhead, eps):
    B, S, E = x.shape
    HD = E // nhead
    F = layer["w1"].shape[1]
    Bb = _batch_tile(B)
    R = Bb * S

    weight_bytes = (4 * E * E + 2 * E * F) * 2                   # bf16 weights
    act_bytes = 2 * 2 * (Bb * S * E * 2)                         # dbl-buffered io
    scratch_bytes = (R * (3 * HD + 3 * E + F) + Bb * S * S) * 4  # f32 temporaries
    vmem_est = weight_bytes + act_bytes + scratch_bytes + (2 << 20)

    flops = B * S * (8 * E * E + 4 * E * F) + 4 * B * S * S * E
    ce = pl.CostEstimate(
        flops=int(flops),
        transcendentals=int(B * nhead * S * S + 2 * B * S),
        bytes_accessed=int(2 * B * S * E * 2 + weight_bytes),
    )

    rep2 = lambda b: (0, 0)       # resident 2-D weights
    rep3 = lambda b: (0, 0, 0)    # resident per-head weight slabs
    kern = partial(_encoder_layer_kernel, nhead=nhead, head_dim=HD, eps=eps)

    return pl.pallas_call(
        kern,
        out_shape=jax.ShapeDtypeStruct((B, S, E), jnp.bfloat16),
        grid=(B // Bb,),
        in_specs=[
            pl.BlockSpec((Bb, S, E), lambda b: (b, 0, 0)),
            pl.BlockSpec((nhead, E, HD), rep3),    # wq (scale folded in)
            pl.BlockSpec((nhead, E, HD), rep3),    # wk
            pl.BlockSpec((nhead, E, HD), rep3),    # wv
            pl.BlockSpec((nhead, 1, HD), rep3),    # bq
            pl.BlockSpec((nhead, 1, HD), rep3),    # bk
            pl.BlockSpec((nhead, 1, HD), rep3),    # bv
            pl.BlockSpec((E, E), rep2),            # wo
            pl.BlockSpec((1, E), rep2),            # bo
            pl.BlockSpec((1, E), rep2),            # ln1 gamma
            pl.BlockSpec((1, E), rep2),            # ln1 beta
            pl.BlockSpec((E, F), rep2),            # w1
            pl.BlockSpec((1, F), rep2),            # b1
            pl.BlockSpec((F, E), rep2),            # w2
            pl.BlockSpec((1, E), rep2),            # b2
            pl.BlockSpec((1, E), rep2),            # ln2 gamma
            pl.BlockSpec((1, E), rep2),            # ln2 beta
        ],
        out_specs=pl.BlockSpec((Bb, S, E), lambda b: (b, 0, 0)),
        compiler_params=_compiler_params(1, vmem_est),
        cost_estimate=ce,
    )(x, layer["wq"], layer["wk"], layer["wv"], layer["bq"], layer["bk"],
      layer["bv"], layer["wo"], layer["bo"], layer["ln1_g"], layer["ln1_b"],
      layer["w1"], layer["b1"], layer["w2"], layer["b2"],
      layer["ln2_g"], layer["ln2_b"])


# ----------------------------------------------------------------------------
# Kernel 2: mean pooling over the sequence + classifier head
#   gridded over batch tiles, lane-dense (128-padded) logits output
# ----------------------------------------------------------------------------

def _pool_classify_kernel(x_ref, wc_ref, bc_ref, o_ref, *, inv_s):
    pooled = jnp.sum(x_ref[...].astype(jnp.float32), axis=1) * inv_s   # (Bt, E)
    logits = jnp.dot(pooled.astype(jnp.bfloat16), wc_ref[...],
                     preferred_element_type=jnp.float32) + bc_ref[...]
    o_ref[...] = logits.reshape(o_ref.shape)


def pool_classify(x, wc_t, bc_pad):
    B, S, E = x.shape
    Cp = wc_t.shape[1]
    Bt = _batch_tile(B)
    vmem_est = 2 * (Bt * S * E * 2 + Bt * Cp * 4) + wc_t.size * 2 + (1 << 20)
    ce = pl.CostEstimate(
        flops=int(2 * B * E * Cp + B * S * E),
        transcendentals=0,
        bytes_accessed=int(B * S * E * 2 + wc_t.size * 2 + B * Cp * 4),
    )
    out = pl.pallas_call(
        partial(_pool_classify_kernel, inv_s=1.0 / S),
        out_shape=jax.ShapeDtypeStruct((B, 1, Cp), jnp.float32),
        grid=(B // Bt,),
        in_specs=[
            pl.BlockSpec((Bt, S, E), lambda b: (b, 0, 0)),
            pl.BlockSpec((E, Cp), lambda b: (0, 0)),
            pl.BlockSpec((1, Cp), lambda b: (0, 0)),
        ],
        out_specs=pl.BlockSpec((Bt, 1, Cp), lambda b: (b, 0, 0)),
        compiler_params=_compiler_params(1, vmem_est),
        cost_estimate=ce,
    )(x, wc_t, bc_pad)
    return out.reshape(B, Cp)


# ----------------------------------------------------------------------------
# Parameter init (matches Classifier._init_weights) + one-time layout prep
# ----------------------------------------------------------------------------

def make_positional_encoding(max_len, d_model):
    pos = jnp.arange(max_len, dtype=jnp.float32)[:, None]
    div = jnp.exp(jnp.arange(0, d_model, 2, dtype=jnp.float32)
                  * (-math.log(10000.0) / d_model))
    pe = jnp.zeros((max_len, d_model), jnp.float32)
    pe = pe.at[:, 0::2].set(jnp.sin(pos * div))
    pe = pe.at[:, 1::2].set(jnp.cos(pos * div))
    return pe


def init_params(key, *, vocab_size, d_model, num_layers, dim_feedforward,
                num_classes, max_len):
    std = 0.02
    keys = iter(jax.random.split(key, 1 + 4 * num_layers + 1))
    params = {
        "emb": jax.random.normal(next(keys), (vocab_size, d_model), jnp.float32) * std,
        "pe": make_positional_encoding(max_len, d_model),
        "layers": [],
    }
    for _ in range(num_layers):
        params["layers"].append({
            "wqkv": jax.random.normal(next(keys), (3 * d_model, d_model), jnp.float32) * std,
            "bqkv": jnp.zeros((3 * d_model,), jnp.float32),
            "wo": jax.random.normal(next(keys), (d_model, d_model), jnp.float32) * std,
            "bo": jnp.zeros((d_model,), jnp.float32),
            "w1": jax.random.normal(next(keys), (dim_feedforward, d_model), jnp.float32) * std,
            "b1": jnp.zeros((dim_feedforward,), jnp.float32),
            "w2": jax.random.normal(next(keys), (d_model, dim_feedforward), jnp.float32) * std,
            "b2": jnp.zeros((d_model,), jnp.float32),
            "ln1_g": jnp.ones((d_model,), jnp.float32),
            "ln1_b": jnp.zeros((d_model,), jnp.float32),
            "ln2_g": jnp.ones((d_model,), jnp.float32),
            "ln2_b": jnp.zeros((d_model,), jnp.float32),
        })
    params["wc"] = jax.random.normal(next(keys), (num_classes, d_model), jnp.float32) * std
    params["bc"] = jnp.zeros((num_classes,), jnp.float32)
    return params


def prepare_params(params, *, nhead):
    """One-time layout prep:
      * torch-layout Linear weights -> (in, out), cast to bf16
      * Q/K/V weights split per head into (H, E, HD) slabs (clean leading-dim
        indexing in-kernel, no lane slicing), attention scale folded into Q
      * biases / LN params as (1, D) fp32 rows
      * classifier head padded to a lane-dense multiple of 128 columns.
    """
    E = params["emb"].shape[1]
    H = nhead
    HD = E // H
    scale = 1.0 / math.sqrt(HD)

    def heads_w(w_in_out):                     # (E, E) -> (H, E, HD) bf16
        return jnp.transpose(w_in_out.reshape(E, H, HD), (1, 0, 2)).astype(jnp.bfloat16)

    def heads_b(b):                            # (E,) -> (H, 1, HD) fp32
        return b.reshape(H, 1, HD).astype(jnp.float32)

    prepped = {"emb": params["emb"], "pe": params["pe"], "layers": []}
    for layer in params["layers"]:
        wqkv_t = layer["wqkv"].T               # (E_in, 3E_out)
        bqkv = layer["bqkv"]
        prepped["layers"].append({
            "wq": heads_w(wqkv_t[:, :E] * scale),          # scale folded in
            "wk": heads_w(wqkv_t[:, E:2 * E]),
            "wv": heads_w(wqkv_t[:, 2 * E:]),
            "bq": heads_b(bqkv[:E] * scale),
            "bk": heads_b(bqkv[E:2 * E]),
            "bv": heads_b(bqkv[2 * E:]),
            "wo": layer["wo"].T.astype(jnp.bfloat16),
            "bo": layer["bo"].reshape(1, -1),
            "w1": layer["w1"].T.astype(jnp.bfloat16),
            "b1": layer["b1"].reshape(1, -1),
            "w2": layer["w2"].T.astype(jnp.bfloat16),
            "b2": layer["b2"].reshape(1, -1),
            "ln1_g": layer["ln1_g"].reshape(1, -1),
            "ln1_b": layer["ln1_b"].reshape(1, -1),
            "ln2_g": layer["ln2_g"].reshape(1, -1),
            "ln2_b": layer["ln2_b"].reshape(1, -1),
        })

    num_classes = params["wc"].shape[0]
    c_pad = _round_up(num_classes, 128)
    wc_t = jnp.zeros((E, c_pad), jnp.bfloat16)
    wc_t = wc_t.at[:, :num_classes].set(params["wc"].T.astype(jnp.bfloat16))
    bc = jnp.zeros((1, c_pad), jnp.float32).at[0, :num_classes].set(params["bc"])
    prepped["wc_t"] = wc_t
    prepped["bc_pad"] = bc
    return prepped


# ----------------------------------------------------------------------------
# Forward pass (only glue left in XLA: embedding gather, pos-enc add, final slice)
# ----------------------------------------------------------------------------

def classifier_forward(prepped, input_ids, *, nhead, num_classes,
                       layer_norm_eps=1e-5):
    B, S = input_ids.shape

    # TODO(synk): the token-id gather stays in XLA; an irregular gather has no
    # clean rectangular BlockSpec and is negligible next to the layer matmuls.
    x = jnp.take(prepped["emb"], input_ids, axis=0) + prepped["pe"][:S][None, :, :]
    # bf16 activations between pallas_calls (LN/softmax stats stay fp32 in-kernel)
    x = x.astype(jnp.bfloat16)

    for layer in prepped["layers"]:
        x = encoder_layer(x, layer, nhead=nhead, eps=layer_norm_eps)   # (B,S,E) bf16

    logits_pad = pool_classify(x, prepped["wc_t"], prepped["bc_pad"])
    return {"logits": logits_pad[:, :num_classes]}


# ----------------------------------------------------------------------------
# Demo
# ----------------------------------------------------------------------------

if __name__ == "__main__":
    d_model = 32
    nhead = 4
    num_encoder_layers = 2
    dim_feedforward = 64
    num_classes = 7
    vocab_size = 100
    max_len = 64
    batch = 2
    seq_len = 8

    key = jax.random.PRNGKey(0)
    pkey, dkey = jax.random.split(key)

    params = init_params(
        pkey,
        vocab_size=vocab_size,
        d_model=d_model,
        num_layers=num_encoder_layers,
        dim_feedforward=dim_feedforward,
        num_classes=num_classes,
        max_len=max_len,
    )
    prepped = prepare_params(params, nhead=nhead)

    input_ids = jax.random.randint(dkey, (batch, seq_len), 0, vocab_size, jnp.int32)

    fwd = jax.jit(partial(classifier_forward, nhead=nhead, num_classes=num_classes))
    out = fwd(prepped, input_ids)
    logits = jax.block_until_ready(out["logits"])

    assert logits.shape == (batch, num_classes)
    assert bool(jnp.all(jnp.isfinite(logits)))
    print("KERNEL_OK")
</pallas_src>

<mosaic_0001>
module attributes {stable_mosaic.version = 11 : i64} {
  func.func @_pool_classify_kernel(%arg0: i32, %arg1: memref<1x8x32xbf16, #tpu.memory_space<vmem>>, %arg2: memref<32x128xbf16, #tpu.memory_space<vmem>>, %arg3: memref<1x128xf32, #tpu.memory_space<vmem>>, %arg4: memref<1x1x128xf32, #tpu.memory_space<vmem>>) attributes {dimension_semantics = [#tpu.dimension_semantics<parallel>], iteration_bounds = array<i64: 2>, scalar_prefetch = 0 : i64, scratch_operands = 0 : i64, tpu.core_type = #tpu.core_type<tc>, window_params = [{transform_indices = @transform_0, window_bounds = array<i64: 1, 8, 32>}, {pipeline_mode = #tpu.pipeline_mode<synchronous>, transform_indices = @transform_1, window_bounds = array<i64: 32, 128>}, {pipeline_mode = #tpu.pipeline_mode<synchronous>, transform_indices = @transform_2, window_bounds = array<i64: 1, 128>}, {transform_indices = @transform_3, window_bounds = array<i64: 1, 1, 128>}]} {
    %c0 = arith.constant 0 : index
    %c0_0 = arith.constant 0 : index
    %c0_1 = arith.constant 0 : index
    %0 = vector.load %arg1[%c0, %c0_0, %c0_1] : memref<1x8x32xbf16, #tpu.memory_space<vmem>>, vector<1x8x32xbf16>
    %1 = arith.extf %0 : vector<1x8x32xbf16> to vector<1x8x32xf32>
    %cst = arith.constant dense<0.000000e+00> : vector<1x32xf32>
    %2 = vector.multi_reduction <add>, %1, %cst [1] : vector<1x8x32xf32> to vector<1x32xf32>
    %cst_2 = arith.constant 1.250000e-01 : f32
    %3 = vector.broadcast %cst_2 : f32 to vector<1x32xf32>
    %4 = arith.mulf %2, %3 : vector<1x32xf32>
    %5 = arith.truncf %4 : vector<1x32xf32> to vector<1x32xbf16>
    %c0_3 = arith.constant 0 : index
    %c0_4 = arith.constant 0 : index
    %6 = vector.load %arg2[%c0_3, %c0_4] : memref<32x128xbf16, #tpu.memory_space<vmem>>, vector<32x128xbf16>
    %cst_5 = arith.constant dense<0.000000e+00> : vector<1x128xf32>
    %7 = tpu.matmul %5, %6, %cst_5 {dimension_numbers = #tpu.dot_dimension_numbers<[1], [0], [0], [1], [0, 0, 1, 1], [], []>} : vector<1x32xbf16>, vector<32x128xbf16>, vector<1x128xf32> -> vector<1x128xf32>
    %c0_6 = arith.constant 0 : index
    %c0_7 = arith.constant 0 : index
    %8 = vector.load %arg3[%c0_6, %c0_7] : memref<1x128xf32, #tpu.memory_space<vmem>>, vector<1x128xf32>
    %9 = arith.addf %7, %8 : vector<1x128xf32>
    %10 = vector.shape_cast %9 : vector<1x128xf32> to vector<1x1x128xf32>
    %c0_8 = arith.constant 0 : index
    %c0_9 = arith.constant 0 : index
    %c0_10 = arith.constant 0 : index
    %11 = vector.load %arg4[%c0_8, %c0_9, %c0_10] : memref<1x1x128xf32, #tpu.memory_space<vmem>>, vector<1x1x128xf32>
    tpu.vector_store %arg4[%c0_8, %c0_9, %c0_10], %10 {strides = array<i32>} : memref<1x1x128xf32, #tpu.memory_space<vmem>>, vector<1x1x128xf32>,
    return
  }
  func.func @transform_0(%arg0: i32) -> (i32, i32, i32) {
    %c0_i32 = arith.constant 0 : i32
    %c0_i32_0 = arith.constant 0 : i32
    %c0_i32_1 = arith.constant 0 : i32
    return %arg0, %c0_i32, %c0_i32_0 : i32, i32, i32
  }
  func.func @transform_1(%arg0: i32) -> (i32, i32) {
    %c0_i32 = arith.constant 0 : i32
    %c0_i32_0 = arith.constant 0 : i32
    %c0_i32_1 = arith.constant 0 : i32
    return %c0_i32, %c0_i32_0 : i32, i32
  }
  func.func @transform_2(%arg0: i32) -> (i32, i32) {
    %c0_i32 = arith.constant 0 : i32
    %c0_i32_0 = arith.constant 0 : i32
    %c0_i32_1 = arith.constant 0 : i32
    return %c0_i32, %c0_i32_0 : i32, i32
  }
  func.func @transform_3(%arg0: i32) -> (i32, i32, i32) {
    %c0_i32 = arith.constant 0 : i32
    %c0_i32_0 = arith.constant 0 : i32
    %c0_i32_1 = arith.constant 0 : i32
    return %arg0, %c0_i32, %c0_i32_0 : i32, i32, i32
  }
}

module attributes {stable_mosaic.version = 11 : i64} {
  func.func @_encoder_layer_kernel(%arg0: i32, %arg1: memref<1x8x32xbf16, #tpu.memory_space<vmem>>, %arg2: memref<4x32x8xbf16, #tpu.memory_space<vmem>>, %arg3: memref<4x32x8xbf16, #tpu.memory_space<vmem>>, %arg4: memref<4x32x8xbf16, #tpu.memory_space<vmem>>, %arg5: memref<4x1x8xf32, #tpu.memory_space<vmem>>, %arg6: memref<4x1x8xf32, #tpu.memory_space<vmem>>, %arg7: memref<4x1x8xf32, #tpu.memory_space<vmem>>, %arg8: memref<32x32xbf16, #tpu.memory_space<vmem>>, %arg9: memref<1x32xf32, #tpu.memory_space<vmem>>, %arg10: memref<1x32xf32, #tpu.memory_space<vmem>>, %arg11: memref<1x32xf32, #tpu.memory_space<vmem>>, %arg12: memref<32x64xbf16, #tpu.memory_space<vmem>>, %arg13: memref<1x64xf32, #tpu.memory_space<vmem>>, %arg14: memref<64x32xbf16, #tpu.memory_space<vmem>>, %arg15: memref<1x32xf32, #tpu.memory_space<vmem>>, %arg16: memref<1x32xf32, #tpu.memory_space<vmem>>, %arg17: memref<1x32xf32, #tpu.memory_space<vmem>>, %arg18: memref<1x8x32xbf16, #tpu.memory_space<vmem>>) attributes {dimension_semantics = [#tpu.dimension_semantics<parallel>], iteration_bounds = array<i64: 2>, scalar_prefetch = 0 : i64, scratch_operands = 0 : i64, tpu.core_type = #tpu.core_type<tc>, window_params = [{transform_indices = @transform_0, window_bounds = array<i64: 1, 8, 32>}, {pipeline_mode = #tpu.pipeline_mode<synchronous>, transform_indices = @transform_1, window_bounds = array<i64: 4, 32, 8>}, {pipeline_mode = #tpu.pipeline_mode<synchronous>, transform_indices = @transform_2, window_bounds = array<i64: 4, 32, 8>}, {pipeline_mode = #tpu.pipeline_mode<synchronous>, transform_indices = @transform_3, window_bounds = array<i64: 4, 32, 8>}, {pipeline_mode = #tpu.pipeline_mode<synchronous>, transform_indices = @transform_4, window_bounds = array<i64: 4, 1, 8>}, {pipeline_mode = #tpu.pipeline_mode<synchronous>, transform_indices = @transform_5, window_bounds = array<i64: 4, 1, 8>}, {pipeline_mode = #tpu.pipeline_mode<synchronous>, transform_indices = @transform_6, window_bounds = array<i64: 4, 1, 8>}, {pipeline_mode = #tpu.pipeline_mode<synchronous>, transform_indices = @transform_7, window_bounds = array<i64: 32, 32>}, {pipeline_mode = #tpu.pipeline_mode<synchronous>, transform_indices = @transform_8, window_bounds = array<i64: 1, 32>}, {pipeline_mode = #tpu.pipeline_mode<synchronous>, transform_indices = @transform_9, window_bounds = array<i64: 1, 32>}, {pipeline_mode = #tpu.pipeline_mode<synchronous>, transform_indices = @transform_10, window_bounds = array<i64: 1, 32>}, {pipeline_mode = #tpu.pipeline_mode<synchronous>, transform_indices = @transform_11, window_bounds = array<i64: 32, 64>}, {pipeline_mode = #tpu.pipeline_mode<synchronous>, transform_indices = @transform_12, window_bounds = array<i64: 1, 64>}, {pipeline_mode = #tpu.pipeline_mode<synchronous>, transform_indices = @transform_13, window_bounds = array<i64: 64, 32>}, {pipeline_mode = #tpu.pipeline_mode<synchronous>, transform_indices = @transform_14, window_bounds = array<i64: 1, 32>}, {pipeline_mode = #tpu.pipeline_mode<synchronous>, transform_indices = @transform_15, window_bounds = array<i64: 1, 32>}, {pipeline_mode = #tpu.pipeline_mode<synchronous>, transform_indices = @transform_16, window_bounds = array<i64: 1, 32>}, {transform_indices = @transform_17, window_bounds = array<i64: 1, 8, 32>}]} {
    %c0 = arith.constant 0 : index
    %c0_0 = arith.constant 0 : index
    %c0_1 = arith.constant 0 : index
    %0 = vector.load %arg1[%c0, %c0_0, %c0_1] : memref<1x8x32xbf16, #tpu.memory_space<vmem>>, vector<1x8x32xbf16>
    %1 = vector.shape_cast %0 : vector<1x8x32xbf16> to vector<8x32xbf16>
    %2 = arith.extf %1 : vector<8x32xbf16> to vector<8x32xf32>
    %c0_2 = arith.constant 0 : index
    %c0_3 = arith.constant 0 : index
    %c0_4 = arith.constant 0 : index
    %3 = vector.load %arg2[%c0_2, %c0_3, %c0_4] : memref<4x32x8xbf16, #tpu.memory_space<vmem>>, vector<1x32x8xbf16>
    %4 = vector.shape_cast %3 : vector<1x32x8xbf16> to vector<32x8xbf16>
    %cst = arith.constant dense<0.000000e+00> : vector<8x8xf32>
    %5 = tpu.matmul %1, %4, %cst {dimension_numbers = #tpu.dot_dimension_numbers<[1], [0], [0], [1], [0, 0, 1, 1], [], []>} : vector<8x32xbf16>, vector<32x8xbf16>, vector<8x8xf32> -> vector<8x8xf32>
    %c0_5 = arith.constant 0 : index
    %c0_6 = arith.constant 0 : index
    %c0_7 = arith.constant 0 : index
    %6 = vector.load %arg5[%c0_5, %c0_6, %c0_7] : memref<4x1x8xf32, #tpu.memory_space<vmem>>, vector<1x1x8xf32>
    %7 = vector.shape_cast %6 : vector<1x1x8xf32> to vector<1x8xf32>
    %8 = vector.broadcast %7 : vector<1x8xf32> to vector<8x8xf32>
    %9 = arith.addf %5, %8 : vector<8x8xf32>
    %c0_8 = arith.constant 0 : index
    %c0_9 = arith.constant 0 : index
    %c0_10 = arith.constant 0 : index
    %10 = vector.load %arg3[%c0_8, %c0_9, %c0_10] : memref<4x32x8xbf16, #tpu.memory_space<vmem>>, vector<1x32x8xbf16>
    %11 = vector.shape_cast %10 : vector<1x32x8xbf16> to vector<32x8xbf16>
    %cst_11 = arith.constant dense<0.000000e+00> : vector<8x8xf32>
    %12 = tpu.matmul %1, %11, %cst_11 {dimension_numbers = #tpu.dot_dimension_numbers<[1], [0], [0], [1], [0, 0, 1, 1], [], []>} : vector<8x32xbf16>, vector<32x8xbf16>, vector<8x8xf32> -> vector<8x8xf32>
    %c0_12 = arith.constant 0 : index
    %c0_13 = arith.constant 0 : index
    %c0_14 = arith.constant 0 : index
    %13 = vector.load %arg6[%c0_12, %c0_13, %c0_14] : memref<4x1x8xf32, #tpu.memory_space<vmem>>, vector<1x1x8xf32>
    %14 = vector.shape_cast %13 : vector<1x1x8xf32> to vector<1x8xf32>
    %15 = vector.broadcast %14 : vector<1x8xf32> to vector<8x8xf32>
    %16 = arith.addf %12, %15 : vector<8x8xf32>
    %c0_15 = arith.constant 0 : index
    %c0_16 = arith.constant 0 : index
    %c0_17 = arith.constant 0 : index
    %17 = vector.load %arg4[%c0_15, %c0_16, %c0_17] : memref<4x32x8xbf16, #tpu.memory_space<vmem>>, vector<1x32x8xbf16>
    %18 = vector.shape_cast %17 : vector<1x32x8xbf16> to vector<32x8xbf16>
    %cst_18 = arith.constant dense<0.000000e+00> : vector<8x8xf32>
    %19 = tpu.matmul %1, %18, %cst_18 {dimension_numbers = #tpu.dot_dimension_numbers<[1], [0], [0], [1], [0, 0, 1, 1], [], []>} : vector<8x32xbf16>, vector<32x8xbf16>, vector<8x8xf32> -> vector<8x8xf32>
    %c0_19 = arith.constant 0 : index
    %c0_20 = arith.constant 0 : index
    %c0_21 = arith.constant 0 : index
    %20 = vector.load %arg7[%c0_19, %c0_20, %c0_21] : memref<4x1x8xf32, #tpu.memory_space<vmem>>, vector<1x1x8xf32>
    %21 = vector.shape_cast %20 : vector<1x1x8xf32> to vector<1x8xf32>
    %22 = vector.broadcast %21 : vector<1x8xf32> to vector<8x8xf32>
    %23 = arith.addf %19, %22 : vector<8x8xf32>
    %24 = vector.shape_cast %9 : vector<8x8xf32> to vector<1x8x8xf32>
    %25 = arith.truncf %24 : vector<1x8x8xf32> to vector<1x8x8xbf16>
    %26 = vector.shape_cast %16 : vector<8x8xf32> to vector<1x8x8xf32>
    %27 = arith.truncf %26 : vector<1x8x8xf32> to vector<1x8x8xbf16>
    %28 = vector.shape_cast %23 : vector<8x8xf32> to vector<1x8x8xf32>
    %29 = arith.truncf %28 : vector<1x8x8xf32> to vector<1x8x8xbf16>
    "tpu.trace_start"() <{level = 10 : i32, message = "bid,bjd->bij"}> : () -> ()
    %cst_22 = arith.constant dense<0.000000e+00> : vector<1x8x8xf32>
    %30 = tpu.matmul %25, %27, %cst_22 {dimension_numbers = #tpu.dot_dimension_numbers<[2], [2], [1], [1], [0, 0, 0, 1, 1, 1], [0], [0]>} : vector<1x8x8xbf16>, vector<1x8x8xbf16>, vector<1x8x8xf32> -> vector<1x8x8xf32>
    "tpu.trace_stop"() : () -> ()
    %cst_23 = arith.constant dense<0xFF800000> : vector<1x8xf32>
    %31 = vector.multi_reduction <maximumf>, %30, %cst_23 [2] : vector<1x8x8xf32> to vector<1x8xf32>
    %32 = vector.shape_cast %31 : vector<1x8xf32> to vector<1x8x1xf32>
    %33 = vector.broadcast %32 : vector<1x8x1xf32> to vector<1x8x8xf32>
    %34 = arith.subf %30, %33 : vector<1x8x8xf32>
    %35 = math.exp %34 : vector<1x8x8xf32>
    %cst_24 = arith.constant dense<0.000000e+00> : vector<1x8xf32>
    %36 = vector.multi_reduction <add>, %35, %cst_24 [2] : vector<1x8x8xf32> to vector<1x8xf32>
    %37 = vector.shape_cast %36 : vector<1x8xf32> to vector<1x8x1xf32>
    %38 = arith.truncf %35 : vector<1x8x8xf32> to vector<1x8x8xbf16>
    "tpu.trace_start"() <{level = 10 : i32, message = "bij,bjd->bid"}> : () -> ()
    %cst_25 = arith.constant dense<0.000000e+00> : vector<1x8x8xf32>
    %39 = tpu.matmul %38, %29, %cst_25 {dimension_numbers = #tpu.dot_dimension_numbers<[2], [1], [1], [2], [0, 0, 0, 1, 1, 2], [0], [0]>} : vector<1x8x8xbf16>, vector<1x8x8xbf16>, vector<1x8x8xf32> -> vector<1x8x8xf32>
    "tpu.trace_stop"() : () -> ()
    %40 = tpu.reciprocal %37 {approx = true} : vector<1x8x1xf32> -> vector<1x8x1xf32>
    %41 = vector.broadcast %40 : vector<1x8x1xf32> to vector<1x8x8xf32>
    %42 = arith.mulf %39, %41 : vector<1x8x8xf32>
    %43 = vector.shape_cast %42 : vector<1x8x8xf32> to vector<8x8xf32>
    %44 = arith.truncf %43 : vector<8x8xf32> to vector<8x8xbf16>
    %c1 = arith.constant 1 : index
    %c0_26 = arith.constant 0 : index
    %c0_27 = arith.constant 0 : index
    %45 = vector.load %arg2[%c1, %c0_26, %c0_27] : memref<4x32x8xbf16, #tpu.memory_space<vmem>>, vector<1x32x8xbf16>
    %46 = vector.shape_cast %45 : vector<1x32x8xbf16> to vector<32x8xbf16>
    %cst_28 = arith.constant dense<0.000000e+00> : vector<8x8xf32>
    %47 = tpu.matmul %1, %46, %cst_28 {dimension_numbers = #tpu.dot_dimension_numbers<[1], [0], [0], [1], [0, 0, 1, 1], [], []>} : vector<8x32xbf16>, vector<32x8xbf16>, vector<8x8xf32> -> vector<8x8xf32>
    %c1_29 = arith.constant 1 : index
    %c0_30 = arith.constant 0 : index
    %c0_31 = arith.constant 0 : index
    %48 = vector.load %arg5[%c1_29, %c0_30, %c0_31] : memref<4x1x8xf32, #tpu.memory_space<vmem>>, vector<1x1x8xf32>
    %49 = vector.shape_cast %48 : vector<1x1x8xf32> to vector<1x8xf32>
    %50 = vector.broadcast %49 : vector<1x8xf32> to vector<8x8xf32>
    %51 = arith.addf %47, %50 : vector<8x8xf32>
    %c1_32 = arith.constant 1 : index
    %c0_33 = arith.constant 0 : index
    %c0_34 = arith.constant 0 : index
    %52 = vector.load %arg3[%c1_32, %c0_33, %c0_34] : memref<4x32x8xbf16, #tpu.memory_space<vmem>>, vector<1x32x8xbf16>
    %53 = vector.shape_cast %52 : vector<1x32x8xbf16> to vector<32x8xbf16>
    %cst_35 = arith.constant dense<0.000000e+00> : vector<8x8xf32>
    %54 = tpu.matmul %1, %53, %cst_35 {dimension_numbers = #tpu.dot_dimension_numbers<[1], [0], [0], [1], [0, 0, 1, 1], [], []>} : vector<8x32xbf16>, vector<32x8xbf16>, vector<8x8xf32> -> vector<8x8xf32>
    %c1_36 = arith.constant 1 : index
    %c0_37 = arith.constant 0 : index
    %c0_38 = arith.constant 0 : index
    %55 = vector.load %arg6[%c1_36, %c0_37, %c0_38] : memref<4x1x8xf32, #tpu.memory_space<vmem>>, vector<1x1x8xf32>
    %56 = vector.shape_cast %55 : vector<1x1x8xf32> to vector<1x8xf32>
    %57 = vector.broadcast %56 : vector<1x8xf32> to vector<8x8xf32>
    %58 = arith.addf %54, %57 : vector<8x8xf32>
    %c1_39 = arith.constant 1 : index
    %c0_40 = arith.constant 0 : index
    %c0_41 = arith.constant 0 : index
    %59 = vector.load %arg4[%c1_39, %c0_40, %c0_41] : memref<4x32x8xbf16, #tpu.memory_space<vmem>>, vector<1x32x8xbf16>
    %60 = vector.shape_cast %59 : vector<1x32x8xbf16> to vector<32x8xbf16>
    %cst_42 = arith.constant dense<0.000000e+00> : vector<8x8xf32>
    %61 = tpu.matmul %1, %60, %cst_42 {dimension_numbers = #tpu.dot_dimension_numbers<[1], [0], [0], [1], [0, 0, 1, 1], [], []>} : vector<8x32xbf16>, vector<32x8xbf16>, vector<8x8xf32> -> vector<8x8xf32>
    %c1_43 = arith.constant 1 : index
    %c0_44 = arith.constant 0 : index
    %c0_45 = arith.constant 0 : index
    %62 = vector.load %arg7[%c1_43, %c0_44, %c0_45] : memref<4x1x8xf32, #tpu.memory_space<vmem>>, vector<1x1x8xf32>
    %63 = vector.shape_cast %62 : vector<1x1x8xf32> to vector<1x8xf32>
    %64 = vector.broadcast %63 : vector<1x8xf32> to vector<8x8xf32>
    %65 = arith.addf %61, %64 : vector<8x8xf32>
    %66 = vector.shape_cast %51 : vector<8x8xf32> to vector<1x8x8xf32>
    %67 = arith.truncf %66 : vector<1x8x8xf32> to vector<1x8x8xbf16>
    %68 = vector.shape_cast %58 : vector<8x8xf32> to vector<1x8x8xf32>
    %69 = arith.truncf %68 : vector<1x8x8xf32> to vector<1x8x8xbf16>
    %70 = vector.shape_cast %65 : vector<8x8xf32> to vector<1x8x8xf32>
    %71 = arith.truncf %70 : vector<1x8x8xf32> to vector<1x8x8xbf16>
    "tpu.trace_start"() <{level = 10 : i32, message = "bid,bjd->bij"}> : () -> ()
    %cst_46 = arith.constant dense<0.000000e+00> : vector<1x8x8xf32>
    %72 = tpu.matmul %67, %69, %cst_46 {dimension_numbers = #tpu.dot_dimension_numbers<[2], [2], [1], [1], [0, 0, 0, 1, 1, 1], [0], [0]>} : vector<1x8x8xbf16>, vector<1x8x8xbf16>, vector<1x8x8xf32> -> vector<1x8x8xf32>
    "tpu.trace_stop"() : () -> ()
    %cst_47 = arith.constant dense<0xFF800000> : vector<1x8xf32>
    %73 = vector.multi_reduction <maximumf>, %72, %cst_47 [2] : vector<1x8x8xf32> to vector<1x8xf32>
    %74 = vector.shape_cast %73 : vector<1x8xf32> to vector<1x8x1xf32>
    %75 = vector.broadcast %74 : vector<1x8x1xf32> to vector<1x8x8xf32>
    %76 = arith.subf %72, %75 : vector<1x8x8xf32>
    %77 = math.exp %76 : vector<1x8x8xf32>
    %cst_48 = arith.constant dense<0.000000e+00> : vector<1x8xf32>
    %78 = vector.multi_reduction <add>, %77, %cst_48 [2] : vector<1x8x8xf32> to vector<1x8xf32>
    %79 = vector.shape_cast %78 : vector<1x8xf32> to vector<1x8x1xf32>
    %80 = arith.truncf %77 : vector<1x8x8xf32> to vector<1x8x8xbf16>
    "tpu.trace_start"() <{level = 10 : i32, message = "bij,bjd->bid"}> : () -> ()
    %cst_49 = arith.constant dense<0.000000e+00> : vector<1x8x8xf32>
    %81 = tpu.matmul %80, %71, %cst_49 {dimension_numbers = #tpu.dot_dimension_numbers<[2], [1], [1], [2], [0, 0, 0, 1, 1, 2], [0], [0]>} : vector<1x8x8xbf16>, vector<1x8x8xbf16>, vector<1x8x8xf32> -> vector<1x8x8xf32>
    "tpu.trace_stop"() : () -> ()
    %82 = tpu.reciprocal %79 {approx = true} : vector<1x8x1xf32> -> vector<1x8x1xf32>
    %83 = vector.broadcast %82 : vector<1x8x1xf32> to vector<1x8x8xf32>
    %84 = arith.mulf %81, %83 : vector<1x8x8xf32>
    %85 = vector.shape_cast %84 : vector<1x8x8xf32> to vector<8x8xf32>
    %86 = arith.truncf %85 : vector<8x8xf32> to vector<8x8xbf16>
    %c2 = arith.constant 2 : index
    %c0_50 = arith.constant 0 : index
    %c0_51 = arith.constant 0 : index
    %87 = vector.load %arg2[%c2, %c0_50, %c0_51] : memref<4x32x8xbf16, #tpu.memory_space<vmem>>, vector<1x32x8xbf16>
    %88 = vector.shape_cast %87 : vector<1x32x8xbf16> to vector<32x8xbf16>
    %cst_52 = arith.constant dense<0.000000e+00> : vector<8x8xf32>
    %89 = tpu.matmul %1, %88, %cst_52 {dimension_numbers = #tpu.dot_dimension_numbers<[1], [0], [0], [1], [0, 0, 1, 1], [], []>} : vector<8x32xbf16>, vector<32x8xbf16>, vector<8x8xf32> -> vector<8x8xf32>
    %c2_53 = arith.constant 2 : index
    %c0_54 = arith.constant 0 : index
    %c0_55 = arith.constant 0 : index
    %90 = vector.load %arg5[%c2_53, %c0_54, %c0_55] : memref<4x1x8xf32, #tpu.memory_space<vmem>>, vector<1x1x8xf32>
    %91 = vector.shape_cast %90 : vector<1x1x8xf32> to vector<1x8xf32>
    %92 = vector.broadcast %91 : vector<1x8xf32> to vector<8x8xf32>
    %93 = arith.addf %89, %92 : vector<8x8xf32>
    %c2_56 = arith.constant 2 : index
    %c0_57 = arith.constant 0 : index
    %c0_58 = arith.constant 0 : index
    %94 = vector.load %arg3[%c2_56, %c0_57, %c0_58] : memref<4x32x8xbf16, #tpu.memory_space<vmem>>, vector<1x32x8xbf16>
    %95 = vector.shape_cast %94 : vector<1x32x8xbf16> to vector<32x8xbf16>
    %cst_59 = arith.constant dense<0.000000e+00> : vector<8x8xf32>
    %96 = tpu.matmul %1, %95, %cst_59 {dimension_numbers = #tpu.dot_dimension_numbers<[1], [0], [0], [1], [0, 0, 1, 1], [], []>} : vector<8x32xbf16>, vector<32x8xbf16>, vector<8x8xf32> -> vector<8x8xf32>
    %c2_60 = arith.constant 2 : index
    %c0_61 = arith.constant 0 : index
    %c0_62 = arith.constant 0 : index
    %97 = vector.load %arg6[%c2_60, %c0_61, %c0_62] : memref<4x1x8xf32, #tpu.memory_space<vmem>>, vector<1x1x8xf32>
    %98 = vector.shape_cast %97 : vector<1x1x8xf32> to vector<1x8xf32>
    %99 = vector.broadcast %98 : vector<1x8xf32> to vector<8x8xf32>
    %100 = arith.addf %96, %99 : vector<8x8xf32>
    %c2_63 = arith.constant 2 : index
    %c0_64 = arith.constant 0 : index
    %c0_65 = arith.constant 0 : index
    %101 = vector.load %arg4[%c2_63, %c0_64, %c0_65] : memref<4x32x8xbf16, #tpu.memory_space<vmem>>, vector<1x32x8xbf16>
    %102 = vector.shape_cast %101 : vector<1x32x8xbf16> to vector<32x8xbf16>
    %cst_66 = arith.constant dense<0.000000e+00> : vector<8x8xf32>
    %103 = tpu.matmul %1, %102, %cst_66 {dimension_numbers = #tpu.dot_dimension_numbers<[1], [0], [0], [1], [0, 0, 1, 1], [], []>} : vector<8x32xbf16>, vector<32x8xbf16>, vector<8x8xf32> -> vector<8x8xf32>
    %c2_67 = arith.constant 2 : index
    %c0_68 = arith.constant 0 : index
    %c0_69 = arith.constant 0 : index
    %104 = vector.load %arg7[%c2_67, %c0_68, %c0_69] : memref<4x1x8xf32, #tpu.memory_space<vmem>>, vector<1x1x8xf32>
    %105 = vector.shape_cast %104 : vector<1x1x8xf32> to vector<1x8xf32>
    %106 = vector.broadcast %105 : vector<1x8xf32> to vector<8x8xf32>
    %107 = arith.addf %103, %106 : vector<8x8xf32>
    %108 = vector.shape_cast %93 : vector<8x8xf32> to vector<1x8x8xf32>
    %109 = arith.truncf %108 : vector<1x8x8xf32> to vector<1x8x8xbf16>
    %110 = vector.shape_cast %100 : vector<8x8xf32> to vector<1x8x8xf32>
    %111 = arith.truncf %110 : vector<1x8x8xf32> to vector<1x8x8xbf16>
    %112 = vector.shape_cast %107 : vector<8x8xf32> to vector<1x8x8xf32>
    %113 = arith.truncf %112 : vector<1x8x8xf32> to vector<1x8x8xbf16>
    "tpu.trace_start"() <{level = 10 : i32, message = "bid,bjd->bij"}> : () -> ()
    %cst_70 = arith.constant dense<0.000000e+00> : vector<1x8x8xf32>
    %114 = tpu.matmul %109, %111, %cst_70 {dimension_numbers = #tpu.dot_dimension_numbers<[2], [2], [1], [1], [0, 0, 0, 1, 1, 1], [0], [0]>} : vector<1x8x8xbf16>, vector<1x8x8xbf16>, vector<1x8x8xf32> -> vector<1x8x8xf32>
    "tpu.trace_stop"() : () -> ()
    %cst_71 = arith.constant dense<0xFF800000> : vector<1x8xf32>
    %115 = vector.multi_reduction <maximumf>, %114, %cst_71 [2] : vector<1x8x8xf32> to vector<1x8xf32>
    %116 = vector.shape_cast %115 : vector<1x8xf32> to vector<1x8x1xf32>
    %117 = vector.broadcast %116 : vector<1x8x1xf32> to vector<1x8x8xf32>
    %118 = arith.subf %114, %117 : vector<1x8x8xf32>
    %119 = math.exp %118 : vector<1x8x8xf32>
    %cst_72 = arith.constant dense<0.000000e+00> : vector<1x8xf32>
    %120 = vector.multi_reduction <add>, %119, %cst_72 [2] : vector<1x8x8xf32> to vector<1x8xf32>
    %121 = vector.shape_cast %120 : vector<1x8xf32> to vector<1x8x1xf32>
    %122 = arith.truncf %119 : vector<1x8x8xf32> to vector<1x8x8xbf16>
    "tpu.trace_start"() <{level = 10 : i32, message = "bij,bjd->bid"}> : () -> ()
    %cst_73 = arith.constant dense<0.000000e+00> : vector<1x8x8xf32>
    %123 = tpu.matmul %122, %113, %cst_73 {dimension_numbers = #tpu.dot_dimension_numbers<[2], [1], [1], [2], [0, 0, 0, 1, 1, 2], [0], [0]>} : vector<1x8x8xbf16>, vector<1x8x8xbf16>, vector<1x8x8xf32> -> vector<1x8x8xf32>
    "tpu.trace_stop"() : () -> ()
    %124 = tpu.reciprocal %121 {approx = true} : vector<1x8x1xf32> -> vector<1x8x1xf32>
    %125 = vector.broadcast %124 : vector<1x8x1xf32> to vector<1x8x8xf32>
    %126 = arith.mulf %123, %125 : vector<1x8x8xf32>
    %127 = vector.shape_cast %126 : vector<1x8x8xf32> to vector<8x8xf32>
    %128 = arith.truncf %127 : vector<8x8xf32> to vector<8x8xbf16>
    %c3 = arith.constant 3 : index
    %c0_74 = arith.constant 0 : index
    %c0_75 = arith.constant 0 : index
    %129 = vector.load %arg2[%c3, %c0_74, %c0_75] : memref<4x32x8xbf16, #tpu.memory_space<vmem>>, vector<1x32x8xbf16>
    %130 = vector.shape_cast %129 : vector<1x32x8xbf16> to vector<32x8xbf16>
    %cst_76 = arith.constant dense<0.000000e+00> : vector<8x8xf32>
    %131 = tpu.matmul %1, %130, %cst_76 {dimension_numbers = #tpu.dot_dimension_numbers<[1], [0], [0], [1], [0, 0, 1, 1], [], []>} : vector<8x32xbf16>, vector<32x8xbf16>, vector<8x8xf32> -> vector<8x8xf32>
    %c3_77 = arith.constant 3 : index
    %c0_78 = arith.constant 0 : index
    %c0_79 = arith.constant 0 : index
    %132 = vector.load %arg5[%c3_77, %c0_78, %c0_79] : memref<4x1x8xf32, #tpu.memory_space<vmem>>, vector<1x1x8xf32>
    %133 = vector.shape_cast %132 : vector<1x1x8xf32> to vector<1x8xf32>
    %134 = vector.broadcast %133 : vector<1x8xf32> to vector<8x8xf32>
    %135 = arith.addf %131, %134 : vector<8x8xf32>
    %c3_80 = arith.constant 3 : index
    %c0_81 = arith.constant 0 : index
    %c0_82 = arith.constant 0 : index
    %136 = vector.load %arg3[%c3_80, %c0_81, %c0_82] : memref<4x32x8xbf16, #tpu.memory_space<vmem>>, vector<1x32x8xbf16>
    %137 = vector.shape_cast %136 : vector<1x32x8xbf16> to vector<32x8xbf16>
    %cst_83 = arith.constant dense<0.000000e+00> : vector<8x8xf32>
    %138 = tpu.matmul %1, %137, %cst_83 {dimension_numbers = #tpu.dot_dimension_numbers<[1], [0], [0], [1], [0, 0, 1, 1], [], []>} : vector<8x32xbf16>, vector<32x8xbf16>, vector<8x8xf32> -> vector<8x8xf32>
    %c3_84 = arith.constant 3 : index
    %c0_85 = arith.constant 0 : index
    %c0_86 = arith.constant 0 : index
    %139 = vector.load %arg6[%c3_84, %c0_85, %c0_86] : memref<4x1x8xf32, #tpu.memory_space<vmem>>, vector<1x1x8xf32>
    %140 = vector.shape_cast %139 : vector<1x1x8xf32> to vector<1x8xf32>
    %141 = vector.broadcast %140 : vector<1x8xf32> to vector<8x8xf32>
    %142 = arith.addf %138, %141 : vector<8x8xf32>
    %c3_87 = arith.constant 3 : index
    %c0_88 = arith.constant 0 : index
    %c0_89 = arith.constant 0 : index
    %143 = vector.load %arg4[%c3_87, %c0_88, %c0_89] : memref<4x32x8xbf16, #tpu.memory_space<vmem>>, vector<1x32x8xbf16>
    %144 = vector.shape_cast %143 : vector<1x32x8xbf16> to vector<32x8xbf16>
    %cst_90 = arith.constant dense<0.000000e+00> : vector<8x8xf32>
    %145 = tpu.matmul %1, %144, %cst_90 {dimension_numbers = #tpu.dot_dimension_numbers<[1], [0], [0], [1], [0, 0, 1, 1], [], []>} : vector<8x32xbf16>, vector<32x8xbf16>, vector<8x8xf32> -> vector<8x8xf32>
    %c3_91 = arith.constant 3 : index
    %c0_92 = arith.constant 0 : index
    %c0_93 = arith.constant 0 : index
    %146 = vector.load %arg7[%c3_91, %c0_92, %c0_93] : memref<4x1x8xf32, #tpu.memory_space<vmem>>, vector<1x1x8xf32>
    %147 = vector.shape_cast %146 : vector<1x1x8xf32> to vector<1x8xf32>
    %148 = vector.broadcast %147 : vector<1x8xf32> to vector<8x8xf32>
    %149 = arith.addf %145, %148 : vector<8x8xf32>
    %150 = vector.shape_cast %135 : vector<8x8xf32> to vector<1x8x8xf32>
    %151 = arith.truncf %150 : vector<1x8x8xf32> to vector<1x8x8xbf16>
    %152 = vector.shape_cast %142 : vector<8x8xf32> to vector<1x8x8xf32>
    %153 = arith.truncf %152 : vector<1x8x8xf32> to vector<1x8x8xbf16>
    %154 = vector.shape_cast %149 : vector<8x8xf32> to vector<1x8x8xf32>
    %155 = arith.truncf %154 : vector<1x8x8xf32> to vector<1x8x8xbf16>
    "tpu.trace_start"() <{level = 10 : i32, message = "bid,bjd->bij"}> : () -> ()
    %cst_94 = arith.constant dense<0.000000e+00> : vector<1x8x8xf32>
    %156 = tpu.matmul %151, %153, %cst_94 {dimension_numbers = #tpu.dot_dimension_numbers<[2], [2], [1], [1], [0, 0, 0, 1, 1, 1], [0], [0]>} : vector<1x8x8xbf16>, vector<1x8x8xbf16>, vector<1x8x8xf32> -> vector<1x8x8xf32>
    "tpu.trace_stop"() : () -> ()
    %cst_95 = arith.constant dense<0xFF800000> : vector<1x8xf32>
    %157 = vector.multi_reduction <maximumf>, %156, %cst_95 [2] : vector<1x8x8xf32> to vector<1x8xf32>
    %158 = vector.shape_cast %157 : vector<1x8xf32> to vector<1x8x1xf32>
    %159 = vector.broadcast %158 : vector<1x8x1xf32> to vector<1x8x8xf32>
    %160 = arith.subf %156, %159 : vector<1x8x8xf32>
    %161 = math.exp %160 : vector<1x8x8xf32>
    %cst_96 = arith.constant dense<0.000000e+00> : vector<1x8xf32>
    %162 = vector.multi_reduction <add>, %161, %cst_96 [2] : vector<1x8x8xf32> to vector<1x8xf32>
    %163 = vector.shape_cast %162 : vector<1x8xf32> to vector<1x8x1xf32>
    %164 = arith.truncf %161 : vector<1x8x8xf32> to vector<1x8x8xbf16>
    "tpu.trace_start"() <{level = 10 : i32, message = "bij,bjd->bid"}> : () -> ()
    %cst_97 = arith.constant dense<0.000000e+00> : vector<1x8x8xf32>
    %165 = tpu.matmul %164, %155, %cst_97 {dimension_numbers = #tpu.dot_dimension_numbers<[2], [1], [1], [2], [0, 0, 0, 1, 1, 2], [0], [0]>} : vector<1x8x8xbf16>, vector<1x8x8xbf16>, vector<1x8x8xf32> -> vector<1x8x8xf32>
    "tpu.trace_stop"() : () -> ()
    %166 = tpu.reciprocal %163 {approx = true} : vector<1x8x1xf32> -> vector<1x8x1xf32>
    %167 = vector.broadcast %166 : vector<1x8x1xf32> to vector<1x8x8xf32>
    %168 = arith.mulf %165, %167 : vector<1x8x8xf32>
    %169 = vector.shape_cast %168 : vector<1x8x8xf32> to vector<8x8xf32>
    %170 = arith.truncf %169 : vector<8x8xf32> to vector<8x8xbf16>
    %171 = tpu.concatenate %44, %86, %128, %170 in 1 : vector<8x8xbf16>, vector<8x8xbf16>, vector<8x8xbf16>, vector<8x8xbf16> -> vector<8x32xbf16>
    %c0_98 = arith.constant 0 : index
    %c0_99 = arith.constant 0 : index
    %172 = vector.load %arg8[%c0_98, %c0_99] : memref<32x32xbf16, #tpu.memory_space<vmem>>, vector<32x32xbf16>
    %cst_100 = arith.constant dense<0.000000e+00> : vector<8x32xf32>
    %173 = tpu.matmul %171, %172, %cst_100 {dimension_numbers = #tpu.dot_dimension_numbers<[1], [0], [0], [1], [0, 0, 1, 1], [], []>} : vector<8x32xbf16>, vector<32x32xbf16>, vector<8x32xf32> -> vector<8x32xf32>
    %c0_101 = arith.constant 0 : index
    %c0_102 = arith.constant 0 : index
    %174 = vector.load %arg9[%c0_101, %c0_102] : memref<1x32xf32, #tpu.memory_space<vmem>>, vector<1x32xf32>
    %175 = vector.broadcast %174 : vector<1x32xf32> to vector<8x32xf32>
    %176 = arith.addf %173, %175 : vector<8x32xf32>
    %177 = arith.addf %2, %176 : vector<8x32xf32>
    %cst_103 = arith.constant dense<0.000000e+00> : vector<8xf32>
    %178 = vector.multi_reduction <add>, %177, %cst_103 [1] : vector<8x32xf32> to vector<8xf32>
    %179 = vector.shape_cast %178 : vector<8xf32> to vector<8x1xf32>
    %cst_104 = arith.constant 3.200000e+01 : f32
    %180 = vector.broadcast %cst_104 : f32 to vector<8x1xf32>
    %181 = arith.divf %179, %180 : vector<8x1xf32>
    %182 = vector.broadcast %181 : vector<8x1xf32> to vector<8x32xf32>
    %183 = arith.subf %177, %182 : vector<8x32xf32>
    %184 = arith.mulf %183, %183 : vector<8x32xf32>
    %cst_105 = arith.constant dense<0.000000e+00> : vector<8xf32>
    %185 = vector.multi_reduction <add>, %184, %cst_105 [1] : vector<8x32xf32> to vector<8xf32>
    %186 = vector.shape_cast %185 : vector<8xf32> to vector<8x1xf32>
    %cst_106 = arith.constant 3.200000e+01 : f32
    %187 = vector.broadcast %cst_106 : f32 to vector<8x1xf32>
    %188 = arith.divf %186, %187 : vector<8x1xf32>
    %189 = vector.broadcast %181 : vector<8x1xf32> to vector<8x32xf32>
    %190 = arith.subf %177, %189 : vector<8x32xf32>
    %cst_107 = arith.constant 9.99999974E-6 : f32
    %191 = vector.broadcast %cst_107 : f32 to vector<8x1xf32>
    %192 = arith.addf %188, %191 : vector<8x1xf32>
    %193 = math.rsqrt %192 : vector<8x1xf32>
    %194 = vector.broadcast %193 : vector<8x1xf32> to vector<8x32xf32>
    %195 = arith.mulf %190, %194 : vector<8x32xf32>
    %c0_108 = arith.constant 0 : index
    %c0_109 = arith.constant 0 : index
    %196 = vector.load %arg10[%c0_108, %c0_109] : memref<1x32xf32, #tpu.memory_space<vmem>>, vector<1x32xf32>
    %197 = vector.broadcast %196 : vector<1x32xf32> to vector<8x32xf32>
    %198 = arith.mulf %195, %197 : vector<8x32xf32>
    %c0_110 = arith.constant 0 : index
    %c0_111 = arith.constant 0 : index
    %199 = vector.load %arg11[%c0_110, %c0_111] : memref<1x32xf32, #tpu.memory_space<vmem>>, vector<1x32xf32>
    %200 = vector.broadcast %199 : vector<1x32xf32> to vector<8x32xf32>
    %201 = arith.addf %198, %200 : vector<8x32xf32>
    %202 = arith.truncf %201 : vector<8x32xf32> to vector<8x32xbf16>
    %c0_112 = arith.constant 0 : index
    %c0_113 = arith.constant 0 : index
    %203 = vector.load %arg12[%c0_112, %c0_113] : memref<32x64xbf16, #tpu.memory_space<vmem>>, vector<32x64xbf16>
    %cst_114 = arith.constant dense<0.000000e+00> : vector<8x64xf32>
    %204 = tpu.matmul %202, %203, %cst_114 {dimension_numbers = #tpu.dot_dimension_numbers<[1], [0], [0], [1], [0, 0, 1, 1], [], []>} : vector<8x32xbf16>, vector<32x64xbf16>, vector<8x64xf32> -> vector<8x64xf32>
    %c0_115 = arith.constant 0 : index
    %c0_116 = arith.constant 0 : index
    %205 = vector.load %arg13[%c0_115, %c0_116] : memref<1x64xf32, #tpu.memory_space<vmem>>, vector<1x64xf32>
    %206 = vector.broadcast %205 : vector<1x64xf32> to vector<8x64xf32>
    %207 = arith.addf %204, %206 : vector<8x64xf32>
    %cst_117 = arith.constant 0.000000e+00 : f32
    %208 = vector.broadcast %cst_117 : f32 to vector<8x64xf32>
    %209 = arith.maximumf %207, %208 : vector<8x64xf32>
    %210 = arith.truncf %209 : vector<8x64xf32> to vector<8x64xbf16>
    %c0_118 = arith.constant 0 : index
    %c0_119 = arith.constant 0 : index
    %211 = vector.load %arg14[%c0_118, %c0_119] : memref<64x32xbf16, #tpu.memory_space<vmem>>, vector<64x32xbf16>
    %cst_120 = arith.constant dense<0.000000e+00> : vector<8x32xf32>
    %212 = tpu.matmul %210, %211, %cst_120 {dimension_numbers = #tpu.dot_dimension_numbers<[1], [0], [0], [1], [0, 0, 1, 1], [], []>} : vector<8x64xbf16>, vector<64x32xbf16>, vector<8x32xf32> -> vector<8x32xf32>
    %c0_121 = arith.constant 0 : index
    %c0_122 = arith.constant 0 : index
    %213 = vector.load %arg15[%c0_121, %c0_122] : memref<1x32xf32, #tpu.memory_space<vmem>>, vector<1x32xf32>
    %214 = vector.broadcast %213 : vector<1x32xf32> to vector<8x32xf32>
    %215 = arith.addf %212, %214 : vector<8x32xf32>
    %216 = arith.addf %201, %215 : vector<8x32xf32>
    %cst_123 = arith.constant dense<0.000000e+00> : vector<8xf32>
    %217 = vector.multi_reduction <add>, %216, %cst_123 [1] : vector<8x32xf32> to vector<8xf32>
    %218 = vector.shape_cast %217 : vector<8xf32> to vector<8x1xf32>
    %cst_124 = arith.constant 3.200000e+01 : f32
    %219 = vector.broadcast %cst_124 : f32 to vector<8x1xf32>
    %220 = arith.divf %218, %219 : vector<8x1xf32>
    %221 = vector.broadcast %220 : vector<8x1xf32> to vector<8x32xf32>
    %222 = arith.subf %216, %221 : vector<8x32xf32>
    %223 = arith.mulf %222, %222 : vector<8x32xf32>
    %cst_125 = arith.constant dense<0.000000e+00> : vector<8xf32>
    %224 = vector.multi_reduction <add>, %223, %cst_125 [1] : vector<8x32xf32> to vector<8xf32>
    %225 = vector.shape_cast %224 : vector<8xf32> to vector<8x1xf32>
    %cst_126 = arith.constant 3.200000e+01 : f32
    %226 = vector.broadcast %cst_126 : f32 to vector<8x1xf32>
    %227 = arith.divf %225, %226 : vector<8x1xf32>
    %228 = vector.broadcast %220 : vector<8x1xf32> to vector<8x32xf32>
    %229 = arith.subf %216, %228 : vector<8x32xf32>
    %cst_127 = arith.constant 9.99999974E-6 : f32
    %230 = vector.broadcast %cst_127 : f32 to vector<8x1xf32>
    %231 = arith.addf %227, %230 : vector<8x1xf32>
    %232 = math.rsqrt %231 : vector<8x1xf32>
    %233 = vector.broadcast %232 : vector<8x1xf32> to vector<8x32xf32>
    %234 = arith.mulf %229, %233 : vector<8x32xf32>
    %c0_128 = arith.constant 0 : index
    %c0_129 = arith.constant 0 : index
    %235 = vector.load %arg16[%c0_128, %c0_129] : memref<1x32xf32, #tpu.memory_space<vmem>>, vector<1x32xf32>
    %236 = vector.broadcast %235 : vector<1x32xf32> to vector<8x32xf32>
    %237 = arith.mulf %234, %236 : vector<8x32xf32>
    %c0_130 = arith.constant 0 : index
    %c0_131 = arith.constant 0 : index
    %238 = vector.load %arg17[%c0_130, %c0_131] : memref<1x32xf32, #tpu.memory_space<vmem>>, vector<1x32xf32>
    %239 = vector.broadcast %238 : vector<1x32xf32> to vector<8x32xf32>
    %240 = arith.addf %237, %239 : vector<8x32xf32>
    %241 = vector.shape_cast %240 : vector<8x32xf32> to vector<1x8x32xf32>
    %242 = arith.truncf %241 : vector<1x8x32xf32> to vector<1x8x32xbf16>
    %c0_132 = arith.constant 0 : index
    %c0_133 = arith.constant 0 : index
    %c0_134 = arith.constant 0 : index
    %243 = vector.load %arg18[%c0_132, %c0_133, %c0_134] : memref<1x8x32xbf16, #tpu.memory_space<vmem>>, vector<1x8x32xbf16>
    tpu.vector_store %arg18[%c0_132, %c0_133, %c0_134], %242 {strides = array<i32>} : memref<1x8x32xbf16, #tpu.memory_space<vmem>>, vector<1x8x32xbf16>,
    return
  }
  func.func @transform_0(%arg0: i32) -> (i32, i32, i32) {
    %c0_i32 = arith.constant 0 : i32
    %c0_i32_0 = arith.constant 0 : i32
    %c0_i32_1 = arith.constant 0 : i32
    return %arg0, %c0_i32, %c0_i32_0 : i32, i32, i32
  }
  func.func @transform_1(%arg0: i32) -> (i32, i32, i32) {
    %c0_i32 = arith.constant 0 : i32
    %c0_i32_0 = arith.constant 0 : i32
    %c0_i32_1 = arith.constant 0 : i32
    %c0_i32_2 = arith.constant 0 : i32
    return %c0_i32, %c0_i32_0, %c0_i32_1 : i32, i32, i32
  }
  func.func @transform_2(%arg0: i32) -> (i32, i32, i32) {
    %c0_i32 = arith.constant 0 : i32
    %c0_i32_0 = arith.constant 0 : i32
    %c0_i32_1 = arith.constant 0 : i32
    %c0_i32_2 = arith.constant 0 : i32
    return %c0_i32, %c0_i32_0, %c0_i32_1 : i32, i32, i32
  }
  func.func @transform_3(%arg0: i32) -> (i32, i32, i32) {
    %c0_i32 = arith.constant 0 : i32
    %c0_i32_0 = arith.constant 0 : i32
    %c0_i32_1 = arith.constant 0 : i32
    %c0_i32_2 = arith.constant 0 : i32
    return %c0_i32, %c0_i32_0, %c0_i32_1 : i32, i32, i32
  }
  func.func @transform_4(%arg0: i32) -> (i32, i32, i32) {
    %c0_i32 = arith.constant 0 : i32
    %c0_i32_0 = arith.constant 0 : i32
    %c0_i32_1 = arith.constant 0 : i32
    %c0_i32_2 = arith.constant 0 : i32
    return %c0_i32, %c0_i32_0, %c0_i32_1 : i32, i32, i32
  }
  func.func @transform_5(%arg0: i32) -> (i32, i32, i32) {
    %c0_i32 = arith.constant 0 : i32
    %c0_i32_0 = arith.constant 0 : i32
    %c0_i32_1 = arith.constant 0 : i32
    %c0_i32_2 = arith.constant 0 : i32
    return %c0_i32, %c0_i32_0, %c0_i32_1 : i32, i32, i32
  }
  func.func @transform_6(%arg0: i32) -> (i32, i32, i32) {
    %c0_i32 = arith.constant 0 : i32
    %c0_i32_0 = arith.constant 0 : i32
    %c0_i32_1 = arith.constant 0 : i32
    %c0_i32_2 = arith.constant 0 : i32
    return %c0_i32, %c0_i32_0, %c0_i32_1 : i32, i32, i32
  }
  func.func @transform_7(%arg0: i32) -> (i32, i32) {
    %c0_i32 = arith.constant 0 : i32
    %c0_i32_0 = arith.constant 0 : i32
    %c0_i32_1 = arith.constant 0 : i32
    return %c0_i32, %c0_i32_0 : i32, i32
  }
  func.func @transform_8(%arg0: i32) -> (i32, i32) {
    %c0_i32 = arith.constant 0 : i32
    %c0_i32_0 = arith.constant 0 : i32
    %c0_i32_1 = arith.constant 0 : i32
    return %c0_i32, %c0_i32_0 : i32, i32
  }
  func.func @transform_9(%arg0: i32) -> (i32, i32) {
    %c0_i32 = arith.constant 0 : i32
    %c0_i32_0 = arith.constant 0 : i32
    %c0_i32_1 = arith.constant 0 : i32
    return %c0_i32, %c0_i32_0 : i32, i32
  }
  func.func @transform_10(%arg0: i32) -> (i32, i32) {
    %c0_i32 = arith.constant 0 : i32
    %c0_i32_0 = arith.constant 0 : i32
    %c0_i32_1 = arith.constant 0 : i32
    return %c0_i32, %c0_i32_0 : i32, i32
  }
  func.func @transform_11(%arg0: i32) -> (i32, i32) {
    %c0_i32 = arith.constant 0 : i32
    %c0_i32_0 = arith.constant 0 : i32
    %c0_i32_1 = arith.constant 0 : i32
    return %c0_i32, %c0_i32_0 : i32, i32
  }
  func.func @transform_12(%arg0: i32) -> (i32, i32) {
    %c0_i32 = arith.constant 0 : i32
    %c0_i32_0 = arith.constant 0 : i32
    %c0_i32_1 = arith.constant 0 : i32
    return %c0_i32, %c0_i32_0 : i32, i32
  }
  func.func @transform_13(%arg0: i32) -> (i32, i32) {
    %c0_i32 = arith.constant 0 : i32
    %c0_i32_0 = arith.constant 0 : i32
    %c0_i32_1 = arith.constant 0 : i32
    return %c0_i32, %c0_i32_0 : i32, i32
  }
  func.func @transform_14(%arg0: i32) -> (i32, i32) {
    %c0_i32 = arith.constant 0 : i32
    %c0_i32_0 = arith.constant 0 : i32
    %c0_i32_1 = arith.constant 0 : i32
    return %c0_i32, %c0_i32_0 : i32, i32
  }
  func.func @transform_15(%arg0: i32) -> (i32, i32) {
    %c0_i32 = arith.constant 0 : i32
    %c0_i32_0 = arith.constant 0 : i32
    %c0_i32_1 = arith.constant 0 : i32
    return %c0_i32, %c0_i32_0 : i32, i32
  }
  func.func @transform_16(%arg0: i32) -> (i32, i32) {
    %c0_i32 = arith.constant 0 : i32
    %c0_i32_0 = arith.constant 0 : i32
    %c0_i32_1 = arith.constant 0 : i32
    return %c0_i32, %c0_i32_0 : i32, i32
  }
  func.func @transform_17(%arg0: i32) -> (i32, i32, i32) {
    %c0_i32 = arith.constant 0 : i32
    %c0_i32_0 = arith.constant 0 : i32
    %c0_i32_1 = arith.constant 0 : i32
    return %arg0, %c0_i32, %c0_i32_0 : i32, i32, i32
  }
}

</mosaic_0001>

<llo_original>
// kernel: classifier_forward.5
$region0: #{classifier_forward.5}
  #allocation0 [shape = 'u32[]', space=smem, size = 0x4, offset = 0x4, fixed_abs, tag = 'smem constant byte address 0x4 - core index']
  #allocation1 [shape = 'u32[144,128]{1,0:T(1,128)}', space=vmem, size = 0x12000, scoped, tag = 'internal scratch']
  %s0 = inlined_call_operand.vmem [shape: bf16[2,8,32], index: 0, kind: input, shape index: {}]
  %s1 = inlined_call_operand.vmem [shape: bf16[32,128], index: 1, kind: input, shape index: {}]
  %s2 = inlined_call_operand.vmem [shape: f32[1,128], index: 2, kind: input, shape index: {}]
  %s3 = inlined_call_operand.hbm [shape: f32[2,1,128], index: 3, kind: output, shape index: {}]
  %s4 = sld [smem:[#allocation0]]
  $region45: #{classifier_forward.5} parent=0
    _
  %s6 = ssub.s32 1, %s4
  %s7 = scalar_select 0, %s6, %s4
  $region1: #{classifier_forward.5} parent=0
    #allocation2 [shape = 'u8[1024]{0}', space=vmem, size = 0x400, scoped, tag = 'output window, operand 0']
    #allocation3 [shape = 's32[2]{0}', space=sflag, size = 0x8, scoped, tag = 'scoped memory for classifier_forward.5']
    %8 = vsyncpa [#allocation3], 0
    %s9 = scalar_lea.sflag [#allocation3], 1
    %10 = vsyncpa %s9, 0
    loop: start=0, step=1, limit=4
    $region2: #{classifier_forward.5} parent=1 // loop_pre_header
      _
    $region3: #{classifier_forward.5} parent=1 // loop_header
      %s12 = sphi 0, %s16
      %p13 = scmp.ge.s32.totalorder %s12, 4
      %s22 = sphi 0, %s24
      %s25 = sphi 0, %s22
      %s26 = sphi 0, %s25
      %s42 = sphi 0, %s26
      %s46 = sphi 0, %s46
      %s48 = sphi 0, %s46
      %s49 = sphi 0, %s48
      %s63 = sphi 0, %s49
      %s67 = sphi 0, %s67
      %s69 = sphi 0, %s67
      %s70 = sphi 0, %s69
      %s84 = sphi 0, %s70
      %s90 = sphi 0, %s92
      %s93 = sphi 0, %s90
      %s94 = sphi 0, %s93
      %s110 = sphi 0, %s94
    $region4: #{classifier_forward.5} parent=1 // loop_header_branch
      %15 = sbr.rel (%p13) target = $region8
    $region5: #{classifier_forward.5} parent=1 // loop_body
      %s17 = ssub.s32 %s12, 1
      %s18 = ssub.s32 %s12, 2
      %s19 = sadd.s32 %s12, 1
      %s20 = ssub.s32 %s12, %s19
      %p21 = scmp.eq.s32.totalorder %s20, 0
      %s23 = sadd.s32 %s22, 1
      %s24 = scalar_select %p21, %s22, %s23
      %p27 = pneg %p21
      %p28 = scmp.eq.s32.totalorder %s12, 1
      %p29 = por %p27, %p28
      %p30 = scmp.ne.s32.totalorder %s22, %s25
      %p31 = scmp.eq.s32.totalorder %s12, 0
      %p32 = por %p30, %p31
      %p33 = scmp.ne.s32.totalorder %s22, %s25
      %p34 = scmp.eq.s32.totalorder %s17, 1
      %p35 = por %p33, %p34
      %p36 = scmp.ne.s32.totalorder %s25, %s26
      %p37 = scmp.eq.s32.totalorder %s17, 0
      %p38 = por %p36, %p37
      %p39 = scmp.ne.s32.totalorder %s25, %s26
      %p40 = scmp.eq.s32.totalorder %s18, 1
      %p41 = por %p39, %p40
      %p43 = scmp.ne.s32.totalorder %s26, %s42
      %p44 = scmp.eq.s32.totalorder %s18, 0
      %p45 = por %p43, %p44
      %s47 = sadd.s32 %s46, 1
      %p50 = scmp.eq.s32.totalorder %s12, 1
      %p51 = scmp.ne.s32.totalorder %s46, %s48
      %p52 = scmp.eq.s32.totalorder %s12, 0
      %p53 = por %p51, %p52
      %p54 = scmp.ne.s32.totalorder %s46, %s48
      %p55 = scmp.eq.s32.totalorder %s17, 1
      %p56 = por %p54, %p55
      %p57 = scmp.ne.s32.totalorder %s48, %s49
      %p58 = scmp.eq.s32.totalorder %s17, 0
      %p59 = por %p57, %p58
      %p60 = scmp.ne.s32.totalorder %s48, %s49
      %p61 = scmp.eq.s32.totalorder %s18, 1
      %p62 = por %p60, %p61
      %p64 = scmp.ne.s32.totalorder %s49, %s63
      %p65 = scmp.eq.s32.totalorder %s18, 0
      %p66 = por %p64, %p65
      %s68 = sadd.s32 %s67, 1
      %p71 = scmp.eq.s32.totalorder %s12, 1
      %p72 = scmp.ne.s32.totalorder %s67, %s69
      %p73 = scmp.eq.s32.totalorder %s12, 0
      %p74 = por %p72, %p73
      %p75 = scmp.ne.s32.totalorder %s67, %s69
      %p76 = scmp.eq.s32.totalorder %s17, 1
      %p77 = por %p75, %p76
      %p78 = scmp.ne.s32.totalorder %s69, %s70
      %p79 = scmp.eq.s32.totalorder %s17, 0
      %p80 = por %p78, %p79
      %p81 = scmp.ne.s32.totalorder %s69, %s70
      %p82 = scmp.eq.s32.totalorder %s18, 1
      %p83 = por %p81, %p82
      %p85 = scmp.ne.s32.totalorder %s70, %s84
      %p86 = scmp.eq.s32.totalorder %s18, 0
      %p87 = por %p85, %p86
      %s88 = ssub.s32 %s12, %s19
      %p89 = scmp.eq.s32.totalorder %s88, 0
      %s91 = sadd.s32 %s90, 1
      %s92 = scalar_select %p89, %s90, %s91
      %p95 = pneg %p89
      %p96 = scmp.eq.s32.totalorder %s12, 1
      %p97 = por %p95, %p96
      %p98 = scmp.ne.s32.totalorder %s90, %s93
      %p99 = scmp.eq.s32.totalorder %s12, 0
      %p100 = por %p98, %p99
      %p101 = scmp.ne.s32.totalorder %s90, %s93
      %p102 = scmp.eq.s32.totalorder %s17, 1
      %p103 = por %p101, %p102
      %p104 = scmp.ne.s32.totalorder %s93, %s94
      %p105 = scmp.eq.s32.totalorder %s17, 0
      %p106 = por %p104, %p105
      %p107 = scmp.ne.s32.totalorder %s93, %s94
      %p108 = scmp.eq.s32.totalorder %s18, 1
      %p109 = por %p107, %p108
      %p111 = scmp.ne.s32.totalorder %s94, %s110
      %p112 = scmp.eq.s32.totalorder %s18, 0
      %p113 = por %p111, %p112
      %p114 = scmp.le.s32.totalorder 1, %s12
      %p115 = scmp.lt.s32.totalorder %s12, 3
      %p116 = pnand %p114, %p115
      %p117 = pneg %p116
      // Predicated region
      $region9: #{classifier_forward.5} parent=5 // pred_check
        _
      $region10: #{classifier_forward.5} parent=5 // pred_check_branch
        %119 = sbr.rel (%p116) target = $region12
      $region11: #{classifier_forward.5} parent=5 // pred_region
        %s120 = ssub.s32 %s12, 1
        // Predicated region
        $region13: #{classifier_forward.5} parent=11 // pred_check
          %p121 = pneg %p59
        $region14: #{classifier_forward.5} parent=11 // pred_check_branch
          %123 = sbr.rel (%p121) target = $region16
        $region15: #{classifier_forward.5} parent=11 // pred_region
          _
        $region16: #{classifier_forward.5} parent=11 // pred_fallthru
          _
        // Predicated region
        $region17: #{classifier_forward.5} parent=11 // pred_check
          %p124 = pneg %p80
        $region18: #{classifier_forward.5} parent=11 // pred_check_branch
          %126 = sbr.rel (%p124) target = $region20
        $region19: #{classifier_forward.5} parent=11 // pred_region
          _
        $region20: #{classifier_forward.5} parent=11 // pred_fallthru
          _
      $region12: #{classifier_forward.5} parent=5 // pred_fallthru
        _
      %p127 = scmp.lt.s32.totalorder %s12, 2
      // Predicated region
      $region21: #{classifier_forward.5} parent=5 // pred_check
        %p128 = pneg %p127
      $region22: #{classifier_forward.5} parent=5 // pred_check_branch
        %130 = sbr.rel (%p128) target = $region24
      $region23: #{classifier_forward.5} parent=5 // pred_region
        // Predicated region
        $region25: #{classifier_forward.5} parent=23 // pred_check
          %p131 = pneg %p32
        $region26: #{classifier_forward.5} parent=23 // pred_check_branch
          %133 = sbr.rel (%p131) target = $region28
        $region27: #{classifier_forward.5} parent=23 // pred_region
          %p134 = scmp.lt.s32.totalorder %s12, 1
          %s135 = scalar_select %p134, %s12, 1
          %s136 = smul.addr %s135, 4
          %s137 = scalar_lea.vmem %s0, %s136
        $region28: #{classifier_forward.5} parent=23 // pred_fallthru
          _
      $region24: #{classifier_forward.5} parent=5 // pred_fallthru
        _
      %p138 = scmp.le.s32.totalorder 1, %s12
      %p139 = scmp.lt.s32.totalorder %s12, 3
      %p140 = pnand %p138, %p139
      %p141 = pneg %p140
      // Predicated region
      $region29: #{classifier_forward.5} parent=5 // pred_check
        _
      $region30: #{classifier_forward.5} parent=5 // pred_check_branch
        %143 = sbr.rel (%p140) target = $region32
      $region31: #{classifier_forward.5} parent=5 // pred_region
        %s144 = ssub.s32 %s12, 1
        %p145 = scmp.lt.s32.totalorder %s17, 1
        %s146 = scalar_select %p145, %s17, 1
        %s147 = smul.addr %s146, 4
        %s148 = scalar_lea.vmem %s0, %s147
        %p149 = pneg %p38
        %p150 = pneg %p35
        %p151 = pneg %p59
        %p152 = pneg %p56
        %p153 = pneg %p80
        %p154 = pneg %p77
        %p155 = pneg %p106
        %p156 = pneg %p103
        %s157 = sand.u32 %s93, 1
        %s158 = scalar_lea.sflag [#allocation3], %s157
        %s159 = sand.u32 %s93, 1
        %s160 = scalar_lea.vmem [#allocation2], %s159
        %p161 = scmp.lt.s32.totalorder %s17, 1
        %s162 = scalar_select %p161, %s17, 1
        %s163 = smul.addr %s162, 4
        %s164 = scalar_lea.vmem %s0, %s163
        %v166 = vld [vmem:[%s164] sm:$0xf]
        %v167 = vunpack.c.l.bf16 %v166
        %vm168 = vcmask 261120
        %v169 = vsel %vm168, %v167, 0.0
        %v170 = vrot.slane %v169, 4
        %v171 = vadd.f32 %v169, %v170
        %v172 = vrot.slane %v171, 2
        %v173 = vadd.f32 %v171, %v172
        %v174 = vrot.slane %v173, 1
        %v175 = vadd.f32 %v173, %v174
        %v176 = vmul.f32 %v175, 0.125
        %v177 = vpack.c.bf16 %v176, %v176
        %v178 = vld [vmem:[%s1] sm:$0xf]
        %v179 = vld [vmem:[%s1 + $0x4] sm:$0xf]
        %v180 = vld [vmem:[%s1 + $0x8] sm:$0xf]
        %v181 = vld [vmem:[%s1 + $0xc] sm:$0xf]
        %v182 = vld [vmem:[%s2] sm:$0x1]
        %v187 = vunpack.c.l.b16 %v178
        %v188 = vunpack.c.l.b16 %v179
        %v189 = vunpack.c.l.b16 %v180
        %v190 = vunpack.c.l.b16 %v181
        %v191 = vpack.c.b16 %v188, %v187
        %v192 = vpack.c.b16 %v190, %v189
        %v196 = vsel %vm168, %v177, 0
        %198 = vmatprep.subr.bf16.mxu0 0
        %199 = vmatpush1.bf16.msra.mxu0 0
        %200 = vmatprep.subr.bf16.mxu0 0
        %201 = vmatpush1.bf16.msra.mxu0 0
        %202 = vmatprep.subr.bf16.mxu0 0
        %203 = vmatpush1.bf16.msra.mxu0 0
        %204 = vmatprep.subr.bf16.mxu0 0
        %205 = vmatpush1.bf16.msra.mxu0 0
        %206 = vmatprep.subr.bf16.mxu0 0
        %207 = vmatpush1.bf16.msra.mxu0 0
        %208 = vmatprep.subr.bf16.mxu0 0
        %209 = vmatpush1.bf16.msra.mxu0 0
        %210 = vmatprep.subr.bf16.mxu0 0
        %211 = vmatpush1.bf16.msra.mxu0 %v192
        %212 = vmatprep.subr.bf16.mxu0 0
        %213 = vmatpush1.bf16.msra.mxu0 %v191
        %214 = vmatprep.subr.bf16.mxu0 0
        %215 = vmatpush2.bf16.msra.mxu0 0
        %216 = vmatprep.subr.bf16.mxu0 0
        %217 = vmatpush2.bf16.msra.mxu0 0
        %218 = vmatprep.subr.bf16.mxu0 0
        %219 = vmatpush2.bf16.msra.mxu0 0
        %220 = vmatprep.subr.bf16.mxu0 0
        %221 = vmatpush2.bf16.msra.mxu0 0
        %222 = vmatprep.subr.bf16.mxu0 0
        %223 = vmatpush2.bf16.msra.mxu0 0
        %224 = vmatprep.subr.bf16.mxu0 0
        %225 = vmatpush2.bf16.msra.mxu0 0
        %226 = vmatprep.subr.bf16.mxu0 0
        %227 = vmatpush2.bf16.msra.mxu0 0
        %228 = vmatprep.subr.bf16.mxu0 0
        %229 = vmatpush2.bf16.msra.mxu0 0
        %230 = vmatprep.mubr.bf16.mxu0 0
        %231 = vmatmul.mubr.bf16.gmra.mxu0 %v196
        %v232 = vpop.f32.mrf.mxu0
        %v233 = vadd.f32 %v182, %v232
        %v234 = vpop.f32.mrf.mxu0
        %v235 = vpop.f32.mrf.mxu0
        %v236 = vpop.f32.mrf.mxu0
        %237 = vdwg.mxu0
        %238 = vst [vmem:[%s160] sm:$0x1] %v233
        %s239 = sand.u32 %s93, 1
        %s240 = scalar_lea.sflag [#allocation3], %s239
        %s241 = sand.u32 %s93, 1
        %s242 = scalar_lea.vmem [#allocation2], %s241
        // Predicated region
        $region33: #{classifier_forward.5} parent=31 // pred_check
          %p243 = pneg %p103
        $region34: #{classifier_forward.5} parent=31 // pred_check_branch
          %245 = sbr.rel (%p243) target = $region36
        $region35: #{classifier_forward.5} parent=31 // pred_region
          %s247 = ssub.s32 16, 16
          %248 = vsyncadd %s240, %s247
          %s249 = smul.addr %s17, 16
          %s250 = scalar_lea.hbm %s3, %s249
          %s252 = sshll.u32 %s242, 4
          %s253 = int_to_ptr.vmem [resolvable:$true] %s252
          %255 = dma.vmem_to_hbm [thread:$0]  %s253, 16, %s250, %s240
        $region36: #{classifier_forward.5} parent=31 // pred_fallthru
          _
      $region32: #{classifier_forward.5} parent=5 // pred_fallthru
        _
      %p256 = scmp.le.s32.totalorder 2, %s12
      // Predicated region
      $region37: #{classifier_forward.5} parent=5 // pred_check
        %p257 = pneg %p256
      $region38: #{classifier_forward.5} parent=5 // pred_check_branch
        %259 = sbr.rel (%p257) target = $region40
      $region39: #{classifier_forward.5} parent=5 // pred_region
        %s260 = ssub.s32 %s12, 2
        // Predicated region
        $region41: #{classifier_forward.5} parent=39 // pred_check
          %p261 = pneg %p109
        $region42: #{classifier_forward.5} parent=39 // pred_check_branch
          %263 = sbr.rel (%p261) target = $region44
        $region43: #{classifier_forward.5} parent=39 // pred_region
          %s264 = sand.u32 %s94, 1
          %s265 = scalar_lea.sflag [#allocation3], %s264
          %s266 = sand.u32 %s94, 1
          %s267 = scalar_lea.vmem [#allocation2], %s266
          %268 = dma.done %s265, 16
        $region44: #{classifier_forward.5} parent=39 // pred_fallthru
          _
      $region40: #{classifier_forward.5} parent=5 // pred_fallthru
        _
    $region6: #{classifier_forward.5} parent=1 // loop_footer
      %s16 = sadd.s32 1, %s12
    $region7: #{classifier_forward.5} parent=1 // loop_footer_branch
      %11 = sbr.rel target = $region3
    $region8: #{classifier_forward.5} parent=1 // loop_exit
      _
    %269 = vsyncpa [#allocation3], 1
    %s270 = scalar_lea.sflag [#allocation3], 1
    %271 = vsyncpa %s270, 1

// kernel: classifier_forward.3
$region0: #{classifier_forward.3}
  #allocation0 [shape = 'u32[]', space=smem, size = 0x4, offset = 0x4, fixed_abs, tag = 'smem constant byte address 0x4 - core index']
  #allocation1 [shape = 'u32[144,128]{1,0:T(1,128)}', space=vmem, size = 0x12000, scoped, tag = 'internal scratch']
  %s0 = inlined_call_operand.vmem [shape: bf16[2,8,32], index: 0, kind: input, shape index: {}]
  %s1 = inlined_call_operand.vmem [shape: bf16[4,32,8], index: 1, kind: input, shape index: {}]
  %s2 = inlined_call_operand.vmem [shape: bf16[4,32,8], index: 2, kind: input, shape index: {}]
  %s3 = inlined_call_operand.vmem [shape: bf16[4,32,8], index: 3, kind: input, shape index: {}]
  %s4 = inlined_call_operand.vmem [shape: f32[4,1,8], index: 4, kind: input, shape index: {}]
  %s5 = inlined_call_operand.vmem [shape: f32[4,1,8], index: 5, kind: input, shape index: {}]
  %s6 = inlined_call_operand.vmem [shape: f32[4,1,8], index: 6, kind: input, shape index: {}]
  %s7 = inlined_call_operand.vmem [shape: bf16[32,32], index: 7, kind: input, shape index: {}]
  %s8 = inlined_call_operand.vmem [shape: f32[1,32], index: 8, kind: input, shape index: {}]
  %s9 = inlined_call_operand.vmem [shape: f32[1,32], index: 9, kind: input, shape index: {}]
  %s10 = inlined_call_operand.vmem [shape: f32[1,32], index: 10, kind: input, shape index: {}]
  %s11 = inlined_call_operand.vmem [shape: bf16[32,64], index: 11, kind: input, shape index: {}]
  %s12 = inlined_call_operand.vmem [shape: f32[1,64], index: 12, kind: input, shape index: {}]
  %s13 = inlined_call_operand.vmem [shape: bf16[64,32], index: 13, kind: input, shape index: {}]
  %s14 = inlined_call_operand.vmem [shape: f32[1,32], index: 14, kind: input, shape index: {}]
  %s15 = inlined_call_operand.vmem [shape: f32[1,32], index: 15, kind: input, shape index: {}]
  %s16 = inlined_call_operand.vmem [shape: f32[1,32], index: 16, kind: input, shape index: {}]
  %s17 = inlined_call_operand.vmem [shape: bf16[2,8,32], index: 17, kind: output, shape index: {}]
  %s18 = sld [smem:[#allocation0]]
  $region101: #{classifier_forward.3} parent=0
    _
  %s20 = ssub.s32 1, %s18
  %s21 = scalar_select 0, %s20, %s18
  loop: start=0, step=1, limit=4
  $region2: #{classifier_forward.3} parent=0 // loop_pre_header
    _
  $region3: #{classifier_forward.3} parent=0 // loop_header
    %s23 = sphi 0, %s27
    %p24 = scmp.ge.s32.totalorder %s23, 4
    %s33 = sphi 0, %s35
    %s36 = sphi 0, %s33
    %s37 = sphi 0, %s36
    %s53 = sphi 0, %s37
    %s57 = sphi 0, %s57
    %s59 = sphi 0, %s57
    %s60 = sphi 0, %s59
    %s74 = sphi 0, %s60
    %s78 = sphi 0, %s78
    %s80 = sphi 0, %s78
    %s81 = sphi 0, %s80
    %s95 = sphi 0, %s81
    %s99 = sphi 0, %s99
    %s101 = sphi 0, %s99
    %s102 = sphi 0, %s101
    %s116 = sphi 0, %s102
    %s120 = sphi 0, %s120
    %s122 = sphi 0, %s120
    %s123 = sphi 0, %s122
    %s137 = sphi 0, %s123
    %s141 = sphi 0, %s141
    %s143 = sphi 0, %s141
    %s144 = sphi 0, %s143
    %s158 = sphi 0, %s144
    %s162 = sphi 0, %s162
    %s164 = sphi 0, %s162
    %s165 = sphi 0, %s164
    %s179 = sphi 0, %s165
    %s183 = sphi 0, %s183
    %s185 = sphi 0, %s183
    %s186 = sphi 0, %s185
    %s200 = sphi 0, %s186
    %s204 = sphi 0, %s204
    %s206 = sphi 0, %s204
    %s207 = sphi 0, %s206
    %s221 = sphi 0, %s207
    %s225 = sphi 0, %s225
    %s227 = sphi 0, %s225
    %s228 = sphi 0, %s227
    %s242 = sphi 0, %s228
    %s246 = sphi 0, %s246
    %s248 = sphi 0, %s246
    %s249 = sphi 0, %s248
    %s263 = sphi 0, %s249
    %s267 = sphi 0, %s267
    %s269 = sphi 0, %s267
    %s270 = sphi 0, %s269
    %s284 = sphi 0, %s270
    %s288 = sphi 0, %s288
    %s290 = sphi 0, %s288
    %s291 = sphi 0, %s290
    %s305 = sphi 0, %s291
    %s309 = sphi 0, %s309
    %s311 = sphi 0, %s309
    %s312 = sphi 0, %s311
    %s326 = sphi 0, %s312
    %s330 = sphi 0, %s330
    %s332 = sphi 0, %s330
    %s333 = sphi 0, %s332
    %s347 = sphi 0, %s333
    %s351 = sphi 0, %s351
    %s353 = sphi 0, %s351
    %s354 = sphi 0, %s353
    %s368 = sphi 0, %s354
    %s372 = sphi 0, %s372
    %s374 = sphi 0, %s372
    %s375 = sphi 0, %s374
    %s389 = sphi 0, %s375
    %s395 = sphi 0, %s397
    %s398 = sphi 0, %s395
    %s399 = sphi 0, %s398
    %s415 = sphi 0, %s399
  $region4: #{classifier_forward.3} parent=0 // loop_header_branch
    %26 = sbr.rel (%p24) target = $region8
  $region5: #{classifier_forward.3} parent=0 // loop_body
    %s28 = ssub.s32 %s23, 1
    %s29 = ssub.s32 %s23, 2
    %s30 = sadd.s32 %s23, 1
    %s31 = ssub.s32 %s23, %s30
    %p32 = scmp.eq.s32.totalorder %s31, 0
    %s34 = sadd.s32 %s33, 1
    %s35 = scalar_select %p32, %s33, %s34
    %p38 = pneg %p32
    %p39 = scmp.eq.s32.totalorder %s23, 1
    %p40 = por %p38, %p39
    %p41 = scmp.ne.s32.totalorder %s33, %s36
    %p42 = scmp.eq.s32.totalorder %s23, 0
    %p43 = por %p41, %p42
    %p44 = scmp.ne.s32.totalorder %s33, %s36
    %p45 = scmp.eq.s32.totalorder %s28, 1
    %p46 = por %p44, %p45
    %p47 = scmp.ne.s32.totalorder %s36, %s37
    %p48 = scmp.eq.s32.totalorder %s28, 0
    %p49 = por %p47, %p48
    %p50 = scmp.ne.s32.totalorder %s36, %s37
    %p51 = scmp.eq.s32.totalorder %s29, 1
    %p52 = por %p50, %p51
    %p54 = scmp.ne.s32.totalorder %s37, %s53
    %p55 = scmp.eq.s32.totalorder %s29, 0
    %p56 = por %p54, %p55
    %s58 = sadd.s32 %s57, 1
    %p61 = scmp.eq.s32.totalorder %s23, 1
    %p62 = scmp.ne.s32.totalorder %s57, %s59
    %p63 = scmp.eq.s32.totalorder %s23, 0
    %p64 = por %p62, %p63
    %p65 = scmp.ne.s32.totalorder %s57, %s59
    %p66 = scmp.eq.s32.totalorder %s28, 1
    %p67 = por %p65, %p66
    %p68 = scmp.ne.s32.totalorder %s59, %s60
    %p69 = scmp.eq.s32.totalorder %s28, 0
    %p70 = por %p68, %p69
    %p71 = scmp.ne.s32.totalorder %s59, %s60
    %p72 = scmp.eq.s32.totalorder %s29, 1
    %p73 = por %p71, %p72
    %p75 = scmp.ne.s32.totalorder %s60, %s74
    %p76 = scmp.eq.s32.totalorder %s29, 0
    %p77 = por %p75, %p76
    %s79 = sadd.s32 %s78, 1
    %p82 = scmp.eq.s32.totalorder %s23, 1
    %p83 = scmp.ne.s32.totalorder %s78, %s80
    %p84 = scmp.eq.s32.totalorder %s23, 0
    %p85 = por %p83, %p84
    %p86 = scmp.ne.s32.totalorder %s78, %s80
    %p87 = scmp.eq.s32.totalorder %s28, 1
    %p88 = por %p86, %p87
    %p89 = scmp.ne.s32.totalorder %s80, %s81
    %p90 = scmp.eq.s32.totalorder %s28, 0
    %p91 = por %p89, %p90
    %p92 = scmp.ne.s32.totalorder %s80, %s81
    %p93 = scmp.eq.s32.totalorder %s29, 1
    %p94 = por %p92, %p93
    %p96 = scmp.ne.s32.totalorder %s81, %s95
    %p97 = scmp.eq.s32.totalorder %s29, 0
    %p98 = por %p96, %p97
    %s100 = sadd.s32 %s99, 1
    %p103 = scmp.eq.s32.totalorder %s23, 1
    %p104 = scmp.ne.s32.totalorder %s99, %s101
    %p105 = scmp.eq.s32.totalorder %s23, 0
    %p106 = por %p104, %p105
    %p107 = scmp.ne.s32.totalorder %s99, %s101
    %p108 = scmp.eq.s32.totalorder %s28, 1
    %p109 = por %p107, %p108
    %p110 = scmp.ne.s32.totalorder %s101, %s102
    %p111 = scmp.eq.s32.totalorder %s28, 0
    %p112 = por %p110, %p111
    %p113 = scmp.ne.s32.totalorder %s101, %s102
    %p114 = scmp.eq.s32.totalorder %s29, 1
    %p115 = por %p113, %p114
    %p117 = scmp.ne.s32.totalorder %s102, %s116
    %p118 = scmp.eq.s32.totalorder %s29, 0
    %p119 = por %p117, %p118
    %s121 = sadd.s32 %s120, 1
    %p124 = scmp.eq.s32.totalorder %s23, 1
    %p125 = scmp.ne.s32.totalorder %s120, %s122
    %p126 = scmp.eq.s32.totalorder %s23, 0
    %p127 = por %p125, %p126
    %p128 = scmp.ne.s32.totalorder %s120, %s122
    %p129 = scmp.eq.s32.totalorder %s28, 1
    %p130 = por %p128, %p129
    %p131 = scmp.ne.s32.totalorder %s122, %s123
    %p132 = scmp.eq.s32.totalorder %s28, 0
    %p133 = por %p131, %p132
    %p134 = scmp.ne.s32.totalorder %s122, %s123
    %p135 = scmp.eq.s32.totalorder %s29, 1
    %p136 = por %p134, %p135
    %p138 = scmp.ne.s32.totalorder %s123, %s137
    %p139 = scmp.eq.s32.totalorder %s29, 0
    %p140 = por %p138, %p139
    %s142 = sadd.s32 %s141, 1
    %p145 = scmp.eq.s32.totalorder %s23, 1
    %p146 = scmp.ne.s32.totalorder %s141, %s143
    %p147 = scmp.eq.s32.totalorder %s23, 0
    %p148 = por %p146, %p147
    %p149 = scmp.ne.s32.totalorder %s141, %s143
    %p150 = scmp.eq.s32.totalorder %s28, 1
    %p151 = por %p149, %p150
    %p152 = scmp.ne.s32.totalorder %s143, %s144
    %p153 = scmp.eq.s32.totalorder %s28, 0
    %p154 = por %p152, %p153
    %p155 = scmp.ne.s32.totalorder %s143, %s144
    %p156 = scmp.eq.s32.totalorder %s29, 1
    %p157 = por %p155, %p156
    %p159 = scmp.ne.s32.totalorder %s144, %s158
    %p160 = scmp.eq.s32.totalorder %s29, 0
    %p161 = por %p159, %p160
    %s163 = sadd.s32 %s162, 1
    %p166 = scmp.eq.s32.totalorder %s23, 1
    %p167 = scmp.ne.s32.totalorder %s162, %s164
    %p168 = scmp.eq.s32.totalorder %s23, 0
    %p169 = por %p167, %p168
    %p170 = scmp.ne.s32.totalorder %s162, %s164
    %p171 = scmp.eq.s32.totalorder %s28, 1
    %p172 = por %p170, %p171
    %p173 = scmp.ne.s32.totalorder %s164, %s165
    %p174 = scmp.eq.s32.totalorder %s28, 0
    %p175 = por %p173, %p174
    %p176 = scmp.ne.s32.totalorder %s164, %s165
    %p177 = scmp.eq.s32.totalorder %s29, 1
    %p178 = por %p176, %p177
    %p180 = scmp.ne.s32.totalorder %s165, %s179
    %p181 = scmp.eq.s32.totalorder %s29, 0
    %p182 = por %p180, %p181
    %s184 = sadd.s32 %s183, 1
    %p187 = scmp.eq.s32.totalorder %s23, 1
    %p188 = scmp.ne.s32.totalorder %s183, %s185
    %p189 = scmp.eq.s32.totalorder %s23, 0
    %p190 = por %p188, %p189
    %p191 = scmp.ne.s32.totalorder %s183, %s185
    %p192 = scmp.eq.s32.totalorder %s28, 1
    %p193 = por %p191, %p192
    %p194 = scmp.ne.s32.totalorder %s185, %s186
    %p195 = scmp.eq.s32.totalorder %s28, 0
    %p196 = por %p194, %p195
    %p197 = scmp.ne.s32.totalorder %s185, %s186
    %p198 = scmp.eq.s32.totalorder %s29, 1
    %p199 = por %p197, %p198
    %p201 = scmp.ne.s32.totalorder %s186, %s200
    %p202 = scmp.eq.s32.totalorder %s29, 0
    %p203 = por %p201, %p202
    %s205 = sadd.s32 %s204, 1
    %p208 = scmp.eq.s32.totalorder %s23, 1
    %p209 = scmp.ne.s32.totalorder %s204, %s206
    %p210 = scmp.eq.s32.totalorder %s23, 0
    %p211 = por %p209, %p210
    %p212 = scmp.ne.s32.totalorder %s204, %s206
    %p213 = scmp.eq.s32.totalorder %s28, 1
    %p214 = por %p212, %p213
    %p215 = scmp.ne.s32.totalorder %s206, %s207
    %p216 = scmp.eq.s32.totalorder %s28, 0
    %p217 = por %p215, %p216
    %p218 = scmp.ne.s32.totalorder %s206, %s207
    %p219 = scmp.eq.s32.totalorder %s29, 1
    %p220 = por %p218, %p219
    %p222 = scmp.ne.s32.totalorder %s207, %s221
    %p223 = scmp.eq.s32.totalorder %s29, 0
    %p224 = por %p222, %p223
    %s226 = sadd.s32 %s225, 1
    %p229 = scmp.eq.s32.totalorder %s23, 1
    %p230 = scmp.ne.s32.totalorder %s225, %s227
    %p231 = scmp.eq.s32.totalorder %s23, 0
    %p232 = por %p230, %p231
    %p233 = scmp.ne.s32.totalorder %s225, %s227
    %p234 = scmp.eq.s32.totalorder %s28, 1
    %p235 = por %p233, %p234
    %p236 = scmp.ne.s32.totalorder %s227, %s228
    %p237 = scmp.eq.s32.totalorder %s28, 0
    %p238 = por %p236, %p237
    %p239 = scmp.ne.s32.totalorder %s227, %s228
    %p240 = scmp.eq.s32.totalorder %s29, 1
    %p241 = por %p239, %p240
    %p243 = scmp.ne.s32.totalorder %s228, %s242
    %p244 = scmp.eq.s32.totalorder %s29, 0
    %p245 = por %p243, %p244
    %s247 = sadd.s32 %s246, 1
    %p250 = scmp.eq.s32.totalorder %s23, 1
    %p251 = scmp.ne.s32.totalorder %s246, %s248
    %p252 = scmp.eq.s32.totalorder %s23, 0
    %p253 = por %p251, %p252
    %p254 = scmp.ne.s32.totalorder %s246, %s248
    %p255 = scmp.eq.s32.totalorder %s28, 1
    %p256 = por %p254, %p255
    %p257 = scmp.ne.s32.totalorder %s248, %s249
    %p258 = scmp.eq.s32.totalorder %s28, 0
    %p259 = por %p257, %p258
    %p260 = scmp.ne.s32.totalorder %s248, %s249
    %p261 = scmp.eq.s32.totalorder %s29, 1
    %p262 = por %p260, %p261
    %p264 = scmp.ne.s32.totalorder %s249, %s263
    %p265 = scmp.eq.s32.totalorder %s29, 0
    %p266 = por %p264, %p265
    %s268 = sadd.s32 %s267, 1
    %p271 = scmp.eq.s32.totalorder %s23, 1
    %p272 = scmp.ne.s32.totalorder %s267, %s269
    %p273 = scmp.eq.s32.totalorder %s23, 0
    %p274 = por %p272, %p273
    %p275 = scmp.ne.s32.totalorder %s267, %s269
    %p276 = scmp.eq.s32.totalorder %s28, 1
    %p277 = por %p275, %p276
    %p278 = scmp.ne.s32.totalorder %s269, %s270
    %p279 = scmp.eq.s32.totalorder %s28, 0
    %p280 = por %p278, %p279
    %p281 = scmp.ne.s32.totalorder %s269, %s270
    %p282 = scmp.eq.s32.totalorder %s29, 1
    %p283 = por %p281, %p282
    %p285 = scmp.ne.s32.totalorder %s270, %s284
    %p286 = scmp.eq.s32.totalorder %s29, 0
    %p287 = por %p285, %p286
    %s289 = sadd.s32 %s288, 1
    %p292 = scmp.eq.s32.totalorder %s23, 1
    %p293 = scmp.ne.s32.totalorder %s288, %s290
    %p294 = scmp.eq.s32.totalorder %s23, 0
    %p295 = por %p293, %p294
    %p296 = scmp.ne.s32.totalorder %s288, %s290
    %p297 = scmp.eq.s32.totalorder %s28, 1
    %p298 = por %p296, %p297
    %p299 = scmp.ne.s32.totalorder %s290, %s291
    %p300 = scmp.eq.s32.totalorder %s28, 0
    %p301 = por %p299, %p300
    %p302 = scmp.ne.s32.totalorder %s290, %s291
    %p303 = scmp.eq.s32.totalorder %s29, 1
    %p304 = por %p302, %p303
    %p306 = scmp.ne.s32.totalorder %s291, %s305
    %p307 = scmp.eq.s32.totalorder %s29, 0
    %p308 = por %p306, %p307
    %s310 = sadd.s32 %s309, 1
    %p313 = scmp.eq.s32.totalorder %s23, 1
    %p314 = scmp.ne.s32.totalorder %s309, %s311
    %p315 = scmp.eq.s32.totalorder %s23, 0
    %p316 = por %p314, %p315
    %p317 = scmp.ne.s32.totalorder %s309, %s311
    %p318 = scmp.eq.s32.totalorder %s28, 1
    %p319 = por %p317, %p318
    %p320 = scmp.ne.s32.totalorder %s311, %s312
    %p321 = scmp.eq.s32.totalorder %s28, 0
    %p322 = por %p320, %p321
    %p323 = scmp.ne.s32.totalorder %s311, %s312
    %p324 = scmp.eq.s32.totalorder %s29, 1
    %p325 = por %p323, %p324
    %p327 = scmp.ne.s32.totalorder %s312, %s326
    %p328 = scmp.eq.s32.totalorder %s29, 0
    %p329 = por %p327, %p328
    %s331 = sadd.s32 %s330, 1
    %p334 = scmp.eq.s32.totalorder %s23, 1
    %p335 = scmp.ne.s32.totalorder %s330, %s332
    %p336 = scmp.eq.s32.totalorder %s23, 0
    %p337 = por %p335, %p336
    %p338 = scmp.ne.s32.totalorder %s330, %s332
    %p339 = scmp.eq.s32.totalorder %s28, 1
    %p340 = por %p338, %p339
    %p341 = scmp.ne.s32.totalorder %s332, %s333
    %p342 = scmp.eq.s32.totalorder %s28, 0
    %p343 = por %p341, %p342
    %p344 = scmp.ne.s32.totalorder %s332, %s333
    %p345 = scmp.eq.s32.totalorder %s29, 1
    %p346 = por %p344, %p345
    %p348 = scmp.ne.s32.totalorder %s333, %s347
    %p349 = scmp.eq.s32.totalorder %s29, 0
    %p350 = por %p348, %p349
    %s352 = sadd.s32 %s351, 1
    %p355 = scmp.eq.s32.totalorder %s23, 1
    %p356 = scmp.ne.s32.totalorder %s351, %s353
    %p357 = scmp.eq.s32.totalorder %s23, 0
    %p358 = por %p356, %p357
    %p359 = scmp.ne.s32.totalorder %s351, %s353
    %p360 = scmp.eq.s32.totalorder %s28, 1
    %p361 = por %p359, %p360
    %p362 = scmp.ne.s32.totalorder %s353, %s354
    %p363 = scmp.eq.s32.totalorder %s28, 0
    %p364 = por %p362, %p363
    %p365 = scmp.ne.s32.totalorder %s353, %s354
    %p366 = scmp.eq.s32.totalorder %s29, 1
    %p367 = por %p365, %p366
    %p369 = scmp.ne.s32.totalorder %s354, %s368
    %p370 = scmp.eq.s32.totalorder %s29, 0
    %p371 = por %p369, %p370
    %s373 = sadd.s32 %s372, 1
    %p376 = scmp.eq.s32.totalorder %s23, 1
    %p377 = scmp.ne.s32.totalorder %s372, %s374
    %p378 = scmp.eq.s32.totalorder %s23, 0
    %p379 = por %p377, %p378
    %p380 = scmp.ne.s32.totalorder %s372, %s374
    %p381 = scmp.eq.s32.totalorder %s28, 1
    %p382 = por %p380, %p381
    %p383 = scmp.ne.s32.totalorder %s374, %s375
    %p384 = scmp.eq.s32.totalorder %s28, 0
    %p385 = por %p383, %p384
    %p386 = scmp.ne.s32.totalorder %s374, %s375
    %p387 = scmp.eq.s32.totalorder %s29, 1
    %p388 = por %p386, %p387
    %p390 = scmp.ne.s32.totalorder %s375, %s389
    %p391 = scmp.eq.s32.totalorder %s29, 0
    %p392 = por %p390, %p391
    %s393 = ssub.s32 %s23, %s30
    %p394 = scmp.eq.s32.totalorder %s393, 0
    %s396 = sadd.s32 %s395, 1
    %s397 = scalar_select %p394, %s395, %s396
    %p400 = pneg %p394
    %p401 = scmp.eq.s32.totalorder %s23, 1
    %p402 = por %p400, %p401
    %p403 = scmp.ne.s32.totalorder %s395, %s398
    %p404 = scmp.eq.s32.totalorder %s23, 0
    %p405 = por %p403, %p404
    %p406 = scmp.ne.s32.totalorder %s395, %s398
    %p407 = scmp.eq.s32.totalorder %s28, 1
    %p408 = por %p406, %p407
    %p409 = scmp.ne.s32.totalorder %s398, %s399
    %p410 = scmp.eq.s32.totalorder %s28, 0
    %p411 = por %p409, %p410
    %p412 = scmp.ne.s32.totalorder %s398, %s399
    %p413 = scmp.eq.s32.totalorder %s29, 1
    %p414 = por %p412, %p413
    %p416 = scmp.ne.s32.totalorder %s399, %s415
    %p417 = scmp.eq.s32.totalorder %s29, 0
    %p418 = por %p416, %p417
    %p419 = scmp.le.s32.totalorder 1, %s23
    %p420 = scmp.lt.s32.totalorder %s23, 3
    %p421 = pnand %p419, %p420
    %p422 = pneg %p421
    // Predicated region
    $region9: #{classifier_forward.3} parent=5 // pred_check
      _
    $region10: #{classifier_forward.3} parent=5 // pred_check_branch
      %424 = sbr.rel (%p421) target = $region12
    $region11: #{classifier_forward.3} parent=5 // pred_region
      %s425 = ssub.s32 %s23, 1
      // Predicated region
      $region13: #{classifier_forward.3} parent=11 // pred_check
        %p426 = pneg %p70
      $region14: #{classifier_forward.3} parent=11 // pred_check_branch
        %428 = sbr.rel (%p426) target = $region16
      $region15: #{classifier_forward.3} parent=11 // pred_region
        _
      $region16: #{classifier_forward.3} parent=11 // pred_fallthru
        _
      // Predicated region
      $region17: #{classifier_forward.3} parent=11 // pred_check
        %p429 = pneg %p91
      $region18: #{classifier_forward.3} parent=11 // pred_check_branch
        %431 = sbr.rel (%p429) target = $region20
      $region19: #{classifier_forward.3} parent=11 // pred_region
        _
      $region20: #{classifier_forward.3} parent=11 // pred_fallthru
        _
      // Predicated region
      $region21: #{classifier_forward.3} parent=11 // pred_check
        %p432 = pneg %p112
      $region22: #{classifier_forward.3} parent=11 // pred_check_branch
        %434 = sbr.rel (%p432) target = $region24
      $region23: #{classifier_forward.3} parent=11 // pred_region
        _
      $region24: #{classifier_forward.3} parent=11 // pred_fallthru
        _
      // Predicated region
      $region25: #{classifier_forward.3} parent=11 // pred_check
        %p435 = pneg %p133
      $region26: #{classifier_forward.3} parent=11 // pred_check_branch
        %437 = sbr.rel (%p435) target = $region28
      $region27: #{classifier_forward.3} parent=11 // pred_region
        _
      $region28: #{classifier_forward.3} parent=11 // pred_fallthru
        _
      // Predicated region
      $region29: #{classifier_forward.3} parent=11 // pred_check
        %p438 = pneg %p154
      $region30: #{classifier_forward.3} parent=11 // pred_check_branch
        %440 = sbr.rel (%p438) target = $region32
      $region31: #{classifier_forward.3} parent=11 // pred_region
        _
      $region32: #{classifier_forward.3} parent=11 // pred_fallthru
        _
      // Predicated region
      $region33: #{classifier_forward.3} parent=11 // pred_check
        %p441 = pneg %p175
      $region34: #{classifier_forward.3} parent=11 // pred_check_branch
        %443 = sbr.rel (%p441) target = $region36
      $region35: #{classifier_forward.3} parent=11 // pred_region
        _
      $region36: #{classifier_forward.3} parent=11 // pred_fallthru
        _
      // Predicated region
      $region37: #{classifier_forward.3} parent=11 // pred_check
        %p444 = pneg %p196
      $region38: #{classifier_forward.3} parent=11 // pred_check_branch
        %446 = sbr.rel (%p444) target = $region40
      $region39: #{classifier_forward.3} parent=11 // pred_region
        _
      $region40: #{classifier_forward.3} parent=11 // pred_fallthru
        _
      // Predicated region
      $region41: #{classifier_forward.3} parent=11 // pred_check
        %p447 = pneg %p217
      $region42: #{classifier_forward.3} parent=11 // pred_check_branch
        %449 = sbr.rel (%p447) target = $region44
      $region43: #{classifier_forward.3} parent=11 // pred_region
        _
      $region44: #{classifier_forward.3} parent=11 // pred_fallthru
        _
      // Predicated region
      $region45: #{classifier_forward.3} parent=11 // pred_check
        %p450 = pneg %p238
      $region46: #{classifier_forward.3} parent=11 // pred_check_branch
        %452 = sbr.rel (%p450) target = $region48
      $region47: #{classifier_forward.3} parent=11 // pred_region
        _
      $region48: #{classifier_forward.3} parent=11 // pred_fallthru
        _
      // Predicated region
      $region49: #{classifier_forward.3} parent=11 // pred_check
        %p453 = pneg %p259
      $region50: #{classifier_forward.3} parent=11 // pred_check_branch
        %455 = sbr.rel (%p453) target = $region52
      $region51: #{classifier_forward.3} parent=11 // pred_region
        _
      $region52: #{classifier_forward.3} parent=11 // pred_fallthru
        _
      // Predicated region
      $region53: #{classifier_forward.3} parent=11 // pred_check
        %p456 = pneg %p280
      $region54: #{classifier_forward.3} parent=11 // pred_check_branch
        %458 = sbr.rel (%p456) target = $region56
      $region55: #{classifier_forward.3} parent=11 // pred_region
        _
      $region56: #{classifier_forward.3} parent=11 // pred_fallthru
        _
      // Predicated region
      $region57: #{classifier_forward.3} parent=11 // pred_check
        %p459 = pneg %p301
      $region58: #{classifier_forward.3} parent=11 // pred_check_branch
        %461 = sbr.rel (%p459) target = $region60
      $region59: #{classifier_forward.3} parent=11 // pred_region
        _
      $region60: #{classifier_forward.3} parent=11 // pred_fallthru
        _
      // Predicated region
      $region61: #{classifier_forward.3} parent=11 // pred_check
        %p462 = pneg %p322
      $region62: #{classifier_forward.3} parent=11 // pred_check_branch
        %464 = sbr.rel (%p462) target = $region64
      $region63: #{classifier_forward.3} parent=11 // pred_region
        _
      $region64: #{classifier_forward.3} parent=11 // pred_fallthru
        _
      // Predicated region
      $region65: #{classifier_forward.3} parent=11 // pred_check
        %p465 = pneg %p343
      $region66: #{classifier_forward.3} parent=11 // pred_check_branch
        %467 = sbr.rel (%p465) target = $region68
      $region67: #{classifier_forward.3} parent=11 // pred_region
        _
      $region68: #{classifier_forward.3} parent=11 // pred_fallthru
        _
      // Predicated region
      $region69: #{classifier_forward.3} parent=11 // pred_check
        %p468 = pneg %p364
      $region70: #{classifier_forward.3} parent=11 // pred_check_branch
        %470 = sbr.rel (%p468) target = $region72
      $region71: #{classifier_forward.3} parent=11 // pred_region
        _
      $region72: #{classifier_forward.3} parent=11 // pred_fallthru
        _
      // Predicated region
      $region73: #{classifier_forward.3} parent=11 // pred_check
        %p471 = pneg %p385
      $region74: #{classifier_forward.3} parent=11 // pred_check_branch
        %473 = sbr.rel (%p471) target = $region76
      $region75: #{classifier_forward.3} parent=11 // pred_region
        _
      $region76: #{classifier_forward.3} parent=11 // pred_fallthru
        _
    $region12: #{classifier_forward.3} parent=5 // pred_fallthru
      _
    %p474 = scmp.lt.s32.totalorder %s23, 2
    // Predicated region
    $region77: #{classifier_forward.3} parent=5 // pred_check
      %p475 = pneg %p474
    $region78: #{classifier_forward.3} parent=5 // pred_check_branch
      %477 = sbr.rel (%p475) target = $region80
    $region79: #{classifier_forward.3} parent=5 // pred_region
      // Predicated region
      $region81: #{classifier_forward.3} parent=79 // pred_check
        %p478 = pneg %p43
      $region82: #{classifier_forward.3} parent=79 // pred_check_branch
        %480 = sbr.rel (%p478) target = $region84
      $region83: #{classifier_forward.3} parent=79 // pred_region
        %p481 = scmp.lt.s32.totalorder %s23, 1
        %s482 = scalar_select %p481, %s23, 1
        %s483 = smul.addr %s482, 4
        %s484 = scalar_lea.vmem %s0, %s483
      $region84: #{classifier_forward.3} parent=79 // pred_fallthru
        _
    $region80: #{classifier_forward.3} parent=5 // pred_fallthru
      _
    %p485 = scmp.le.s32.totalorder 1, %s23
    %p486 = scmp.lt.s32.totalorder %s23, 3
    %p487 = pnand %p485, %p486
    %p488 = pneg %p487
    // Predicated region
    $region85: #{classifier_forward.3} parent=5 // pred_check
      _
    $region86: #{classifier_forward.3} parent=5 // pred_check_branch
      %490 = sbr.rel (%p487) target = $region88
    $region87: #{classifier_forward.3} parent=5 // pred_region
      %s491 = ssub.s32 %s23, 1
      %p492 = scmp.lt.s32.totalorder %s28, 1
      %s493 = scalar_select %p492, %s28, 1
      %s494 = smul.addr %s493, 4
      %s495 = scalar_lea.vmem %s0, %s494
      %p496 = pneg %p49
      %p497 = pneg %p46
      %p498 = pneg %p70
      %p499 = pneg %p67
      %p500 = pneg %p91
      %p501 = pneg %p88
      %p502 = pneg %p112
      %p503 = pneg %p109
      %p504 = pneg %p133
      %p505 = pneg %p130
      %p506 = pneg %p154
      %p507 = pneg %p151
      %p508 = pneg %p175
      %p509 = pneg %p172
      %p510 = pneg %p196
      %p511 = pneg %p193
      %p512 = pneg %p217
      %p513 = pneg %p214
      %p514 = pneg %p238
      %p515 = pneg %p235
      %p516 = pneg %p259
      %p517 = pneg %p256
      %p518 = pneg %p280
      %p519 = pneg %p277
      %p520 = pneg %p301
      %p521 = pneg %p298
      %p522 = pneg %p322
      %p523 = pneg %p319
      %p524 = pneg %p343
      %p525 = pneg %p340
      %p526 = pneg %p364
      %p527 = pneg %p361
      %p528 = pneg %p385
      %p529 = pneg %p382
      %p530 = pneg %p411
      %p531 = pneg %p408
      %p532 = scmp.lt.s32.totalorder %s28, 1
      %s533 = scalar_select %p532, %s28, 1
      %s534 = smul.addr %s533, 4
      %s535 = scalar_lea.vmem %s17, %s534
      %p536 = scmp.lt.s32.totalorder %s28, 1
      %s537 = scalar_select %p536, %s28, 1
      %s538 = smul.addr %s537, 4
      %s539 = scalar_lea.vmem %s0, %s538
      %p540 = scmp.lt.s32.totalorder %s28, 1
      %s541 = scalar_select %p540, %s28, 1
      %s542 = smul.addr %s541, 4
      %s543 = scalar_lea.vmem %s17, %s542
      %v545 = vld [vmem:[%s539] sm:$0xf]
      %v546 = vunpack.c.l.bf16 %v545
      %v547 = vld [vmem:[%s1] sm:$0xf]
      %v548 = vld [vmem:[%s1 + $0x4] sm:$0xf]
      %v549 = vld [vmem:[%s1 + $0x8] sm:$0xf]
      %v550 = vld [vmem:[%s1 + $0xc] sm:$0xf]
      %v551 = vld [vmem:[%s4] sm:$0x1]
      %v553 = vlaneseq
      %v554 = vshrl.u32 %v553, 7
      %v555 = vsub.s32 0, %v554
      %v556 = vrot.slane %v551, %v555
      %v562 = vunpack.c.l.b16 %v547
      %v563 = vunpack.c.l.b16 %v548
      %v564 = vunpack.c.l.b16 %v549
      %v565 = vunpack.c.l.b16 %v550
      %v566 = vpack.c.b16 %v563, %v562
      %v567 = vpack.c.b16 %v565, %v564
      %vm570 = vcmask 261120
      %v572 = vsel %vm570, %v545, 0
      %574 = vmatprep.subr.bf16.mxu0 0
      %575 = vmatpush1.bf16.msra.mxu0 0
      %576 = vmatprep.subr.bf16.mxu0 0
      %577 = vmatpush1.bf16.msra.mxu0 0
      %578 = vmatprep.subr.bf16.mxu0 0
      %579 = vmatpush1.bf16.msra.mxu0 0
      %580 = vmatprep.subr.bf16.mxu0 0
      %581 = vmatpush1.bf16.msra.mxu0 0
      %582 = vmatprep.subr.bf16.mxu0 0
      %583 = vmatpush1.bf16.msra.mxu0 0
      %584 = vmatprep.subr.bf16.mxu0 0
      %585 = vmatpush1.bf16.msra.mxu0 0
      %586 = vmatprep.subr.bf16.mxu0 0
      %587 = vmatpush1.bf16.msra.mxu0 %v567
      %588 = vmatprep.subr.bf16.mxu0 0
      %589 = vmatpush1.bf16.msra.mxu0 %v566
      %590 = vmatprep.subr.bf16.mxu0 0
      %591 = vmatpush2.bf16.msra.mxu0 0
      %592 = vmatprep.subr.bf16.mxu0 0
      %593 = vmatpush2.bf16.msra.mxu0 0
      %594 = vmatprep.subr.bf16.mxu0 0
      %595 = vmatpush2.bf16.msra.mxu0 0
      %596 = vmatprep.subr.bf16.mxu0 0
      %597 = vmatpush2.bf16.msra.mxu0 0
      %598 = vmatprep.subr.bf16.mxu0 0
      %599 = vmatpush2.bf16.msra.mxu0 0
      %600 = vmatprep.subr.bf16.mxu0 0
      %601 = vmatpush2.bf16.msra.mxu0 0
      %602 = vmatprep.subr.bf16.mxu0 0
      %603 = vmatpush2.bf16.msra.mxu0 0
      %604 = vmatprep.subr.bf16.mxu0 0
      %605 = vmatpush2.bf16.msra.mxu0 0
      %606 = vmatprep.mubr.bf16.mxu0 0
      %607 = vmatmul.mubr.bf16.gmra.mxu0 %v572
      %v608 = vpop.f32.mrf.mxu0
      %v609 = vadd.f32 %v556, %v608
      %v610 = vpop.f32.mrf.mxu0
      %v611 = vpop.f32.mrf.mxu0
      %v612 = vpop.f32.mrf.mxu0
      %613 = vdwg.mxu0
      %v614 = vld [vmem:[%s2] sm:$0xf]
      %v615 = vld [vmem:[%s2 + $0x4] sm:$0xf]
      %v616 = vld [vmem:[%s2 + $0x8] sm:$0xf]
      %v617 = vld [vmem:[%s2 + $0xc] sm:$0xf]
      %v618 = vld [vmem:[%s5] sm:$0x1]
      %v620 = vlaneseq
      %v621 = vshrl.u32 %v620, 7
      %v622 = vsub.s32 0, %v621
      %v623 = vrot.slane %v618, %v622
      %v629 = vunpack.c.l.b16 %v614
      %v630 = vunpack.c.l.b16 %v615
      %v631 = vunpack.c.l.b16 %v616
      %v632 = vunpack.c.l.b16 %v617
      %v633 = vpack.c.b16 %v630, %v629
      %v634 = vpack.c.b16 %v632, %v631
      %637 = vmatprep.subr.bf16.mxu0 0
      %638 = vmatpush1.bf16.msra.mxu0 0
      %639 = vmatprep.subr.bf16.mxu0 0
      %640 = vmatpush1.bf16.msra.mxu0 0
      %641 = vmatprep.subr.bf16.mxu0 0
      %642 = vmatpush1.bf16.msra.mxu0 0
      %643 = vmatprep.subr.bf16.mxu0 0
      %644 = vmatpush1.bf16.msra.mxu0 0
      %645 = vmatprep.subr.bf16.mxu0 0
      %646 = vmatpush1.bf16.msra.mxu0 0
      %647 = vmatprep.subr.bf16.mxu0 0
      %648 = vmatpush1.bf16.msra.mxu0 0
      %649 = vmatprep.subr.bf16.mxu0 0
      %650 = vmatpush1.bf16.msra.mxu0 %v634
      %651 = vmatprep.subr.bf16.mxu0 0
      %652 = vmatpush1.bf16.msra.mxu0 %v633
      %653 = vmatprep.subr.bf16.mxu0 0
      %654 = vmatpush2.bf16.msra.mxu0 0
      %655 = vmatprep.subr.bf16.mxu0 0
      %656 = vmatpush2.bf16.msra.mxu0 0
      %657 = vmatprep.subr.bf16.mxu0 0
      %658 = vmatpush2.bf16.msra.mxu0 0
      %659 = vmatprep.subr.bf16.mxu0 0
      %660 = vmatpush2.bf16.msra.mxu0 0
      %661 = vmatprep.subr.bf16.mxu0 0
      %662 = vmatpush2.bf16.msra.mxu0 0
      %663 = vmatprep.subr.bf16.mxu0 0
      %664 = vmatpush2.bf16.msra.mxu0 0
      %665 = vmatprep.subr.bf16.mxu0 0
      %666 = vmatpush2.bf16.msra.mxu0 0
      %667 = vmatprep.subr.bf16.mxu0 0
      %668 = vmatpush2.bf16.msra.mxu0 0
      %669 = vmatprep.mubr.bf16.mxu0 0
      %670 = vmatmul.mubr.bf16.gmra.mxu0 %v572
      %v671 = vpop.f32.mrf.mxu0
      %v672 = vadd.f32 %v623, %v671
      %v673 = vpop.f32.mrf.mxu0
      %v674 = vpop.f32.mrf.mxu0
      %v675 = vpop.f32.mrf.mxu0
      %676 = vdwg.mxu0
      %v677 = vld [vmem:[%s3] sm:$0xf]
      %v678 = vld [vmem:[%s3 + $0x4] sm:$0xf]
      %v679 = vld [vmem:[%s3 + $0x8] sm:$0xf]
      %v680 = vld [vmem:[%s3 + $0xc] sm:$0xf]
      %v681 = vld [vmem:[%s6] sm:$0x1]
      %v683 = vlaneseq
      %v684 = vshrl.u32 %v683, 7
      %v685 = vsub.s32 0, %v684
      %v686 = vrot.slane %v681, %v685
      %v692 = vunpack.c.l.b16 %v677
      %v693 = vunpack.c.l.b16 %v678
      %v694 = vunpack.c.l.b16 %v679
      %v695 = vunpack.c.l.b16 %v680
      %v696 = vpack.c.b16 %v693, %v692
      %v697 = vpack.c.b16 %v695, %v694
      %700 = vmatprep.subr.bf16.mxu0 0
      %701 = vmatpush1.bf16.msra.mxu0 0
      %702 = vmatprep.subr.bf16.mxu0 0
      %703 = vmatpush1.bf16.msra.mxu0 0
      %704 = vmatprep.subr.bf16.mxu0 0
      %705 = vmatpush1.bf16.msra.mxu0 0
      %706 = vmatprep.subr.bf16.mxu0 0
      %707 = vmatpush1.bf16.msra.mxu0 0
      %708 = vmatprep.subr.bf16.mxu0 0
      %709 = vmatpush1.bf16.msra.mxu0 0
      %710 = vmatprep.subr.bf16.mxu0 0
      %711 = vmatpush1.bf16.msra.mxu0 0
      %712 = vmatprep.subr.bf16.mxu0 0
      %713 = vmatpush1.bf16.msra.mxu0 %v697
      %714 = vmatprep.subr.bf16.mxu0 0
      %715 = vmatpush1.bf16.msra.mxu0 %v696
      %716 = vmatprep.subr.bf16.mxu0 0
      %717 = vmatpush2.bf16.msra.mxu0 0
      %718 = vmatprep.subr.bf16.mxu0 0
      %719 = vmatpush2.bf16.msra.mxu0 0
      %720 = vmatprep.subr.bf16.mxu0 0
      %721 = vmatpush2.bf16.msra.mxu0 0
      %722 = vmatprep.subr.bf16.mxu0 0
      %723 = vmatpush2.bf16.msra.mxu0 0
      %724 = vmatprep.subr.bf16.mxu0 0
      %725 = vmatpush2.bf16.msra.mxu0 0
      %726 = vmatprep.subr.bf16.mxu0 0
      %727 = vmatpush2.bf16.msra.mxu0 0
      %728 = vmatprep.subr.bf16.mxu0 0
      %729 = vmatpush2.bf16.msra.mxu0 0
      %730 = vmatprep.subr.bf16.mxu0 0
      %731 = vmatpush2.bf16.msra.mxu0 0
      %732 = vmatprep.mubr.bf16.mxu0 0
      %733 = vmatmul.mubr.bf16.gmra.mxu0 %v572
      %v734 = vpop.f32.mrf.mxu0
      %v735 = vadd.f32 %v686, %v734
      %v736 = vpop.f32.mrf.mxu0
      %v737 = vpop.f32.mrf.mxu0
      %v738 = vpop.f32.mrf.mxu0
      %739 = vdwg.mxu0
      %v740 = vpack.c.bf16 %v609, %v609
      %v741 = vpack.c.bf16 %v672, %v672
      %v742 = vpack.c.bf16 %v735, %v735
      %vm743 = vcmask 64512
      %v745 = vsel %vm743, %v740, 0
      %v748 = vsel %vm743, %v741, 0
      %750 = vmatprep.subr.bf16.mxu0 0
      %751 = vmatpush1.bf16.xpose.msra.mxu0 0
      %752 = vmatprep.subr.bf16.mxu0 0
      %753 = vmatpush1.bf16.xpose.msra.mxu0 0
      %754 = vmatprep.subr.bf16.mxu0 0
      %755 = vmatpush1.bf16.xpose.msra.mxu0 0
      %756 = vmatprep.subr.bf16.mxu0 0
      %757 = vmatpush1.bf16.xpose.msra.mxu0 0
      %758 = vmatprep.subr.bf16.mxu0 0
      %759 = vmatpush1.bf16.xpose.msra.mxu0 0
      %760 = vmatprep.subr.bf16.mxu0 0
      %761 = vmatpush1.bf16.xpose.msra.mxu0 0
      %762 = vmatprep.subr.bf16.mxu0 0
      %763 = vmatpush1.bf16.xpose.msra.mxu0 0
      %764 = vmatprep.subr.bf16.mxu0 0
      %765 = vmatpush1.bf16.xpose.msra.mxu0 %v748
      %766 = vmatprep.subr.bf16.mxu0 0
      %767 = vmatpush2.bf16.xpose.msra.mxu0 0
      %768 = vmatprep.subr.bf16.mxu0 0
      %769 = vmatpush2.bf16.xpose.msra.mxu0 0
      %770 = vmatprep.subr.bf16.mxu0 0
      %771 = vmatpush2.bf16.xpose.msra.mxu0 0
      %772 = vmatprep.subr.bf16.mxu0 0
      %773 = vmatpush2.bf16.xpose.msra.mxu0 0
      %774 = vmatprep.subr.bf16.mxu0 0
      %775 = vmatpush2.bf16.xpose.msra.mxu0 0
      %776 = vmatprep.subr.bf16.mxu0 0
      %777 = vmatpush2.bf16.xpose.msra.mxu0 0
      %778 = vmatprep.subr.bf16.mxu0 0
      %779 = vmatpush2.bf16.xpose.msra.mxu0 0
      %780 = vmatprep.subr.bf16.mxu0 0
      %781 = vmatpush2.bf16.xpose.msra.mxu0 0
      %782 = vmatprep.mubr.bf16.mxu0 0
      %783 = vmatmul.mubr.bf16.gmra.mxu0 %v745
      %v784 = vpop.f32.mrf.mxu0
      %v785 = vadd.f32 0.0, %v784
      %v786 = vpop.f32.mrf.mxu0
      %v787 = vpop.f32.mrf.mxu0
      %v788 = vpop.f32.mrf.mxu0
      %789 = vdwg.mxu0
      %v790 = vsel %vm743, %v785, -inf
      %791 = vmax.xlane.f32.xlu0 %v790
      %v792 = vpop.xlane.xlu0 %791
      %v793 = vsub.f32 %v785, %v792
      %v794 = vmul.f32 %v793, 1.442695
      %v795 = vpow.pop %v794
      %v796 = vsel %vm743, %v795, 0.0
      %797 = vadd.xlane.f32.xlu0 %v796
      %v798 = vpop.xlane.xlu0 %797
      %v799 = vpack.c.bf16 %v795, %v795
      %v801 = vsel %vm743, %v799, 0
      %vm803 = vcmask 1043456
      %v805 = vsel %vm803, %v742, 0
      %807 = vmatprep.subr.bf16.mxu0 0
      %808 = vmatpush1.bf16.msra.mxu0 0
      %809 = vmatprep.subr.bf16.mxu0 0
      %810 = vmatpush1.bf16.msra.mxu0 0
      %811 = vmatprep.subr.bf16.mxu0 0
      %812 = vmatpush1.bf16.msra.mxu0 0
      %813 = vmatprep.subr.bf16.mxu0 0
      %814 = vmatpush1.bf16.msra.mxu0 0
      %815 = vmatprep.subr.bf16.mxu0 0
      %816 = vmatpush1.bf16.msra.mxu0 0
      %817 = vmatprep.subr.bf16.mxu0 0
      %818 = vmatpush1.bf16.msra.mxu0 0
      %819 = vmatprep.subr.bf16.mxu0 0
      %820 = vmatpush1.bf16.msra.mxu0 0
      %821 = vmatprep.subr.bf16.mxu0 0
      %822 = vmatpush1.bf16.msra.mxu0 %v805
      %823 = vmatprep.subr.bf16.mxu0 0
      %824 = vmatpush2.bf16.msra.mxu0 0
      %825 = vmatprep.subr.bf16.mxu0 0
      %826 = vmatpush2.bf16.msra.mxu0 0
      %827 = vmatprep.subr.bf16.mxu0 0
      %828 = vmatpush2.bf16.msra.mxu0 0
      %829 = vmatprep.subr.bf16.mxu0 0
      %830 = vmatpush2.bf16.msra.mxu0 0
      %831 = vmatprep.subr.bf16.mxu0 0
      %832 = vmatpush2.bf16.msra.mxu0 0
      %833 = vmatprep.subr.bf16.mxu0 0
      %834 = vmatpush2.bf16.msra.mxu0 0
      %835 = vmatprep.subr.bf16.mxu0 0
      %836 = vmatpush2.bf16.msra.mxu0 0
      %837 = vmatprep.subr.bf16.mxu0 0
      %838 = vmatpush2.bf16.msra.mxu0 0
      %839 = vmatprep.mubr.bf16.mxu0 0
      %840 = vmatmul.mubr.bf16.gmra.mxu0 %v801
      %v841 = vpop.f32.mrf.mxu0
      %v842 = vadd.f32 0.0, %v841
      %v843 = vpop.f32.mrf.mxu0
      %v844 = vpop.f32.mrf.mxu0
      %v845 = vpop.f32.mrf.mxu0
      %846 = vdwg.mxu0
      %v847 = vrcp.pop %v798
      %v848 = vmul.f32 %v842, %v847
      %v849 = vpack.c.bf16 %v848, %v848
      %s850 = scalar_lea.vmem %s1, 16
      %v851 = vld [vmem:[%s850] sm:$0xf]
      %v852 = vld [vmem:[%s850 + $0x4] sm:$0xf]
      %v853 = vld [vmem:[%s850 + $0x8] sm:$0xf]
      %v854 = vld [vmem:[%s850 + $0xc] sm:$0xf]
      %s855 = scalar_lea.vmem %s4, 1
      %v856 = vld [vmem:[%s855] sm:$0x1]
      %v858 = vlaneseq
      %v859 = vshrl.u32 %v858, 7
      %v860 = vsub.s32 0, %v859
      %v861 = vrot.slane %v856, %v860
      %v867 = vunpack.c.l.b16 %v851
      %v868 = vunpack.c.l.b16 %v852
      %v869 = vunpack.c.l.b16 %v853
      %v870 = vunpack.c.l.b16 %v854
      %v871 = vpack.c.b16 %v868, %v867
      %v872 = vpack.c.b16 %v870, %v869
      %875 = vmatprep.subr.bf16.mxu0 0
      %876 = vmatpush1.bf16.msra.mxu0 0
      %877 = vmatprep.subr.bf16.mxu0 0
      %878 = vmatpush1.bf16.msra.mxu0 0
      %879 = vmatprep.subr.bf16.mxu0 0
      %880 = vmatpush1.bf16.msra.mxu0 0
      %881 = vmatprep.subr.bf16.mxu0 0
      %882 = vmatpush1.bf16.msra.mxu0 0
      %883 = vmatprep.subr.bf16.mxu0 0
      %884 = vmatpush1.bf16.msra.mxu0 0
      %885 = vmatprep.subr.bf16.mxu0 0
      %886 = vmatpush1.bf16.msra.mxu0 0
      %887 = vmatprep.subr.bf16.mxu0 0
      %888 = vmatpush1.bf16.msra.mxu0 %v872
      %889 = vmatprep.subr.bf16.mxu0 0
      %890 = vmatpush1.bf16.msra.mxu0 %v871
      %891 = vmatprep.subr.bf16.mxu0 0
      %892 = vmatpush2.bf16.msra.mxu0 0
      %893 = vmatprep.subr.bf16.mxu0 0
      %894 = vmatpush2.bf16.msra.mxu0 0
      %895 = vmatprep.subr.bf16.mxu0 0
      %896 = vmatpush2.bf16.msra.mxu0 0
      %897 = vmatprep.subr.bf16.mxu0 0
      %898 = vmatpush2.bf16.msra.mxu0 0
      %899 = vmatprep.subr.bf16.mxu0 0
      %900 = vmatpush2.bf16.msra.mxu0 0
      %901 = vmatprep.subr.bf16.mxu0 0
      %902 = vmatpush2.bf16.msra.mxu0 0
      %903 = vmatprep.subr.bf16.mxu0 0
      %904 = vmatpush2.bf16.msra.mxu0 0
      %905 = vmatprep.subr.bf16.mxu0 0
      %906 = vmatpush2.bf16.msra.mxu0 0
      %907 = vmatprep.mubr.bf16.mxu0 0
      %908 = vmatmul.mubr.bf16.gmra.mxu0 %v572
      %v909 = vpop.f32.mrf.mxu0
      %v910 = vadd.f32 %v861, %v909
      %v911 = vpop.f32.mrf.mxu0
      %v912 = vpop.f32.mrf.mxu0
      %v913 = vpop.f32.mrf.mxu0
      %914 = vdwg.mxu0
      %s915 = scalar_lea.vmem %s2, 16
      %v916 = vld [vmem:[%s915] sm:$0xf]
      %v917 = vld [vmem:[%s915 + $0x4] sm:$0xf]
      %v918 = vld [vmem:[%s915 + $0x8] sm:$0xf]
      %v919 = vld [vmem:[%s915 + $0xc] sm:$0xf]
      %s920 = scalar_lea.vmem %s5, 1
      %v921 = vld [vmem:[%s920] sm:$0x1]
      %v923 = vlaneseq
      %v924 = vshrl.u32 %v923, 7
      %v925 = vsub.s32 0, %v924
      %v926 = vrot.slane %v921, %v925
      %v932 = vunpack.c.l.b16 %v916
      %v933 = vunpack.c.l.b16 %v917
      %v934 = vunpack.c.l.b16 %v918
      %v935 = vunpack.c.l.b16 %v919
      %v936 = vpack.c.b16 %v933, %v932
      %v937 = vpack.c.b16 %v935, %v934
      %940 = vmatprep.subr.bf16.mxu0 0
      %941 = vmatpush1.bf16.msra.mxu0 0
      %942 = vmatprep.subr.bf16.mxu0 0
      %943 = vmatpush1.bf16.msra.mxu0 0
      %944 = vmatprep.subr.bf16.mxu0 0
      %945 = vmatpush1.bf16.msra.mxu0 0
      %946 = vmatprep.subr.bf16.mxu0 0
      %947 = vmatpush1.bf16.msra.mxu0 0
      %948 = vmatprep.subr.bf16.mxu0 0
      %949 = vmatpush1.bf16.msra.mxu0 0
      %950 = vmatprep.subr.bf16.mxu0 0
      %951 = vmatpush1.bf16.msra.mxu0 0
      %952 = vmatprep.subr.bf16.mxu0 0
      %953 = vmatpush1.bf16.msra.mxu0 %v937
      %954 = vmatprep.subr.bf16.mxu0 0
      %955 = vmatpush1.bf16.msra.mxu0 %v936
      %956 = vmatprep.subr.bf16.mxu0 0
      %957 = vmatpush2.bf16.msra.mxu0 0
      %958 = vmatprep.subr.bf16.mxu0 0
      %959 = vmatpush2.bf16.msra.mxu0 0
      %960 = vmatprep.subr.bf16.mxu0 0
      %961 = vmatpush2.bf16.msra.mxu0 0
      %962 = vmatprep.subr.bf16.mxu0 0
      %963 = vmatpush2.bf16.msra.mxu0 0
      %964 = vmatprep.subr.bf16.mxu0 0
      %965 = vmatpush2.bf16.msra.mxu0 0
      %966 = vmatprep.subr.bf16.mxu0 0
      %967 = vmatpush2.bf16.msra.mxu0 0
      %968 = vmatprep.subr.bf16.mxu0 0
      %969 = vmatpush2.bf16.msra.mxu0 0
      %970 = vmatprep.subr.bf16.mxu0 0
      %971 = vmatpush2.bf16.msra.mxu0 0
      %972 = vmatprep.mubr.bf16.mxu0 0
      %973 = vmatmul.mubr.bf16.gmra.mxu0 %v572
      %v974 = vpop.f32.mrf.mxu0
      %v975 = vadd.f32 %v926, %v974
      %v976 = vpop.f32.mrf.mxu0
      %v977 = vpop.f32.mrf.mxu0
      %v978 = vpop.f32.mrf.mxu0
      %979 = vdwg.mxu0
      %s980 = scalar_lea.vmem %s3, 16
      %v981 = vld [vmem:[%s980] sm:$0xf]
      %v982 = vld [vmem:[%s980 + $0x4] sm:$0xf]
      %v983 = vld [vmem:[%s980 + $0x8] sm:$0xf]
      %v984 = vld [vmem:[%s980 + $0xc] sm:$0xf]
      %s985 = scalar_lea.vmem %s6, 1
      %v986 = vld [vmem:[%s985] sm:$0x1]
      %v988 = vlaneseq
      %v989 = vshrl.u32 %v988, 7
      %v990 = vsub.s32 0, %v989
      %v991 = vrot.slane %v986, %v990
      %v997 = vunpack.c.l.b16 %v981
      %v998 = vunpack.c.l.b16 %v982
      %v999 = vunpack.c.l.b16 %v983
      %v1000 = vunpack.c.l.b16 %v984
      %v1001 = vpack.c.b16 %v998, %v997
      %v1002 = vpack.c.b16 %v1000, %v999
      %1005 = vmatprep.subr.bf16.mxu0 0
      %1006 = vmatpush1.bf16.msra.mxu0 0
      %1007 = vmatprep.subr.bf16.mxu0 0
      %1008 = vmatpush1.bf16.msra.mxu0 0
      %1009 = vmatprep.subr.bf16.mxu0 0
      %1010 = vmatpush1.bf16.msra.mxu0 0
      %1011 = vmatprep.subr.bf16.mxu0 0
      %1012 = vmatpush1.bf16.msra.mxu0 0
      %1013 = vmatprep.subr.bf16.mxu0 0
      %1014 = vmatpush1.bf16.msra.mxu0 0
      %1015 = vmatprep.subr.bf16.mxu0 0
      %1016 = vmatpush1.bf16.msra.mxu0 0
      %1017 = vmatprep.subr.bf16.mxu0 0
      %1018 = vmatpush1.bf16.msra.mxu0 %v1002
      %1019 = vmatprep.subr.bf16.mxu0 0
      %1020 = vmatpush1.bf16.msra.mxu0 %v1001
      %1021 = vmatprep.subr.bf16.mxu0 0
      %1022 = vmatpush2.bf16.msra.mxu0 0
      %1023 = vmatprep.subr.bf16.mxu0 0
      %1024 = vmatpush2.bf16.msra.mxu0 0
      %1025 = vmatprep.subr.bf16.mxu0 0
      %1026 = vmatpush2.bf16.msra.mxu0 0
      %1027 = vmatprep.subr.bf16.mxu0 0
      %1028 = vmatpush2.bf16.msra.mxu0 0
      %1029 = vmatprep.subr.bf16.mxu0 0
      %1030 = vmatpush2.bf16.msra.mxu0 0
      %1031 = vmatprep.subr.bf16.mxu0 0
      %1032 = vmatpush2.bf16.msra.mxu0 0
      %1033 = vmatprep.subr.bf16.mxu0 0
      %1034 = vmatpush2.bf16.msra.mxu0 0
      %1035 = vmatprep.subr.bf16.mxu0 0
      %1036 = vmatpush2.bf16.msra.mxu0 0
      %1037 = vmatprep.mubr.bf16.mxu0 0
      %1038 = vmatmul.mubr.bf16.gmra.mxu0 %v572
      %v1039 = vpop.f32.mrf.mxu0
      %v1040 = vadd.f32 %v991, %v1039
      %v1041 = vpop.f32.mrf.mxu0
      %v1042 = vpop.f32.mrf.mxu0
      %v1043 = vpop.f32.mrf.mxu0
      %1044 = vdwg.mxu0
      %v1045 = vpack.c.bf16 %v910, %v910
      %v1046 = vpack.c.bf16 %v975, %v975
      %v1047 = vpack.c.bf16 %v1040, %v1040
      %v1049 = vsel %vm743, %v1045, 0
      %v1052 = vsel %vm743, %v1046, 0
      %1054 = vmatprep.subr.bf16.mxu0 0
      %1055 = vmatpush1.bf16.xpose.msra.mxu0 0
      %1056 = vmatprep.subr.bf16.mxu0 0
      %1057 = vmatpush1.bf16.xpose.msra.mxu0 0
      %1058 = vmatprep.subr.bf16.mxu0 0
      %1059 = vmatpush1.bf16.xpose.msra.mxu0 0
      %1060 = vmatprep.subr.bf16.mxu0 0
      %1061 = vmatpush1.bf16.xpose.msra.mxu0 0
      %1062 = vmatprep.subr.bf16.mxu0 0
      %1063 = vmatpush1.bf16.xpose.msra.mxu0 0
      %1064 = vmatprep.subr.bf16.mxu0 0
      %1065 = vmatpush1.bf16.xpose.msra.mxu0 0
      %1066 = vmatprep.subr.bf16.mxu0 0
      %1067 = vmatpush1.bf16.xpose.msra.mxu0 0
      %1068 = vmatprep.subr.bf16.mxu0 0
      %1069 = vmatpush1.bf16.xpose.msra.mxu0 %v1052
      %1070 = vmatprep.subr.bf16.mxu0 0
      %1071 = vmatpush2.bf16.xpose.msra.mxu0 0
      %1072 = vmatprep.subr.bf16.mxu0 0
      %1073 = vmatpush2.bf16.xpose.msra.mxu0 0
      %1074 = vmatprep.subr.bf16.mxu0 0
      %1075 = vmatpush2.bf16.xpose.msra.mxu0 0
      %1076 = vmatprep.subr.bf16.mxu0 0
      %1077 = vmatpush2.bf16.xpose.msra.mxu0 0
      %1078 = vmatprep.subr.bf16.mxu0 0
      %1079 = vmatpush2.bf16.xpose.msra.mxu0 0
      %1080 = vmatprep.subr.bf16.mxu0 0
      %1081 = vmatpush2.bf16.xpose.msra.mxu0 0
      %1082 = vmatprep.subr.bf16.mxu0 0
      %1083 = vmatpush2.bf16.xpose.msra.mxu0 0
      %1084 = vmatprep.subr.bf16.mxu0 0
      %1085 = vmatpush2.bf16.xpose.msra.mxu0 0
      %1086 = vmatprep.mubr.bf16.mxu0 0
      %1087 = vmatmul.mubr.bf16.gmra.mxu0 %v1049
      %v1088 = vpop.f32.mrf.mxu0
      %v1089 = vadd.f32 0.0, %v1088
      %v1090 = vpop.f32.mrf.mxu0
      %v1091 = vpop.f32.mrf.mxu0
      %v1092 = vpop.f32.mrf.mxu0
      %1093 = vdwg.mxu0
      %v1094 = vsel %vm743, %v1089, -inf
      %1095 = vmax.xlane.f32.xlu0 %v1094
      %v1096 = vpop.xlane.xlu0 %1095
      %v1097 = vsub.f32 %v1089, %v1096
      %v1098 = vmul.f32 %v1097, 1.442695
      %v1099 = vpow.pop %v1098
      %v1100 = vsel %vm743, %v1099, 0.0
      %1101 = vadd.xlane.f32.xlu0 %v1100
      %v1102 = vpop.xlane.xlu0 %1101
      %v1103 = vpack.c.bf16 %v1099, %v1099
      %v1105 = vsel %vm743, %v1103, 0
      %v1108 = vsel %vm803, %v1047, 0
      %1110 = vmatprep.subr.bf16.mxu0 0
      %1111 = vmatpush1.bf16.msra.mxu0 0
      %1112 = vmatprep.subr.bf16.mxu0 0
      %1113 = vmatpush1.bf16.msra.mxu0 0
      %1114 = vmatprep.subr.bf16.mxu0 0
      %1115 = vmatpush1.bf16.msra.mxu0 0
      %1116 = vmatprep.subr.bf16.mxu0 0
      %1117 = vmatpush1.bf16.msra.mxu0 0
      %1118 = vmatprep.subr.bf16.mxu0 0
      %1119 = vmatpush1.bf16.msra.mxu0 0
      %1120 = vmatprep.subr.bf16.mxu0 0
      %1121 = vmatpush1.bf16.msra.mxu0 0
      %1122 = vmatprep.subr.bf16.mxu0 0
      %1123 = vmatpush1.bf16.msra.mxu0 0
      %1124 = vmatprep.subr.bf16.mxu0 0
      %1125 = vmatpush1.bf16.msra.mxu0 %v1108
      %1126 = vmatprep.subr.bf16.mxu0 0
      %1127 = vmatpush2.bf16.msra.mxu0 0
      %1128 = vmatprep.subr.bf16.mxu0 0
      %1129 = vmatpush2.bf16.msra.mxu0 0
      %1130 = vmatprep.subr.bf16.mxu0 0
      %1131 = vmatpush2.bf16.msra.mxu0 0
      %1132 = vmatprep.subr.bf16.mxu0 0
      %1133 = vmatpush2.bf16.msra.mxu0 0
      %1134 = vmatprep.subr.bf16.mxu0 0
      %1135 = vmatpush2.bf16.msra.mxu0 0
      %1136 = vmatprep.subr.bf16.mxu0 0
      %1137 = vmatpush2.bf16.msra.mxu0 0
      %1138 = vmatprep.subr.bf16.mxu0 0
      %1139 = vmatpush2.bf16.msra.mxu0 0
      %1140 = vmatprep.subr.bf16.mxu0 0
      %1141 = vmatpush2.bf16.msra.mxu0 0
      %1142 = vmatprep.mubr.bf16.mxu0 0
      %1143 = vmatmul.mubr.bf16.gmra.mxu0 %v1105
      %v1144 = vpop.f32.mrf.mxu0
      %v1145 = vadd.f32 0.0, %v1144
      %v1146 = vpop.f32.mrf.mxu0
      %v1147 = vpop.f32.mrf.mxu0
      %v1148 = vpop.f32.mrf.mxu0
      %1149 = vdwg.mxu0
      %v1150 = vrcp.pop %v1102
      %v1151 = vmul.f32 %v1145, %v1150
      %v1152 = vpack.c.bf16 %v1151, %v1151
      %s1153 = scalar_lea.vmem %s1, 32
      %v1154 = vld [vmem:[%s1153] sm:$0xf]
      %v1155 = vld [vmem:[%s1153 + $0x4] sm:$0xf]
      %v1156 = vld [vmem:[%s1153 + $0x8] sm:$0xf]
      %v1157 = vld [vmem:[%s1153 + $0xc] sm:$0xf]
      %s1158 = scalar_lea.vmem %s4, 2
      %v1159 = vld [vmem:[%s1158] sm:$0x1]
      %v1161 = vlaneseq
      %v1162 = vshrl.u32 %v1161, 7
      %v1163 = vsub.s32 0, %v1162
      %v1164 = vrot.slane %v1159, %v1163
      %v1170 = vunpack.c.l.b16 %v1154
      %v1171 = vunpack.c.l.b16 %v1155
      %v1172 = vunpack.c.l.b16 %v1156
      %v1173 = vunpack.c.l.b16 %v1157
      %v1174 = vpack.c.b16 %v1171, %v1170
      %v1175 = vpack.c.b16 %v1173, %v1172
      %1178 = vmatprep.subr.bf16.mxu0 0
      %1179 = vmatpush1.bf16.msra.mxu0 0
      %1180 = vmatprep.subr.bf16.mxu0 0
      %1181 = vmatpush1.bf16.msra.mxu0 0
      %1182 = vmatprep.subr.bf16.mxu0 0
      %1183 = vmatpush1.bf16.msra.mxu0 0
      %1184 = vmatprep.subr.bf16.mxu0 0
      %1185 = vmatpush1.bf16.msra.mxu0 0
      %1186 = vmatprep.subr.bf16.mxu0 0
      %1187 = vmatpush1.bf16.msra.mxu0 0
      %1188 = vmatprep.subr.bf16.mxu0 0
      %1189 = vmatpush1.bf16.msra.mxu0 0
      %1190 = vmatprep.subr.bf16.mxu0 0
      %1191 = vmatpush1.bf16.msra.mxu0 %v1175
      %1192 = vmatprep.subr.bf16.mxu0 0
      %1193 = vmatpush1.bf16.msra.mxu0 %v1174
      %1194 = vmatprep.subr.bf16.mxu0 0
      %1195 = vmatpush2.bf16.msra.mxu0 0
      %1196 = vmatprep.subr.bf16.mxu0 0
      %1197 = vmatpush2.bf16.msra.mxu0 0
      %1198 = vmatprep.subr.bf16.mxu0 0
      %1199 = vmatpush2.bf16.msra.mxu0 0
      %1200 = vmatprep.subr.bf16.mxu0 0
      %1201 = vmatpush2.bf16.msra.mxu0 0
      %1202 = vmatprep.subr.bf16.mxu0 0
      %1203 = vmatpush2.bf16.msra.mxu0 0
      %1204 = vmatprep.subr.bf16.mxu0 0
      %1205 = vmatpush2.bf16.msra.mxu0 0
      %1206 = vmatprep.subr.bf16.mxu0 0
      %1207 = vmatpush2.bf16.msra.mxu0 0
      %1208 = vmatprep.subr.bf16.mxu0 0
      %1209 = vmatpush2.bf16.msra.mxu0 0
      %1210 = vmatprep.mubr.bf16.mxu0 0
      %1211 = vmatmul.mubr.bf16.gmra.mxu0 %v572
      %v1212 = vpop.f32.mrf.mxu0
      %v1213 = vadd.f32 %v1164, %v1212
      %v1214 = vpop.f32.mrf.mxu0
      %v1215 = vpop.f32.mrf.mxu0
      %v1216 = vpop.f32.mrf.mxu0
      %1217 = vdwg.mxu0
      %s1218 = scalar_lea.vmem %s2, 32
      %v1219 = vld [vmem:[%s1218] sm:$0xf]
      %v1220 = vld [vmem:[%s1218 + $0x4] sm:$0xf]
      %v1221 = vld [vmem:[%s1218 + $0x8] sm:$0xf]
      %v1222 = vld [vmem:[%s1218 + $0xc] sm:$0xf]
      %s1223 = scalar_lea.vmem %s5, 2
      %v1224 = vld [vmem:[%s1223] sm:$0x1]
      %v1226 = vlaneseq
      %v1227 = vshrl.u32 %v1226, 7
      %v1228 = vsub.s32 0, %v1227
      %v1229 = vrot.slane %v1224, %v1228
      %v1235 = vunpack.c.l.b16 %v1219
      %v1236 = vunpack.c.l.b16 %v1220
      %v1237 = vunpack.c.l.b16 %v1221
      %v1238 = vunpack.c.l.b16 %v1222
      %v1239 = vpack.c.b16 %v1236, %v1235
      %v1240 = vpack.c.b16 %v1238, %v1237
      %1243 = vmatprep.subr.bf16.mxu0 0
      %1244 = vmatpush1.bf16.msra.mxu0 0
      %1245 = vmatprep.subr.bf16.mxu0 0
      %1246 = vmatpush1.bf16.msra.mxu0 0
      %1247 = vmatprep.subr.bf16.mxu0 0
      %1248 = vmatpush1.bf16.msra.mxu0 0
      %1249 = vmatprep.subr.bf16.mxu0 0
      %1250 = vmatpush1.bf16.msra.mxu0 0
      %1251 = vmatprep.subr.bf16.mxu0 0
      %1252 = vmatpush1.bf16.msra.mxu0 0
      %1253 = vmatprep.subr.bf16.mxu0 0
      %1254 = vmatpush1.bf16.msra.mxu0 0
      %1255 = vmatprep.subr.bf16.mxu0 0
      %1256 = vmatpush1.bf16.msra.mxu0 %v1240
      %1257 = vmatprep.subr.bf16.mxu0 0
      %1258 = vmatpush1.bf16.msra.mxu0 %v1239
      %1259 = vmatprep.subr.bf16.mxu0 0
      %1260 = vmatpush2.bf16.msra.mxu0 0
      %1261 = vmatprep.subr.bf16.mxu0 0
      %1262 = vmatpush2.bf16.msra.mxu0 0
      %1263 = vmatprep.subr.bf16.mxu0 0
      %1264 = vmatpush2.bf16.msra.mxu0 0
      %1265 = vmatprep.subr.bf16.mxu0 0
      %1266 = vmatpush2.bf16.msra.mxu0 0
      %1267 = vmatprep.subr.bf16.mxu0 0
      %1268 = vmatpush2.bf16.msra.mxu0 0
      %1269 = vmatprep.subr.bf16.mxu0 0
      %1270 = vmatpush2.bf16.msra.mxu0 0
      %1271 = vmatprep.subr.bf16.mxu0 0
      %1272 = vmatpush2.bf16.msra.mxu0 0
      %1273 = vmatprep.subr.bf16.mxu0 0
      %1274 = vmatpush2.bf16.msra.mxu0 0
      %1275 = vmatprep.mubr.bf16.mxu0 0
      %1276 = vmatmul.mubr.bf16.gmra.mxu0 %v572
      %v1277 = vpop.f32.mrf.mxu0
      %v1278 = vadd.f32 %v1229, %v1277
      %v1279 = vpop.f32.mrf.mxu0
      %v1280 = vpop.f32.mrf.mxu0
      %v1281 = vpop.f32.mrf.mxu0
      %1282 = vdwg.mxu0
      %s1283 = scalar_lea.vmem %s3, 32
      %v1284 = vld [vmem:[%s1283] sm:$0xf]
      %v1285 = vld [vmem:[%s1283 + $0x4] sm:$0xf]
      %v1286 = vld [vmem:[%s1283 + $0x8] sm:$0xf]
      %v1287 = vld [vmem:[%s1283 + $0xc] sm:$0xf]
      %s1288 = scalar_lea.vmem %s6, 2
      %v1289 = vld [vmem:[%s1288] sm:$0x1]
      %v1291 = vlaneseq
      %v1292 = vshrl.u32 %v1291, 7
      %v1293 = vsub.s32 0, %v1292
      %v1294 = vrot.slane %v1289, %v1293
      %v1300 = vunpack.c.l.b16 %v1284
      %v1301 = vunpack.c.l.b16 %v1285
      %v1302 = vunpack.c.l.b16 %v1286
      %v1303 = vunpack.c.l.b16 %v1287
      %v1304 = vpack.c.b16 %v1301, %v1300
      %v1305 = vpack.c.b16 %v1303, %v1302
      %1308 = vmatprep.subr.bf16.mxu0 0
      %1309 = vmatpush1.bf16.msra.mxu0 0
      %1310 = vmatprep.subr.bf16.mxu0 0
      %1311 = vmatpush1.bf16.msra.mxu0 0
      %1312 = vmatprep.subr.bf16.mxu0 0
      %1313 = vmatpush1.bf16.msra.mxu0 0
      %1314 = vmatprep.subr.bf16.mxu0 0
      %1315 = vmatpush1.bf16.msra.mxu0 0
      %1316 = vmatprep.subr.bf16.mxu0 0
      %1317 = vmatpush1.bf16.msra.mxu0 0
      %1318 = vmatprep.subr.bf16.mxu0 0
      %1319 = vmatpush1.bf16.msra.mxu0 0
      %1320 = vmatprep.subr.bf16.mxu0 0
      %1321 = vmatpush1.bf16.msra.mxu0 %v1305
      %1322 = vmatprep.subr.bf16.mxu0 0
      %1323 = vmatpush1.bf16.msra.mxu0 %v1304
      %1324 = vmatprep.subr.bf16.mxu0 0
      %1325 = vmatpush2.bf16.msra.mxu0 0
      %1326 = vmatprep.subr.bf16.mxu0 0
      %1327 = vmatpush2.bf16.msra.mxu0 0
      %1328 = vmatprep.subr.bf16.mxu0 0
      %1329 = vmatpush2.bf16.msra.mxu0 0
      %1330 = vmatprep.subr.bf16.mxu0 0
      %1331 = vmatpush2.bf16.msra.mxu0 0
      %1332 = vmatprep.subr.bf16.mxu0 0
      %1333 = vmatpush2.bf16.msra.mxu0 0
      %1334 = vmatprep.subr.bf16.mxu0 0
      %1335 = vmatpush2.bf16.msra.mxu0 0
      %1336 = vmatprep.subr.bf16.mxu0 0
      %1337 = vmatpush2.bf16.msra.mxu0 0
      %1338 = vmatprep.subr.bf16.mxu0 0
      %1339 = vmatpush2.bf16.msra.mxu0 0
      %1340 = vmatprep.mubr.bf16.mxu0 0
      %1341 = vmatmul.mubr.bf16.gmra.mxu0 %v572
      %v1342 = vpop.f32.mrf.mxu0
      %v1343 = vadd.f32 %v1294, %v1342
      %v1344 = vpop.f32.mrf.mxu0
      %v1345 = vpop.f32.mrf.mxu0
      %v1346 = vpop.f32.mrf.mxu0
      %1347 = vdwg.mxu0
      %v1348 = vpack.c.bf16 %v1213, %v1213
      %v1349 = vpack.c.bf16 %v1278, %v1278
      %v1350 = vpack.c.bf16 %v1343, %v1343
      %v1352 = vsel %vm743, %v1348, 0
      %v1355 = vsel %vm743, %v1349, 0
      %1357 = vmatprep.subr.bf16.mxu0 0
      %1358 = vmatpush1.bf16.xpose.msra.mxu0 0
      %1359 = vmatprep.subr.bf16.mxu0 0
      %1360 = vmatpush1.bf16.xpose.msra.mxu0 0
      %1361 = vmatprep.subr.bf16.mxu0 0
      %1362 = vmatpush1.bf16.xpose.msra.mxu0 0
      %1363 = vmatprep.subr.bf16.mxu0 0
      %1364 = vmatpush1.bf16.xpose.msra.mxu0 0
      %1365 = vmatprep.subr.bf16.mxu0 0
      %1366 = vmatpush1.bf16.xpose.msra.mxu0 0
      %1367 = vmatprep.subr.bf16.mxu0 0
      %1368 = vmatpush1.bf16.xpose.msra.mxu0 0
      %1369 = vmatprep.subr.bf16.mxu0 0
      %1370 = vmatpush1.bf16.xpose.msra.mxu0 0
      %1371 = vmatprep.subr.bf16.mxu0 0
      %1372 = vmatpush1.bf16.xpose.msra.mxu0 %v1355
      %1373 = vmatprep.subr.bf16.mxu0 0
      %1374 = vmatpush2.bf16.xpose.msra.mxu0 0
      %1375 = vmatprep.subr.bf16.mxu0 0
      %1376 = vmatpush2.bf16.xpose.msra.mxu0 0
      %1377 = vmatprep.subr.bf16.mxu0 0
      %1378 = vmatpush2.bf16.xpose.msra.mxu0 0
      %1379 = vmatprep.subr.bf16.mxu0 0
      %1380 = vmatpush2.bf16.xpose.msra.mxu0 0
      %1381 = vmatprep.subr.bf16.mxu0 0
      %1382 = vmatpush2.bf16.xpose.msra.mxu0 0
      %1383 = vmatprep.subr.bf16.mxu0 0
      %1384 = vmatpush2.bf16.xpose.msra.mxu0 0
      %1385 = vmatprep.subr.bf16.mxu0 0
      %1386 = vmatpush2.bf16.xpose.msra.mxu0 0
      %1387 = vmatprep.subr.bf16.mxu0 0
      %1388 = vmatpush2.bf16.xpose.msra.mxu0 0
      %1389 = vmatprep.mubr.bf16.mxu0 0
      %1390 = vmatmul.mubr.bf16.gmra.mxu0 %v1352
      %v1391 = vpop.f32.mrf.mxu0
      %v1392 = vadd.f32 0.0, %v1391
      %v1393 = vpop.f32.mrf.mxu0
      %v1394 = vpop.f32.mrf.mxu0
      %v1395 = vpop.f32.mrf.mxu0
      %1396 = vdwg.mxu0
      %v1397 = vsel %vm743, %v1392, -inf
      %1398 = vmax.xlane.f32.xlu0 %v1397
      %v1399 = vpop.xlane.xlu0 %1398
      %v1400 = vsub.f32 %v1392, %v1399
      %v1401 = vmul.f32 %v1400, 1.442695
      %v1402 = vpow.pop %v1401
      %v1403 = vsel %vm743, %v1402, 0.0
      %1404 = vadd.xlane.f32.xlu0 %v1403
      %v1405 = vpop.xlane.xlu0 %1404
      %v1406 = vpack.c.bf16 %v1402, %v1402
      %v1408 = vsel %vm743, %v1406, 0
      %v1411 = vsel %vm803, %v1350, 0
      %1413 = vmatprep.subr.bf16.mxu0 0
      %1414 = vmatpush1.bf16.msra.mxu0 0
      %1415 = vmatprep.subr.bf16.mxu0 0
      %1416 = vmatpush1.bf16.msra.mxu0 0
      %1417 = vmatprep.subr.bf16.mxu0 0
      %1418 = vmatpush1.bf16.msra.mxu0 0
      %1419 = vmatprep.subr.bf16.mxu0 0
      %1420 = vmatpush1.bf16.msra.mxu0 0
      %1421 = vmatprep.subr.bf16.mxu0 0
      %1422 = vmatpush1.bf16.msra.mxu0 0
      %1423 = vmatprep.subr.bf16.mxu0 0
      %1424 = vmatpush1.bf16.msra.mxu0 0
      %1425 = vmatprep.subr.bf16.mxu0 0
      %1426 = vmatpush1.bf16.msra.mxu0 0
      %1427 = vmatprep.subr.bf16.mxu0 0
      %1428 = vmatpush1.bf16.msra.mxu0 %v1411
      %1429 = vmatprep.subr.bf16.mxu0 0
      %1430 = vmatpush2.bf16.msra.mxu0 0
      %1431 = vmatprep.subr.bf16.mxu0 0
      %1432 = vmatpush2.bf16.msra.mxu0 0
      %1433 = vmatprep.subr.bf16.mxu0 0
      %1434 = vmatpush2.bf16.msra.mxu0 0
      %1435 = vmatprep.subr.bf16.mxu0 0
      %1436 = vmatpush2.bf16.msra.mxu0 0
      %1437 = vmatprep.subr.bf16.mxu0 0
      %1438 = vmatpush2.bf16.msra.mxu0 0
      %1439 = vmatprep.subr.bf16.mxu0 0
      %1440 = vmatpush2.bf16.msra.mxu0 0
      %1441 = vmatprep.subr.bf16.mxu0 0
      %1442 = vmatpush2.bf16.msra.mxu0 0
      %1443 = vmatprep.subr.bf16.mxu0 0
      %1444 = vmatpush2.bf16.msra.mxu0 0
      %1445 = vmatprep.mubr.bf16.mxu0 0
      %1446 = vmatmul.mubr.bf16.gmra.mxu0 %v1408
      %v1447 = vpop.f32.mrf.mxu0
      %v1448 = vadd.f32 0.0, %v1447
      %v1449 = vpop.f32.mrf.mxu0
      %v1450 = vpop.f32.mrf.mxu0
      %v1451 = vpop.f32.mrf.mxu0
      %1452 = vdwg.mxu0
      %v1453 = vrcp.pop %v1405
      %v1454 = vmul.f32 %v1448, %v1453
      %v1455 = vpack.c.bf16 %v1454, %v1454
      %s1456 = scalar_lea.vmem %s1, 48
      %v1457 = vld [vmem:[%s1456] sm:$0xf]
      %v1458 = vld [vmem:[%s1456 + $0x4] sm:$0xf]
      %v1459 = vld [vmem:[%s1456 + $0x8] sm:$0xf]
      %v1460 = vld [vmem:[%s1456 + $0xc] sm:$0xf]
      %s1461 = scalar_lea.vmem %s4, 3
      %v1462 = vld [vmem:[%s1461] sm:$0x1]
      %v1464 = vlaneseq
      %v1465 = vshrl.u32 %v1464, 7
      %v1466 = vsub.s32 0, %v1465
      %v1467 = vrot.slane %v1462, %v1466
      %v1473 = vunpack.c.l.b16 %v1457
      %v1474 = vunpack.c.l.b16 %v1458
      %v1475 = vunpack.c.l.b16 %v1459
      %v1476 = vunpack.c.l.b16 %v1460
      %v1477 = vpack.c.b16 %v1474, %v1473
      %v1478 = vpack.c.b16 %v1476, %v1475
      %1481 = vmatprep.subr.bf16.mxu0 0
      %1482 = vmatpush1.bf16.msra.mxu0 0
      %1483 = vmatprep.subr.bf16.mxu0 0
      %1484 = vmatpush1.bf16.msra.mxu0 0
      %1485 = vmatprep.subr.bf16.mxu0 0
      %1486 = vmatpush1.bf16.msra.mxu0 0
      %1487 = vmatprep.subr.bf16.mxu0 0
      %1488 = vmatpush1.bf16.msra.mxu0 0
      %1489 = vmatprep.subr.bf16.mxu0 0
      %1490 = vmatpush1.bf16.msra.mxu0 0
      %1491 = vmatprep.subr.bf16.mxu0 0
      %1492 = vmatpush1.bf16.msra.mxu0 0
      %1493 = vmatprep.subr.bf16.mxu0 0
      %1494 = vmatpush1.bf16.msra.mxu0 %v1478
      %1495 = vmatprep.subr.bf16.mxu0 0
      %1496 = vmatpush1.bf16.msra.mxu0 %v1477
      %1497 = vmatprep.subr.bf16.mxu0 0
      %1498 = vmatpush2.bf16.msra.mxu0 0
      %1499 = vmatprep.subr.bf16.mxu0 0
      %1500 = vmatpush2.bf16.msra.mxu0 0
      %1501 = vmatprep.subr.bf16.mxu0 0
      %1502 = vmatpush2.bf16.msra.mxu0 0
      %1503 = vmatprep.subr.bf16.mxu0 0
      %1504 = vmatpush2.bf16.msra.mxu0 0
      %1505 = vmatprep.subr.bf16.mxu0 0
      %1506 = vmatpush2.bf16.msra.mxu0 0
      %1507 = vmatprep.subr.bf16.mxu0 0
      %1508 = vmatpush2.bf16.msra.mxu0 0
      %1509 = vmatprep.subr.bf16.mxu0 0
      %1510 = vmatpush2.bf16.msra.mxu0 0
      %1511 = vmatprep.subr.bf16.mxu0 0
      %1512 = vmatpush2.bf16.msra.mxu0 0
      %1513 = vmatprep.mubr.bf16.mxu0 0
      %1514 = vmatmul.mubr.bf16.gmra.mxu0 %v572
      %v1515 = vpop.f32.mrf.mxu0
      %v1516 = vadd.f32 %v1467, %v1515
      %v1517 = vpop.f32.mrf.mxu0
      %v1518 = vpop.f32.mrf.mxu0
      %v1519 = vpop.f32.mrf.mxu0
      %1520 = vdwg.mxu0
      %s1521 = scalar_lea.vmem %s2, 48
      %v1522 = vld [vmem:[%s1521] sm:$0xf]
      %v1523 = vld [vmem:[%s1521 + $0x4] sm:$0xf]
      %v1524 = vld [vmem:[%s1521 + $0x8] sm:$0xf]
      %v1525 = vld [vmem:[%s1521 + $0xc] sm:$0xf]
      %s1526 = scalar_lea.vmem %s5, 3
      %v1527 = vld [vmem:[%s1526] sm:$0x1]
      %v1529 = vlaneseq
      %v1530 = vshrl.u32 %v1529, 7
      %v1531 = vsub.s32 0, %v1530
      %v1532 = vrot.slane %v1527, %v1531
      %v1538 = vunpack.c.l.b16 %v1522
      %v1539 = vunpack.c.l.b16 %v1523
      %v1540 = vunpack.c.l.b16 %v1524
      %v1541 = vunpack.c.l.b16 %v1525
      %v1542 = vpack.c.b16 %v1539, %v1538
      %v1543 = vpack.c.b16 %v1541, %v1540
      %1546 = vmatprep.subr.bf16.mxu0 0
      %1547 = vmatpush1.bf16.msra.mxu0 0
      %1548 = vmatprep.subr.bf16.mxu0 0
      %1549 = vmatpush1.bf16.msra.mxu0 0
      %1550 = vmatprep.subr.bf16.mxu0 0
      %1551 = vmatpush1.bf16.msra.mxu0 0
      %1552 = vmatprep.subr.bf16.mxu0 0
      %1553 = vmatpush1.bf16.msra.mxu0 0
      %1554 = vmatprep.subr.bf16.mxu0 0
      %1555 = vmatpush1.bf16.msra.mxu0 0
      %1556 = vmatprep.subr.bf16.mxu0 0
      %1557 = vmatpush1.bf16.msra.mxu0 0
      %1558 = vmatprep.subr.bf16.mxu0 0
      %1559 = vmatpush1.bf16.msra.mxu0 %v1543
      %1560 = vmatprep.subr.bf16.mxu0 0
      %1561 = vmatpush1.bf16.msra.mxu0 %v1542
      %1562 = vmatprep.subr.bf16.mxu0 0
      %1563 = vmatpush2.bf16.msra.mxu0 0
      %1564 = vmatprep.subr.bf16.mxu0 0
      %1565 = vmatpush2.bf16.msra.mxu0 0
      %1566 = vmatprep.subr.bf16.mxu0 0
      %1567 = vmatpush2.bf16.msra.mxu0 0
      %1568 = vmatprep.subr.bf16.mxu0 0
      %1569 = vmatpush2.bf16.msra.mxu0 0
      %1570 = vmatprep.subr.bf16.mxu0 0
      %1571 = vmatpush2.bf16.msra.mxu0 0
      %1572 = vmatprep.subr.bf16.mxu0 0
      %1573 = vmatpush2.bf16.msra.mxu0 0
      %1574 = vmatprep.subr.bf16.mxu0 0
      %1575 = vmatpush2.bf16.msra.mxu0 0
      %1576 = vmatprep.subr.bf16.mxu0 0
      %1577 = vmatpush2.bf16.msra.mxu0 0
      %1578 = vmatprep.mubr.bf16.mxu0 0
      %1579 = vmatmul.mubr.bf16.gmra.mxu0 %v572
      %v1580 = vpop.f32.mrf.mxu0
      %v1581 = vadd.f32 %v1532, %v1580
      %v1582 = vpop.f32.mrf.mxu0
      %v1583 = vpop.f32.mrf.mxu0
      %v1584 = vpop.f32.mrf.mxu0
      %1585 = vdwg.mxu0
      %s1586 = scalar_lea.vmem %s3, 48
      %v1587 = vld [vmem:[%s1586] sm:$0xf]
      %v1588 = vld [vmem:[%s1586 + $0x4] sm:$0xf]
      %v1589 = vld [vmem:[%s1586 + $0x8] sm:$0xf]
      %v1590 = vld [vmem:[%s1586 + $0xc] sm:$0xf]
      %s1591 = scalar_lea.vmem %s6, 3
      %v1592 = vld [vmem:[%s1591] sm:$0x1]
      %v1594 = vlaneseq
      %v1595 = vshrl.u32 %v1594, 7
      %v1596 = vsub.s32 0, %v1595
      %v1597 = vrot.slane %v1592, %v1596
      %v1603 = vunpack.c.l.b16 %v1587
      %v1604 = vunpack.c.l.b16 %v1588
      %v1605 = vunpack.c.l.b16 %v1589
      %v1606 = vunpack.c.l.b16 %v1590
      %v1607 = vpack.c.b16 %v1604, %v1603
      %v1608 = vpack.c.b16 %v1606, %v1605
      %1611 = vmatprep.subr.bf16.mxu0 0
      %1612 = vmatpush1.bf16.msra.mxu0 0
      %1613 = vmatprep.subr.bf16.mxu0 0
      %1614 = vmatpush1.bf16.msra.mxu0 0
      %1615 = vmatprep.subr.bf16.mxu0 0
      %1616 = vmatpush1.bf16.msra.mxu0 0
      %1617 = vmatprep.subr.bf16.mxu0 0
      %1618 = vmatpush1.bf16.msra.mxu0 0
      %1619 = vmatprep.subr.bf16.mxu0 0
      %1620 = vmatpush1.bf16.msra.mxu0 0
      %1621 = vmatprep.subr.bf16.mxu0 0
      %1622 = vmatpush1.bf16.msra.mxu0 0
      %1623 = vmatprep.subr.bf16.mxu0 0
      %1624 = vmatpush1.bf16.msra.mxu0 %v1608
      %1625 = vmatprep.subr.bf16.mxu0 0
      %1626 = vmatpush1.bf16.msra.mxu0 %v1607
      %1627 = vmatprep.subr.bf16.mxu0 0
      %1628 = vmatpush2.bf16.msra.mxu0 0
      %1629 = vmatprep.subr.bf16.mxu0 0
      %1630 = vmatpush2.bf16.msra.mxu0 0
      %1631 = vmatprep.subr.bf16.mxu0 0
      %1632 = vmatpush2.bf16.msra.mxu0 0
      %1633 = vmatprep.subr.bf16.mxu0 0
      %1634 = vmatpush2.bf16.msra.mxu0 0
      %1635 = vmatprep.subr.bf16.mxu0 0
      %1636 = vmatpush2.bf16.msra.mxu0 0
      %1637 = vmatprep.subr.bf16.mxu0 0
      %1638 = vmatpush2.bf16.msra.mxu0 0
      %1639 = vmatprep.subr.bf16.mxu0 0
      %1640 = vmatpush2.bf16.msra.mxu0 0
      %1641 = vmatprep.subr.bf16.mxu0 0
      %1642 = vmatpush2.bf16.msra.mxu0 0
      %1643 = vmatprep.mubr.bf16.mxu0 0
      %1644 = vmatmul.mubr.bf16.gmra.mxu0 %v572
      %v1645 = vpop.f32.mrf.mxu0
      %v1646 = vadd.f32 %v1597, %v1645
      %v1647 = vpop.f32.mrf.mxu0
      %v1648 = vpop.f32.mrf.mxu0
      %v1649 = vpop.f32.mrf.mxu0
      %1650 = vdwg.mxu0
      %v1651 = vpack.c.bf16 %v1516, %v1516
      %v1652 = vpack.c.bf16 %v1581, %v1581
      %v1653 = vpack.c.bf16 %v1646, %v1646
      %v1655 = vsel %vm743, %v1651, 0
      %v1658 = vsel %vm743, %v1652, 0
      %1660 = vmatprep.subr.bf16.mxu0 0
      %1661 = vmatpush1.bf16.xpose.msra.mxu0 0
      %1662 = vmatprep.subr.bf16.mxu0 0
      %1663 = vmatpush1.bf16.xpose.msra.mxu0 0
      %1664 = vmatprep.subr.bf16.mxu0 0
      %1665 = vmatpush1.bf16.xpose.msra.mxu0 0
      %1666 = vmatprep.subr.bf16.mxu0 0
      %1667 = vmatpush1.bf16.xpose.msra.mxu0 0
      %1668 = vmatprep.subr.bf16.mxu0 0
      %1669 = vmatpush1.bf16.xpose.msra.mxu0 0
      %1670 = vmatprep.subr.bf16.mxu0 0
      %1671 = vmatpush1.bf16.xpose.msra.mxu0 0
      %1672 = vmatprep.subr.bf16.mxu0 0
      %1673 = vmatpush1.bf16.xpose.msra.mxu0 0
      %1674 = vmatprep.subr.bf16.mxu0 0
      %1675 = vmatpush1.bf16.xpose.msra.mxu0 %v1658
      %1676 = vmatprep.subr.bf16.mxu0 0
      %1677 = vmatpush2.bf16.xpose.msra.mxu0 0
      %1678 = vmatprep.subr.bf16.mxu0 0
      %1679 = vmatpush2.bf16.xpose.msra.mxu0 0
      %1680 = vmatprep.subr.bf16.mxu0 0
      %1681 = vmatpush2.bf16.xpose.msra.mxu0 0
      %1682 = vmatprep.subr.bf16.mxu0 0
      %1683 = vmatpush2.bf16.xpose.msra.mxu0 0
      %1684 = vmatprep.subr.bf16.mxu0 0
      %1685 = vmatpush2.bf16.xpose.msra.mxu0 0
      %1686 = vmatprep.subr.bf16.mxu0 0
      %1687 = vmatpush2.bf16.xpose.msra.mxu0 0
      %1688 = vmatprep.subr.bf16.mxu0 0
      %1689 = vmatpush2.bf16.xpose.msra.mxu0 0
      %1690 = vmatprep.subr.bf16.mxu0 0
      %1691 = vmatpush2.bf16.xpose.msra.mxu0 0
      %1692 = vmatprep.mubr.bf16.mxu0 0
      %1693 = vmatmul.mubr.bf16.gmra.mxu0 %v1655
      %v1694 = vpop.f32.mrf.mxu0
      %v1695 = vadd.f32 0.0, %v1694
      %v1696 = vpop.f32.mrf.mxu0
      %v1697 = vpop.f32.mrf.mxu0
      %v1698 = vpop.f32.mrf.mxu0
      %1699 = vdwg.mxu0
      %v1700 = vsel %vm743, %v1695, -inf
      %1701 = vmax.xlane.f32.xlu0 %v1700
      %v1702 = vpop.xlane.xlu0 %1701
      %v1703 = vsub.f32 %v1695, %v1702
      %v1704 = vmul.f32 %v1703, 1.442695
      %v1705 = vpow.pop %v1704
      %v1706 = vsel %vm743, %v1705, 0.0
      %1707 = vadd.xlane.f32.xlu0 %v1706
      %v1708 = vpop.xlane.xlu0 %1707
      %v1709 = vpack.c.bf16 %v1705, %v1705
      %v1711 = vsel %vm743, %v1709, 0
      %v1714 = vsel %vm803, %v1653, 0
      %1716 = vmatprep.subr.bf16.mxu0 0
      %1717 = vmatpush1.bf16.msra.mxu0 0
      %1718 = vmatprep.subr.bf16.mxu0 0
      %1719 = vmatpush1.bf16.msra.mxu0 0
      %1720 = vmatprep.subr.bf16.mxu0 0
      %1721 = vmatpush1.bf16.msra.mxu0 0
      %1722 = vmatprep.subr.bf16.mxu0 0
      %1723 = vmatpush1.bf16.msra.mxu0 0
      %1724 = vmatprep.subr.bf16.mxu0 0
      %1725 = vmatpush1.bf16.msra.mxu0 0
      %1726 = vmatprep.subr.bf16.mxu0 0
      %1727 = vmatpush1.bf16.msra.mxu0 0
      %1728 = vmatprep.subr.bf16.mxu0 0
      %1729 = vmatpush1.bf16.msra.mxu0 0
      %1730 = vmatprep.subr.bf16.mxu0 0
      %1731 = vmatpush1.bf16.msra.mxu0 %v1714
      %1732 = vmatprep.subr.bf16.mxu0 0
      %1733 = vmatpush2.bf16.msra.mxu0 0
      %1734 = vmatprep.subr.bf16.mxu0 0
      %1735 = vmatpush2.bf16.msra.mxu0 0
      %1736 = vmatprep.subr.bf16.mxu0 0
      %1737 = vmatpush2.bf16.msra.mxu0 0
      %1738 = vmatprep.subr.bf16.mxu0 0
      %1739 = vmatpush2.bf16.msra.mxu0 0
      %1740 = vmatprep.subr.bf16.mxu0 0
      %1741 = vmatpush2.bf16.msra.mxu0 0
      %1742 = vmatprep.subr.bf16.mxu0 0
      %1743 = vmatpush2.bf16.msra.mxu0 0
      %1744 = vmatprep.subr.bf16.mxu0 0
      %1745 = vmatpush2.bf16.msra.mxu0 0
      %1746 = vmatprep.subr.bf16.mxu0 0
      %1747 = vmatpush2.bf16.msra.mxu0 0
      %1748 = vmatprep.mubr.bf16.mxu0 0
      %1749 = vmatmul.mubr.bf16.gmra.mxu0 %v1711
      %v1750 = vpop.f32.mrf.mxu0
      %v1751 = vadd.f32 0.0, %v1750
      %v1752 = vpop.f32.mrf.mxu0
      %v1753 = vpop.f32.mrf.mxu0
      %v1754 = vpop.f32.mrf.mxu0
      %1755 = vdwg.mxu0
      %v1756 = vrcp.pop %v1708
      %v1757 = vmul.f32 %v1751, %v1756
      %v1758 = vpack.c.bf16 %v1757, %v1757
      %1760 = vrot.lane.b32.xlu0 %v1152, 8
      %v1761 = vpop.permute.xlu0 %1760
      %1763 = vrot.lane.b32.xlu0 %v1455, 16
      %v1764 = vpop.permute.xlu0 %1763
      %1766 = vrot.lane.b32.xlu0 %v1758, 24
      %v1767 = vpop.permute.xlu0 %1766
      %v1770 = vsel %vm743, %v849, %v1761
      %vm1771 = vcmask 130048
      %v1773 = vsel %vm1771, %v1770, %v1764
      %vm1774 = vcmask 195584
      %v1776 = vsel %vm1774, %v1773, %v1767
      %v1777 = vld [vmem:[%s7] sm:$0xf]
      %v1778 = vld [vmem:[%s7 + $0x4] sm:$0xf]
      %v1779 = vld [vmem:[%s7 + $0x8] sm:$0xf]
      %v1780 = vld [vmem:[%s7 + $0xc] sm:$0xf]
      %v1781 = vld [vmem:[%s8] sm:$0x1]
      %v1783 = vlaneseq
      %v1784 = vshrl.u32 %v1783, 7
      %v1785 = vsub.s32 0, %v1784
      %v1786 = vrot.slane %v1781, %v1785
      %v1792 = vunpack.c.l.b16 %v1777
      %v1793 = vunpack.c.l.b16 %v1778
      %v1794 = vunpack.c.l.b16 %v1779
      %v1795 = vunpack.c.l.b16 %v1780
      %v1796 = vpack.c.b16 %v1793, %v1792
      %v1797 = vpack.c.b16 %v1795, %v1794
      %v1800 = vsel %vm570, %v1776, 0
      %1802 = vmatprep.subr.bf16.mxu0 0
      %1803 = vmatpush1.bf16.msra.mxu0 0
      %1804 = vmatprep.subr.bf16.mxu0 0
      %1805 = vmatpush1.bf16.msra.mxu0 0
      %1806 = vmatprep.subr.bf16.mxu0 0
      %1807 = vmatpush1.bf16.msra.mxu0 0
      %1808 = vmatprep.subr.bf16.mxu0 0
      %1809 = vmatpush1.bf16.msra.mxu0 0
      %1810 = vmatprep.subr.bf16.mxu0 0
      %1811 = vmatpush1.bf16.msra.mxu0 0
      %1812 = vmatprep.subr.bf16.mxu0 0
      %1813 = vmatpush1.bf16.msra.mxu0 0
      %1814 = vmatprep.subr.bf16.mxu0 0
      %1815 = vmatpush1.bf16.msra.mxu0 %v1797
      %1816 = vmatprep.subr.bf16.mxu0 0
      %1817 = vmatpush1.bf16.msra.mxu0 %v1796
      %1818 = vmatprep.subr.bf16.mxu0 0
      %1819 = vmatpush2.bf16.msra.mxu0 0
      %1820 = vmatprep.subr.bf16.mxu0 0
      %1821 = vmatpush2.bf16.msra.mxu0 0
      %1822 = vmatprep.subr.bf16.mxu0 0
      %1823 = vmatpush2.bf16.msra.mxu0 0
      %1824 = vmatprep.subr.bf16.mxu0 0
      %1825 = vmatpush2.bf16.msra.mxu0 0
      %1826 = vmatprep.subr.bf16.mxu0 0
      %1827 = vmatpush2.bf16.msra.mxu0 0
      %1828 = vmatprep.subr.bf16.mxu0 0
      %1829 = vmatpush2.bf16.msra.mxu0 0
      %1830 = vmatprep.subr.bf16.mxu0 0
      %1831 = vmatpush2.bf16.msra.mxu0 0
      %1832 = vmatprep.subr.bf16.mxu0 0
      %1833 = vmatpush2.bf16.msra.mxu0 0
      %1834 = vmatprep.mubr.bf16.mxu0 0
      %1835 = vmatmul.mubr.bf16.gmra.mxu0 %v1800
      %v1836 = vpop.f32.mrf.mxu0
      %v1837 = vadd.f32 %v1786, %v1836
      %v1838 = vpop.f32.mrf.mxu0
      %v1839 = vpop.f32.mrf.mxu0
      %v1840 = vpop.f32.mrf.mxu0
      %1841 = vdwg.mxu0
      %v1842 = vadd.f32 %v546, %v1837
      %v1843 = vsel %vm570, %v1842, 0.0
      %1844 = vadd.xlane.f32.xlu0 %v1843
      %v1845 = vpop.xlane.xlu0 %1844
      %v1846 = vrcp.pop 32.0
      %v1847 = vmul.f32 %v1845, %v1846
      %v1848 = vsub.f32 %v1842, %v1847
      %v1849 = vmul.f32 %v1848, %v1848
      %v1850 = vsel %vm570, %v1849, 0.0
      %1851 = vadd.xlane.f32.xlu0 %v1850
      %v1852 = vpop.xlane.xlu0 %1851
      %v1853 = vmul.f32 %v1852, %v1846
      %v1854 = vadd.f32 %v1853, 1e-05
      %v1855 = vrsqrt.pop %v1854
      %v1856 = vmul.f32 %v1848, %v1855
      %v1857 = vld [vmem:[%s9] sm:$0x1]
      %v1859 = vlaneseq
      %v1860 = vshrl.u32 %v1859, 7
      %v1861 = vsub.s32 0, %v1860
      %v1862 = vrot.slane %v1857, %v1861
      %v1864 = vmul.f32 %v1856, %v1862
      %v1865 = vld [vmem:[%s10] sm:$0x1]
      %v1867 = vlaneseq
      %v1868 = vshrl.u32 %v1867, 7
      %v1869 = vsub.s32 0, %v1868
      %v1870 = vrot.slane %v1865, %v1869
      %v1872 = vadd.f32 %v1864, %v1870
      %v1873 = vpack.c.bf16 %v1872, %v1872
      %v1874 = vld [vmem:[%s11] sm:$0xf]
      %v1875 = vld [vmem:[%s11 + $0x4] sm:$0xf]
      %v1876 = vld [vmem:[%s11 + $0x8] sm:$0xf]
      %v1877 = vld [vmem:[%s11 + $0xc] sm:$0xf]
      %v1878 = vld [vmem:[%s12] sm:$0x1]
      %v1880 = vlaneseq
      %v1881 = vshrl.u32 %v1880, 7
      %v1882 = vsub.s32 0, %v1881
      %v1883 = vrot.slane %v1878, %v1882
      %v1889 = vunpack.c.l.b16 %v1874
      %v1890 = vunpack.c.l.b16 %v1875
      %v1891 = vunpack.c.l.b16 %v1876
      %v1892 = vunpack.c.l.b16 %v1877
      %v1893 = vpack.c.b16 %v1890, %v1889
      %v1894 = vpack.c.b16 %v1892, %v1891
      %v1898 = vsel %vm570, %v1873, 0
      %1900 = vmatprep.subr.bf16.mxu0 0
      %1901 = vmatpush1.bf16.msra.mxu0 0
      %1902 = vmatprep.subr.bf16.mxu0 0
      %1903 = vmatpush1.bf16.msra.mxu0 0
      %1904 = vmatprep.subr.bf16.mxu0 0
      %1905 = vmatpush1.bf16.msra.mxu0 0
      %1906 = vmatprep.subr.bf16.mxu0 0
      %1907 = vmatpush1.bf16.msra.mxu0 0
      %1908 = vmatprep.subr.bf16.mxu0 0
      %1909 = vmatpush1.bf16.msra.mxu0 0
      %1910 = vmatprep.subr.bf16.mxu0 0
      %1911 = vmatpush1.bf16.msra.mxu0 0
      %1912 = vmatprep.subr.bf16.mxu0 0
      %1913 = vmatpush1.bf16.msra.mxu0 %v1894
      %1914 = vmatprep.subr.bf16.mxu0 0
      %1915 = vmatpush1.bf16.msra.mxu0 %v1893
      %1916 = vmatprep.subr.bf16.mxu0 0
      %1917 = vmatpush2.bf16.msra.mxu0 0
      %1918 = vmatprep.subr.bf16.mxu0 0
      %1919 = vmatpush2.bf16.msra.mxu0 0
      %1920 = vmatprep.subr.bf16.mxu0 0
      %1921 = vmatpush2.bf16.msra.mxu0 0
      %1922 = vmatprep.subr.bf16.mxu0 0
      %1923 = vmatpush2.bf16.msra.mxu0 0
      %1924 = vmatprep.subr.bf16.mxu0 0
      %1925 = vmatpush2.bf16.msra.mxu0 0
      %1926 = vmatprep.subr.bf16.mxu0 0
      %1927 = vmatpush2.bf16.msra.mxu0 0
      %1928 = vmatprep.subr.bf16.mxu0 0
      %1929 = vmatpush2.bf16.msra.mxu0 0
      %1930 = vmatprep.subr.bf16.mxu0 0
      %1931 = vmatpush2.bf16.msra.mxu0 0
      %1932 = vmatprep.mubr.bf16.mxu0 0
      %1933 = vmatmul.mubr.bf16.gmra.mxu0 %v1898
      %v1934 = vpop.f32.mrf.mxu0
      %v1935 = vadd.f32 %v1883, %v1934
      %v1936 = vpop.f32.mrf.mxu0
      %v1937 = vpop.f32.mrf.mxu0
      %v1938 = vpop.f32.mrf.mxu0
      %1939 = vdwg.mxu0
      %v1940 = vmax.f32 %v1935, 0.0
      %v1941 = vpack.c.bf16 %v1940, %v1940
      %v1942 = vld [vmem:[%s13] sm:$0xf]
      %v1943 = vld [vmem:[%s13 + $0x4] sm:$0xf]
      %v1944 = vld [vmem:[%s13 + $0x8] sm:$0xf]
      %v1945 = vld [vmem:[%s13 + $0xc] sm:$0xf]
      %v1946 = vld [vmem:[%s13 + $0x10] sm:$0xf]
      %v1947 = vld [vmem:[%s13 + $0x14] sm:$0xf]
      %v1948 = vld [vmem:[%s13 + $0x18] sm:$0xf]
      %v1949 = vld [vmem:[%s13 + $0x1c] sm:$0xf]
      %v1950 = vld [vmem:[%s14] sm:$0x1]
      %v1952 = vlaneseq
      %v1953 = vshrl.u32 %v1952, 7
      %v1954 = vsub.s32 0, %v1953
      %v1955 = vrot.slane %v1950, %v1954
      %v1965 = vunpack.c.l.b16 %v1942
      %v1966 = vunpack.c.l.b16 %v1943
      %v1967 = vunpack.c.l.b16 %v1944
      %v1968 = vunpack.c.l.b16 %v1945
      %v1969 = vunpack.c.l.b16 %v1946
      %v1970 = vunpack.c.l.b16 %v1947
      %v1971 = vunpack.c.l.b16 %v1948
      %v1972 = vunpack.c.l.b16 %v1949
      %v1973 = vpack.c.b16 %v1966, %v1965
      %v1974 = vpack.c.b16 %v1968, %v1967
      %v1975 = vpack.c.b16 %v1970, %v1969
      %v1976 = vpack.c.b16 %v1972, %v1971
      %vm1981 = vcmask 523264
      %v1983 = vsel %vm1981, %v1941, 0
      %1985 = vmatprep.subr.bf16.mxu0 0
      %1986 = vmatpush1.bf16.msra.mxu0 0
      %1987 = vmatprep.subr.bf16.mxu0 0
      %1988 = vmatpush1.bf16.msra.mxu0 0
      %1989 = vmatprep.subr.bf16.mxu0 0
      %1990 = vmatpush1.bf16.msra.mxu0 0
      %1991 = vmatprep.subr.bf16.mxu0 0
      %1992 = vmatpush1.bf16.msra.mxu0 0
      %1993 = vmatprep.subr.bf16.mxu0 0
      %1994 = vmatpush1.bf16.msra.mxu0 %v1976
      %1995 = vmatprep.subr.bf16.mxu0 0
      %1996 = vmatpush1.bf16.msra.mxu0 %v1975
      %1997 = vmatprep.subr.bf16.mxu0 0
      %1998 = vmatpush1.bf16.msra.mxu0 %v1974
      %1999 = vmatprep.subr.bf16.mxu0 0
      %2000 = vmatpush1.bf16.msra.mxu0 %v1973
      %2001 = vmatprep.subr.bf16.mxu0 0
      %2002 = vmatpush2.bf16.msra.mxu0 0
      %2003 = vmatprep.subr.bf16.mxu0 0
      %2004 = vmatpush2.bf16.msra.mxu0 0
      %2005 = vmatprep.subr.bf16.mxu0 0
      %2006 = vmatpush2.bf16.msra.mxu0 0
      %2007 = vmatprep.subr.bf16.mxu0 0
      %2008 = vmatpush2.bf16.msra.mxu0 0
      %2009 = vmatprep.subr.bf16.mxu0 0
      %2010 = vmatpush2.bf16.msra.mxu0 0
      %2011 = vmatprep.subr.bf16.mxu0 0
      %2012 = vmatpush2.bf16.msra.mxu0 0
      %2013 = vmatprep.subr.bf16.mxu0 0
      %2014 = vmatpush2.bf16.msra.mxu0 0
      %2015 = vmatprep.subr.bf16.mxu0 0
      %2016 = vmatpush2.bf16.msra.mxu0 0
      %2017 = vmatprep.mubr.bf16.mxu0 0
      %2018 = vmatmul.mubr.bf16.gmra.mxu0 %v1983
      %v2019 = vpop.f32.mrf.mxu0
      %v2020 = vadd.f32 %v1955, %v2019
      %v2021 = vpop.f32.mrf.mxu0
      %v2022 = vpop.f32.mrf.mxu0
      %v2023 = vpop.f32.mrf.mxu0
      %2024 = vdwg.mxu0
      %v2025 = vadd.f32 %v1872, %v2020
      %v2026 = vsel %vm570, %v2025, 0.0
      %2027 = vadd.xlane.f32.xlu0 %v2026
      %v2028 = vpop.xlane.xlu0 %2027
      %v2029 = vmul.f32 %v2028, %v1846
      %v2030 = vsub.f32 %v2025, %v2029
      %v2031 = vmul.f32 %v2030, %v2030
      %v2032 = vsel %vm570, %v2031, 0.0
      %2033 = vadd.xlane.f32.xlu0 %v2032
      %v2034 = vpop.xlane.xlu0 %2033
      %v2035 = vmul.f32 %v2034, %v1846
      %v2036 = vadd.f32 %v2035, 1e-05
      %v2037 = vrsqrt.pop %v2036
      %v2038 = vmul.f32 %v2030, %v2037
      %v2039 = vld [vmem:[%s15] sm:$0x1]
      %v2041 = vlaneseq
      %v2042 = vshrl.u32 %v2041, 7
      %v2043 = vsub.s32 0, %v2042
      %v2044 = vrot.slane %v2039, %v2043
      %v2046 = vmul.f32 %v2038, %v2044
      %v2047 = vld [vmem:[%s16] sm:$0x1]
      %v2049 = vlaneseq
      %v2050 = vshrl.u32 %v2049, 7
      %v2051 = vsub.s32 0, %v2050
      %v2052 = vrot.slane %v2047, %v2051
      %v2054 = vadd.f32 %v2046, %v2052
      %v2055 = vpack.c.bf16 %v2054, %v2054
      %vm2056 = vcmask 257024
      %2057 = vst.msk [vmem:[%s543] sm:$0xf] %vm2056, %v2055
      %p2058 = scmp.lt.s32.totalorder %s28, 1
      %s2059 = scalar_select %p2058, %s28, 1
      %s2060 = smul.addr %s2059, 4
      %s2061 = scalar_lea.vmem %s17, %s2060
      // Predicated region
      $region89: #{classifier_forward.3} parent=87 // pred_check
        %p2062 = pneg %p408
      $region90: #{classifier_forward.3} parent=87 // pred_check_branch
        %2064 = sbr.rel (%p2062) target = $region92
      $region91: #{classifier_forward.3} parent=87 // pred_region
        _
      $region92: #{classifier_forward.3} parent=87 // pred_fallthru
        _
    $region88: #{classifier_forward.3} parent=5 // pred_fallthru
      _
    %p2065 = scmp.le.s32.totalorder 2, %s23
    // Predicated region
    $region93: #{classifier_forward.3} parent=5 // pred_check
      %p2066 = pneg %p2065
    $region94: #{classifier_forward.3} parent=5 // pred_check_branch
      %2068 = sbr.rel (%p2066) target = $region96
    $region95: #{classifier_forward.3} parent=5 // pred_region
      %s2069 = ssub.s32 %s23, 2
      // Predicated region
      $region97: #{classifier_forward.3} parent=95 // pred_check
        %p2070 = pneg %p414
      $region98: #{classifier_forward.3} parent=95 // pred_check_branch
        %2072 = sbr.rel (%p2070) target = $region100
      $region99: #{classifier_forward.3} parent=95 // pred_region
        %p2073 = scmp.lt.s32.totalorder %s29, 1
        %s2074 = scalar_select %p2073, %s29, 1
        %s2075 = smul.addr %s2074, 4
        %s2076 = scalar_lea.vmem %s17, %s2075
      $region100: #{classifier_forward.3} parent=95 // pred_fallthru
        _
    $region96: #{classifier_forward.3} parent=5 // pred_fallthru
      _
  $region6: #{classifier_forward.3} parent=0 // loop_footer
    %s27 = sadd.s32 1, %s23
  $region7: #{classifier_forward.3} parent=0 // loop_footer_branch
    %22 = sbr.rel target = $region3
  $region8: #{classifier_forward.3} parent=0 // loop_exit
    _

</llo_original>
